<compile_context>
chip_gen: v7x
topology: tpu7x:2x2x1
jax: 0.10.0
libtpu: 0.0.40
codegen_flags: <defaults>
</compile_context>

<pallas_src>
from functools import partial
import math

import numpy as np
import jax
import jax.numpy as jnp
from jax.experimental import pallas as pl
from jax.experimental.pallas import tpu as pltpu

LANE = 128
SUB = 8


def _ceil_to(x, m):
    return ((x + m - 1) // m) * m


def _build_head_constants(nheads, head_dim, f_pad, e_pad, s_pad):
    """0/1 matrices mapping all head-pair work onto MXU matmuls.

    Expanded lane index L = (n*nheads + m)*head_dim + d.
      rq: q[b, n*D+d] -> lane L          (expand over m)
      rk: k[b, m*D+d] -> lane L          (expand over n; reused for v with d<->e)
      sd: lane L -> pair (n*nheads+m)    (sum over d)
      xs: pair -> lane L                 (broadcast over the d(=e) slot)
      sm: lane L -> n*D + d              (sum over m)
      dn: pair -> n*D + e  (all e)       (sum over m + broadcast over e)
    Entries are 0/1 so they are exact in bf16.
    """
    nh, D = nheads, head_dim
    rq = np.zeros((f_pad, e_pad), np.float32)
    rk = np.zeros((f_pad, e_pad), np.float32)
    sd = np.zeros((e_pad, s_pad), np.float32)
    xs = np.zeros((s_pad, e_pad), np.float32)
    sm = np.zeros((e_pad, f_pad), np.float32)
    dn = np.zeros((s_pad, f_pad), np.float32)
    for n in range(nh):
        for m in range(nh):
            pair = n * nh + m
            for d in range(D):
                lane = pair * D + d
                rq[n * D + d, lane] = 1.0
                rk[m * D + d, lane] = 1.0
                sd[lane, pair] = 1.0
                xs[pair, lane] = 1.0
                sm[lane, n * D + d] = 1.0
                dn[pair, n * D + d] = 1.0
    return rq, rk, sd, xs, sm, dn


def agt_kernel(h_ref, wq_ref, wk_ref, wv_ref, wf_ref, gamma_ref, beta_ref,
               rq_ref, rk_ref, sd_ref, xs_ref, sm_ref, dn_ref, o_ref,
               q_sc, k_sc, v_sc, num_acc, den_acc, *, dim_in, eps):
    f32 = jnp.float32
    bf16 = jnp.bfloat16
    j = pl.program_id(1)

    # --- first e-step of each batch tile: projections (bf16 MXU) + accumulator init ---
    @pl.when(j == 0)
    def _():
        hb = h_ref[...].astype(bf16)
        q = jnp.dot(hb, wq_ref[...], preferred_element_type=f32)
        k = jnp.dot(hb, wk_ref[...], preferred_element_type=f32)
        v = jnp.dot(hb, wv_ref[...], preferred_element_type=f32)
        q_sc[...] = jnp.maximum(q, 0.0).astype(bf16)
        k_sc[...] = jnp.maximum(k, 0.0).astype(bf16)
        v_sc[...] = v.astype(bf16)
        num_acc[...] = jnp.zeros_like(num_acc)
        den_acc[...] = jnp.zeros_like(den_acc)

    # --- per e-tile: expand -> S -> partial num/den, all contractions on the MXU ---
    # NOTE: the rq/rk expands are pure 0/1 gathers; keeping them on the MXU is deliberate
    # (lane-replication via reshape would relayout through the XLU for small head_dim).
    qe = jnp.dot(q_sc[...], rq_ref[...], preferred_element_type=f32)      # [tb, e_blk]
    ke = jnp.dot(k_sc[...], rk_ref[...], preferred_element_type=f32)      # [tb, e_blk]
    ve = jnp.dot(v_sc[...], rk_ref[...], preferred_element_type=f32)      # [tb, e_blk]

    s_flat = jnp.dot((qe * ke).astype(bf16), sd_ref[...],
                     preferred_element_type=f32)                          # [tb, s_pad]
    s_bf = s_flat.astype(bf16)
    s_exp = jnp.dot(s_bf, xs_ref[...], preferred_element_type=f32)        # [tb, e_blk]
    num_acc[...] += jnp.dot((s_exp * ve).astype(bf16), sm_ref[...],
                            preferred_element_type=f32)                   # [tb, f_pad]
    den_acc[...] += jnp.dot(s_bf, dn_ref[...], preferred_element_type=f32)

    # --- last e-step: attn = num/den, final linear, residual, LayerNorm (f32 VPU) ---
    @pl.when(j == pl.num_programs(1) - 1)
    def _():
        h = h_ref[...].astype(f32)
        den = den_acc[...]
        # den >= 0 (ReLU'd q,k); den == 0 implies num == 0, so the clamp is exact there.
        den_safe = jnp.where(den > 0.0, den, 1.0)
        attn = num_acc[...] * pl.reciprocal(den_safe, approx=True)        # [tb, f_pad]
        fh = jnp.dot(attn.astype(bf16), wf_ref[...], preferred_element_type=f32)

        lane = jax.lax.broadcasted_iota(jnp.int32, h.shape, 1)
        valid = lane < dim_in
        x = jnp.where(valid, h + fh, 0.0)
        inv_n = 1.0 / dim_in
        mean = jnp.sum(x, axis=-1, keepdims=True) * inv_n
        xc = jnp.where(valid, x - mean, 0.0)                   # two-pass, padded-lane safe
        var = jnp.sum(xc * xc, axis=-1, keepdims=True) * inv_n
        y = xc * jax.lax.rsqrt(var + eps)
        o_ref[...] = (y * gamma_ref[...] + beta_ref[...]).astype(o_ref.dtype)


def agt_layer(h, wq, wk, wv, wf, gamma, beta, *, nheads,
              block_rows=512, e_block=1024, single_buffer_residents=True):
    B, dim_in = h.shape
    head_dim = dim_in // nheads
    assert nheads * head_dim == dim_in, "dim_in must be divisible by nheads"
    block_rows = _ceil_to(block_rows, SUB)
    bf16 = jnp.bfloat16

    # Feature / pair padding: 256-aligned for the v6e/v7x 256x256 MXU when big enough,
    # 128 otherwise (optimal on v5e and avoids waste at small dims).
    f_pad = _ceil_to(dim_in, 256 if dim_in >= 256 else LANE)
    s_pad = _ceil_to(nheads * nheads, 256 if nheads * nheads >= 256 else LANE)

    # Expanded (n, m, d) lane axis, tiled so the O(dim_in^2*nheads) expansion constants
    # stream through VMEM (required to fit v7x's 64 MiB/TC at production dims).  Tile
    # width is a multiple of lcm(head_dim, 128) so no (n, m) pair straddles a tile.
    e_gran = head_dim * LANE // math.gcd(head_dim, LANE)
    e_full = _ceil_to(nheads * nheads * head_dim, e_gran)
    e_blk = max(e_gran, min(e_full, _ceil_to(e_block, e_gran)))
    n_e = -(-e_full // e_blk)
    e_pad = n_e * e_blk

    # Batch tiles: large tiles amortize the ~0.35us/step overhead; keep >=2 steps when
    # possible so the "parallel" axis can shard across v7x's two TensorCores.
    rows = _ceil_to(B, SUB)
    if rows > block_rows:
        tb = block_rows
    elif rows >= 2 * SUB:
        tb = max(SUB, ((rows // 2) // SUB) * SUB)
    else:
        tb = rows
    n_b = -(-rows // tb)
    b_pad = n_b * tb

    def pad2(a, r, c, dtype=None):
        a = jnp.pad(a, ((0, r - a.shape[0]), (0, c - a.shape[1])))
        return a.astype(dtype) if dtype is not None else a

    h_p = pad2(h, b_pad, f_pad)                               # f32 I/O (residual + LN in f32)
    wq_p = pad2(wq, f_pad, f_pad, bf16)                       # bf16 MXU operands
    wk_p = pad2(wk, f_pad, f_pad, bf16)
    wv_p = pad2(wv, f_pad, f_pad, bf16)
    wf_p = pad2(wf, f_pad, f_pad, bf16)
    gamma_p = pad2(gamma.reshape(1, dim_in), 1, f_pad)        # LN params stay f32 (VPU)
    beta_p = pad2(beta.reshape(1, dim_in), 1, f_pad)
    consts = _build_head_constants(nheads, head_dim, f_pad, e_pad, s_pad)
    rq, rk, sd, xs, sm, dn = (jnp.asarray(c, bf16) for c in consts)

    def spec(shape, index_map, *, single_buffer=False):
        if single_buffer:
            # Grid-invariant operand: one VMEM buffer instead of the default two.
            return pl.BlockSpec(shape, index_map, pipeline_mode=pl.Buffered(1))
        return pl.BlockSpec(shape, index_map)

    sb = single_buffer_residents
    zero_map = lambda i, j: (0, 0)
    in_specs = [
        pl.BlockSpec((tb, f_pad), lambda i, j: (i, 0)),            # h (revisited over e)
        spec((f_pad, f_pad), zero_map, single_buffer=sb),          # wq
        spec((f_pad, f_pad), zero_map, single_buffer=sb),          # wk
        spec((f_pad, f_pad), zero_map, single_buffer=sb),          # wv
        spec((f_pad, f_pad), zero_map, single_buffer=sb),          # wf
        spec((1, f_pad), zero_map, single_buffer=sb),              # gamma
        spec((1, f_pad), zero_map, single_buffer=sb),              # beta
        pl.BlockSpec((f_pad, e_blk), lambda i, j: (0, j)),         # rq  (streamed over e)
        pl.BlockSpec((f_pad, e_blk), lambda i, j: (0, j)),         # rk
        pl.BlockSpec((e_blk, s_pad), lambda i, j: (j, 0)),         # sd
        pl.BlockSpec((s_pad, e_blk), lambda i, j: (0, j)),         # xs
        pl.BlockSpec((e_blk, f_pad), lambda i, j: (j, 0)),         # sm
        spec((s_pad, f_pad), zero_map, single_buffer=sb),          # dn  (resident)
    ]
    out_specs = pl.BlockSpec((tb, f_pad), lambda i, j: (i, 0))
    scratch_shapes = [
        pltpu.VMEM((tb, f_pad), bf16),          # q
        pltpu.VMEM((tb, f_pad), bf16),          # k
        pltpu.VMEM((tb, f_pad), bf16),          # v
        pltpu.VMEM((tb, f_pad), jnp.float32),   # num accumulator
        pltpu.VMEM((tb, f_pad), jnp.float32),   # den accumulator
    ]

    # --- explicit VMEM budget (scoped defaults: 16 MiB v5e / 32 MiB v6e,v7x) ---
    bb, bf = 2, 4
    res_bufs = 1 if sb else 2
    resident_bytes = res_bufs * ((4 * f_pad * f_pad + s_pad * f_pad) * bb + 2 * f_pad * bf)
    streamed_bytes = 2 * (2 * f_pad * e_blk + e_blk * s_pad + s_pad * e_blk
                          + e_blk * f_pad) * bb
    io_bytes = 2 * 2 * tb * f_pad * bf
    scratch_bytes = tb * f_pad * (3 * bb + 2 * bf)
    live_bytes = 6 * tb * max(e_blk, f_pad) * bf
    vmem_limit = int(min(100 << 20,
                         max(32 << 20, 2 * (resident_bytes + streamed_bytes + io_bytes
                                            + scratch_bytes + live_bytes) + (4 << 20))))

    mxu_flops = 2 * b_pad * (3 * f_pad * f_pad + 3 * f_pad * e_pad
                             + 2 * e_pad * s_pad + e_pad * f_pad
                             + n_e * s_pad * f_pad + f_pad * f_pad)
    flops = mxu_flops + 12 * b_pad * (e_pad + f_pad)
    transcendentals = b_pad * (f_pad + 1)
    bytes_accessed = (2 * b_pad * f_pad * bf
                      + (4 * f_pad * f_pad + s_pad * f_pad + 2 * f_pad) * bb
                      + n_b * (2 * f_pad * e_pad + 2 * e_pad * s_pad + e_pad * f_pad) * bb)

    out = pl.pallas_call(
        partial(agt_kernel, dim_in=dim_in, eps=1e-5),
        out_shape=jax.ShapeDtypeStruct((b_pad, f_pad), h.dtype),
        grid=(n_b, n_e),
        in_specs=in_specs,
        out_specs=out_specs,
        scratch_shapes=scratch_shapes,
        compiler_params=pltpu.CompilerParams(
            dimension_semantics=("parallel", "arbitrary"),
            vmem_limit_bytes=vmem_limit),
        cost_estimate=pl.CostEstimate(flops=int(flops),
                                      transcendentals=int(transcendentals),
                                      bytes_accessed=int(bytes_accessed)),
    )(h_p, wq_p, wk_p, wv_p, wf_p, gamma_p, beta_p, rq, rk, sd, xs, sm, dn)

    return out[:B, :dim_in]


def run_agt(*args, **kwargs):
    try:
        return jax.block_until_ready(
            agt_layer(*args, single_buffer_residents=True, **kwargs))
    except Exception:
        # pl.Buffered(1) (single-buffered resident operands) is not supported by every
        # JAX release; fall back to the default double-buffered BlockSpecs.
        return jax.block_until_ready(
            agt_layer(*args, single_buffer_residents=False, **kwargs))


def agt_reference(h, wq, wk, wv, wf, gamma, beta, *, nheads):
    """Pure-JAX f32 reference mirroring the PyTorch forward (eval mode)."""
    B, dim_in = h.shape
    D = dim_in // nheads
    q = jnp.maximum(h @ wq, 0.0).reshape(B, nheads, D)
    k = jnp.maximum(h @ wk, 0.0).reshape(B, nheads, D)
    v = (h @ wv).reshape(B, nheads, D)
    kv = jnp.einsum('bnd,bne->bde', k, v)
    num = jnp.einsum('bnd,bde->bne', q, kv)
    den = jnp.einsum('bnd,bd->bn', q, k.sum(axis=1))
    # TODO(synk): the PyTorch layer computes 1/den and yields inf/NaN when a head's
    # q (or all k) is fully ReLU-zeroed; kernel and reference both use attn=0 there.
    qk = 1.0 / jnp.where(den > 0.0, den, 1.0)
    attn = jnp.einsum('bne,bn->bne', num, qk).reshape(B, dim_in)
    x = h + attn @ wf
    mean = x.mean(-1, keepdims=True)
    var = ((x - mean) ** 2).mean(-1, keepdims=True)
    return (x - mean) * jax.lax.rsqrt(var + 1e-5) * gamma + beta


if __name__ == "__main__":
    B, dim_in, nheads = 64, 48, 6          # head_dim = 8
    key = jax.random.PRNGKey(0)
    ks = jax.random.split(key, 5)
    scale = 1.0 / jnp.sqrt(jnp.float32(dim_in))

    h = jax.random.normal(ks[0], (B, dim_in), jnp.float32)
    # weights already stored as [in, out]
    wq = jax.random.normal(ks[1], (dim_in, dim_in), jnp.float32) * scale
    wk = jax.random.normal(ks[2], (dim_in, dim_in), jnp.float32) * scale
    wv = jax.random.normal(ks[3], (dim_in, dim_in), jnp.float32) * scale
    wf = jax.random.normal(ks[4], (dim_in, dim_in), jnp.float32) * scale
    gamma = jnp.ones((1, dim_in), jnp.float32)   # LayerNorm weight (default init)
    beta = jnp.zeros((1, dim_in), jnp.float32)   # LayerNorm bias   (default init)

    # e_block=128 forces 3 streaming steps over the expanded lane axis (and B=64 gives
    # 2 parallel batch steps), so the accumulate/finalize paths are exercised here.
    out = run_agt(h, wq, wk, wv, wf, gamma, beta, nheads=nheads, e_block=128)

    ref = agt_reference(h, wq, wk, wv, wf, gamma, beta, nheads=nheads)
    assert out.shape == (B, dim_in)
    assert bool(jnp.all(jnp.isfinite(out))), "non-finite output"
    err = jnp.abs(out - ref)
    # bf16 MXU operands (f32 accumulation) give ~1e-2 typical post-LayerNorm error.
    assert float(jnp.mean(err)) < 4e-2, "mean error too large vs reference"
    assert jnp.allclose(out, ref, rtol=1e-1, atol=1e-1), "mismatch vs reference"

    print("KERNEL_OK")
</pallas_src>

<mosaic_0001>
module attributes {stable_mosaic.version = 11 : i64} {
  func.func @agt_kernel(%arg0: i32, %arg1: i32, %arg2: memref<32x128xf32, #tpu.memory_space<vmem>>, %arg3: memref<128x128xbf16, #tpu.memory_space<vmem>>, %arg4: memref<128x128xbf16, #tpu.memory_space<vmem>>, %arg5: memref<128x128xbf16, #tpu.memory_space<vmem>>, %arg6: memref<128x128xbf16, #tpu.memory_space<vmem>>, %arg7: memref<1x128xf32, #tpu.memory_space<vmem>>, %arg8: memref<1x128xf32, #tpu.memory_space<vmem>>, %arg9: memref<128x128xbf16, #tpu.memory_space<vmem>>, %arg10: memref<128x128xbf16, #tpu.memory_space<vmem>>, %arg11: memref<128x128xbf16, #tpu.memory_space<vmem>>, %arg12: memref<128x128xbf16, #tpu.memory_space<vmem>>, %arg13: memref<128x128xbf16, #tpu.memory_space<vmem>>, %arg14: memref<128x128xbf16, #tpu.memory_space<vmem>>, %arg15: memref<32x128xf32, #tpu.memory_space<vmem>>, %arg16: memref<32x128xbf16, #tpu.memory_space<vmem>>, %arg17: memref<32x128xbf16, #tpu.memory_space<vmem>>, %arg18: memref<32x128xbf16, #tpu.memory_space<vmem>>, %arg19: memref<32x128xf32, #tpu.memory_space<vmem>>, %arg20: memref<32x128xf32, #tpu.memory_space<vmem>>) attributes {dimension_semantics = [#tpu.dimension_semantics<parallel>, #tpu.dimension_semantics<arbitrary>], iteration_bounds = array<i64: 2, 3>, scalar_prefetch = 0 : i64, scratch_operands = 5 : i64, tpu.core_type = #tpu.core_type<tc>, window_params = [{transform_indices = @transform_0, window_bounds = array<i64: 32, 128>}, {pipeline_mode = #tpu.pipeline_mode<synchronous>, transform_indices = @transform_1, window_bounds = array<i64: 128, 128>}, {pipeline_mode = #tpu.pipeline_mode<synchronous>, transform_indices = @transform_2, window_bounds = array<i64: 128, 128>}, {pipeline_mode = #tpu.pipeline_mode<synchronous>, transform_indices = @transform_3, window_bounds = array<i64: 128, 128>}, {pipeline_mode = #tpu.pipeline_mode<synchronous>, transform_indices = @transform_4, window_bounds = array<i64: 128, 128>}, {pipeline_mode = #tpu.pipeline_mode<synchronous>, transform_indices = @transform_5, window_bounds = array<i64: 1, 128>}, {pipeline_mode = #tpu.pipeline_mode<synchronous>, transform_indices = @transform_6, window_bounds = array<i64: 1, 128>}, {transform_indices = @transform_7, window_bounds = array<i64: 128, 128>}, {transform_indices = @transform_8, window_bounds = array<i64: 128, 128>}, {transform_indices = @transform_9, window_bounds = array<i64: 128, 128>}, {transform_indices = @transform_10, window_bounds = array<i64: 128, 128>}, {transform_indices = @transform_11, window_bounds = array<i64: 128, 128>}, {pipeline_mode = #tpu.pipeline_mode<synchronous>, transform_indices = @transform_12, window_bounds = array<i64: 128, 128>}, {transform_indices = @transform_13, window_bounds = array<i64: 32, 128>}]} {
    %c0_i32 = arith.constant 0 : i32
    %0 = arith.cmpi eq, %arg1, %c0_i32 : i32
    %1 = arith.extui %0 : i1 to i32
    %c0_i32_0 = arith.constant 0 : i32
    %2 = arith.cmpi ne, %1, %c0_i32_0 : i32
    scf.if %2 {
      %c0_35 = arith.constant 0 : index
      %c0_36 = arith.constant 0 : index
      %34 = vector.load %arg2[%c0_35, %c0_36] : memref<32x128xf32, #tpu.memory_space<vmem>>, vector<32x128xf32>
      %35 = arith.truncf %34 : vector<32x128xf32> to vector<32x128xbf16>
      %c0_37 = arith.constant 0 : index
      %c0_38 = arith.constant 0 : index
      %36 = vector.load %arg3[%c0_37, %c0_38] : memref<128x128xbf16, #tpu.memory_space<vmem>>, vector<128x128xbf16>
      %cst_39 = arith.constant dense<0.000000e+00> : vector<32x128xf32>
      %37 = tpu.matmul %35, %36, %cst_39 {dimension_numbers = #tpu.dot_dimension_numbers<[1], [0], [0], [1], [0, 0, 1, 1], [], []>} : vector<32x128xbf16>, vector<128x128xbf16>, vector<32x128xf32> -> vector<32x128xf32>
      %c0_40 = arith.constant 0 : index
      %c0_41 = arith.constant 0 : index
      %38 = vector.load %arg4[%c0_40, %c0_41] : memref<128x128xbf16, #tpu.memory_space<vmem>>, vector<128x128xbf16>
      %cst_42 = arith.constant dense<0.000000e+00> : vector<32x128xf32>
      %39 = tpu.matmul %35, %38, %cst_42 {dimension_numbers = #tpu.dot_dimension_numbers<[1], [0], [0], [1], [0, 0, 1, 1], [], []>} : vector<32x128xbf16>, vector<128x128xbf16>, vector<32x128xf32> -> vector<32x128xf32>
      %c0_43 = arith.constant 0 : index
      %c0_44 = arith.constant 0 : index
      %40 = vector.load %arg5[%c0_43, %c0_44] : memref<128x128xbf16, #tpu.memory_space<vmem>>, vector<128x128xbf16>
      %cst_45 = arith.constant dense<0.000000e+00> : vector<32x128xf32>
      %41 = tpu.matmul %35, %40, %cst_45 {dimension_numbers = #tpu.dot_dimension_numbers<[1], [0], [0], [1], [0, 0, 1, 1], [], []>} : vector<32x128xbf16>, vector<128x128xbf16>, vector<32x128xf32> -> vector<32x128xf32>
      %cst_46 = arith.constant 0.000000e+00 : f32
      %42 = vector.broadcast %cst_46 : f32 to vector<32x128xf32>
      %43 = arith.maximumf %37, %42 : vector<32x128xf32>
      %44 = arith.truncf %43 : vector<32x128xf32> to vector<32x128xbf16>
      %c0_47 = arith.constant 0 : index
      %c0_48 = arith.constant 0 : index
      %45 = vector.load %arg16[%c0_47, %c0_48] : memref<32x128xbf16, #tpu.memory_space<vmem>>, vector<32x128xbf16>
      tpu.vector_store %arg16[%c0_47, %c0_48], %44 {strides = array<i32>} : memref<32x128xbf16, #tpu.memory_space<vmem>>, vector<32x128xbf16>,
      %cst_49 = arith.constant 0.000000e+00 : f32
      %46 = vector.broadcast %cst_49 : f32 to vector<32x128xf32>
      %47 = arith.maximumf %39, %46 : vector<32x128xf32>
      %48 = arith.truncf %47 : vector<32x128xf32> to vector<32x128xbf16>
      %c0_50 = arith.constant 0 : index
      %c0_51 = arith.constant 0 : index
      %49 = vector.load %arg17[%c0_50, %c0_51] : memref<32x128xbf16, #tpu.memory_space<vmem>>, vector<32x128xbf16>
      tpu.vector_store %arg17[%c0_50, %c0_51], %48 {strides = array<i32>} : memref<32x128xbf16, #tpu.memory_space<vmem>>, vector<32x128xbf16>,
      %50 = arith.truncf %41 : vector<32x128xf32> to vector<32x128xbf16>
      %c0_52 = arith.constant 0 : index
      %c0_53 = arith.constant 0 : index
      %51 = vector.load %arg18[%c0_52, %c0_53] : memref<32x128xbf16, #tpu.memory_space<vmem>>, vector<32x128xbf16>
      tpu.vector_store %arg18[%c0_52, %c0_53], %50 {strides = array<i32>} : memref<32x128xbf16, #tpu.memory_space<vmem>>, vector<32x128xbf16>,
      %cst_54 = arith.constant 0.000000e+00 : f32
      %52 = vector.broadcast %cst_54 : f32 to vector<32x128xf32>
      %c0_55 = arith.constant 0 : index
      %c0_56 = arith.constant 0 : index
      %53 = vector.load %arg19[%c0_55, %c0_56] : memref<32x128xf32, #tpu.memory_space<vmem>>, vector<32x128xf32>
      tpu.vector_store %arg19[%c0_55, %c0_56], %52 {strides = array<i32>} : memref<32x128xf32, #tpu.memory_space<vmem>>, vector<32x128xf32>,
      %cst_57 = arith.constant 0.000000e+00 : f32
      %54 = vector.broadcast %cst_57 : f32 to vector<32x128xf32>
      %c0_58 = arith.constant 0 : index
      %c0_59 = arith.constant 0 : index
      %55 = vector.load %arg20[%c0_58, %c0_59] : memref<32x128xf32, #tpu.memory_space<vmem>>, vector<32x128xf32>
      tpu.vector_store %arg20[%c0_58, %c0_59], %54 {strides = array<i32>} : memref<32x128xf32, #tpu.memory_space<vmem>>, vector<32x128xf32>,
    } else {
    }
    %c0 = arith.constant 0 : index
    %c0_1 = arith.constant 0 : index
    %3 = vector.load %arg16[%c0, %c0_1] : memref<32x128xbf16, #tpu.memory_space<vmem>>, vector<32x128xbf16>
    %c0_2 = arith.constant 0 : index
    %c0_3 = arith.constant 0 : index
    %4 = vector.load %arg9[%c0_2, %c0_3] : memref<128x128xbf16, #tpu.memory_space<vmem>>, vector<128x128xbf16>
    %cst = arith.constant dense<0.000000e+00> : vector<32x128xf32>
    %5 = tpu.matmul %3, %4, %cst {dimension_numbers = #tpu.dot_dimension_numbers<[1], [0], [0], [1], [0, 0, 1, 1], [], []>} : vector<32x128xbf16>, vector<128x128xbf16>, vector<32x128xf32> -> vector<32x128xf32>
    %c0_4 = arith.constant 0 : index
    %c0_5 = arith.constant 0 : index
    %6 = vector.load %arg17[%c0_4, %c0_5] : memref<32x128xbf16, #tpu.memory_space<vmem>>, vector<32x128xbf16>
    %c0_6 = arith.constant 0 : index
    %c0_7 = arith.constant 0 : index
    %7 = vector.load %arg10[%c0_6, %c0_7] : memref<128x128xbf16, #tpu.memory_space<vmem>>, vector<128x128xbf16>
    %cst_8 = arith.constant dense<0.000000e+00> : vector<32x128xf32>
    %8 = tpu.matmul %6, %7, %cst_8 {dimension_numbers = #tpu.dot_dimension_numbers<[1], [0], [0], [1], [0, 0, 1, 1], [], []>} : vector<32x128xbf16>, vector<128x128xbf16>, vector<32x128xf32> -> vector<32x128xf32>
    %c0_9 = arith.constant 0 : index
    %c0_10 = arith.constant 0 : index
    %9 = vector.load %arg18[%c0_9, %c0_10] : memref<32x128xbf16, #tpu.memory_space<vmem>>, vector<32x128xbf16>
    %c0_11 = arith.constant 0 : index
    %c0_12 = arith.constant 0 : index
    %10 = vector.load %arg10[%c0_11, %c0_12] : memref<128x128xbf16, #tpu.memory_space<vmem>>, vector<128x128xbf16>
    %cst_13 = arith.constant dense<0.000000e+00> : vector<32x128xf32>
    %11 = tpu.matmul %9, %10, %cst_13 {dimension_numbers = #tpu.dot_dimension_numbers<[1], [0], [0], [1], [0, 0, 1, 1], [], []>} : vector<32x128xbf16>, vector<128x128xbf16>, vector<32x128xf32> -> vector<32x128xf32>
    %12 = arith.mulf %5, %8 : vector<32x128xf32>
    %13 = arith.truncf %12 : vector<32x128xf32> to vector<32x128xbf16>
    %c0_14 = arith.constant 0 : index
    %c0_15 = arith.constant 0 : index
    %14 = vector.load %arg11[%c0_14, %c0_15] : memref<128x128xbf16, #tpu.memory_space<vmem>>, vector<128x128xbf16>
    %cst_16 = arith.constant dense<0.000000e+00> : vector<32x128xf32>
    %15 = tpu.matmul %13, %14, %cst_16 {dimension_numbers = #tpu.dot_dimension_numbers<[1], [0], [0], [1], [0, 0, 1, 1], [], []>} : vector<32x128xbf16>, vector<128x128xbf16>, vector<32x128xf32> -> vector<32x128xf32>
    %16 = arith.truncf %15 : vector<32x128xf32> to vector<32x128xbf16>
    %c0_17 = arith.constant 0 : index
    %c0_18 = arith.constant 0 : index
    %17 = vector.load %arg12[%c0_17, %c0_18] : memref<128x128xbf16, #tpu.memory_space<vmem>>, vector<128x128xbf16>
    %cst_19 = arith.constant dense<0.000000e+00> : vector<32x128xf32>
    %18 = tpu.matmul %16, %17, %cst_19 {dimension_numbers = #tpu.dot_dimension_numbers<[1], [0], [0], [1], [0, 0, 1, 1], [], []>} : vector<32x128xbf16>, vector<128x128xbf16>, vector<32x128xf32> -> vector<32x128xf32>
    %c0_20 = arith.constant 0 : index
    %c0_21 = arith.constant 0 : index
    %19 = vector.load %arg19[%c0_20, %c0_21] : memref<32x128xf32, #tpu.memory_space<vmem>>, vector<32x128xf32>
    %20 = arith.mulf %18, %11 : vector<32x128xf32>
    %21 = arith.truncf %20 : vector<32x128xf32> to vector<32x128xbf16>
    %c0_22 = arith.constant 0 : index
    %c0_23 = arith.constant 0 : index
    %22 = vector.load %arg13[%c0_22, %c0_23] : memref<128x128xbf16, #tpu.memory_space<vmem>>, vector<128x128xbf16>
    %cst_24 = arith.constant dense<0.000000e+00> : vector<32x128xf32>
    %23 = tpu.matmul %21, %22, %cst_24 {dimension_numbers = #tpu.dot_dimension_numbers<[1], [0], [0], [1], [0, 0, 1, 1], [], []>} : vector<32x128xbf16>, vector<128x128xbf16>, vector<32x128xf32> -> vector<32x128xf32>
    %24 = arith.addf %19, %23 : vector<32x128xf32>
    %c0_25 = arith.constant 0 : index
    %c0_26 = arith.constant 0 : index
    %25 = vector.load %arg19[%c0_25, %c0_26] : memref<32x128xf32, #tpu.memory_space<vmem>>, vector<32x128xf32>
    tpu.vector_store %arg19[%c0_25, %c0_26], %24 {strides = array<i32>} : memref<32x128xf32, #tpu.memory_space<vmem>>, vector<32x128xf32>,
    %c0_27 = arith.constant 0 : index
    %c0_28 = arith.constant 0 : index
    %26 = vector.load %arg20[%c0_27, %c0_28] : memref<32x128xf32, #tpu.memory_space<vmem>>, vector<32x128xf32>
    %c0_29 = arith.constant 0 : index
    %c0_30 = arith.constant 0 : index
    %27 = vector.load %arg14[%c0_29, %c0_30] : memref<128x128xbf16, #tpu.memory_space<vmem>>, vector<128x128xbf16>
    %cst_31 = arith.constant dense<0.000000e+00> : vector<32x128xf32>
    %28 = tpu.matmul %16, %27, %cst_31 {dimension_numbers = #tpu.dot_dimension_numbers<[1], [0], [0], [1], [0, 0, 1, 1], [], []>} : vector<32x128xbf16>, vector<128x128xbf16>, vector<32x128xf32> -> vector<32x128xf32>
    %29 = arith.addf %26, %28 : vector<32x128xf32>
    %c0_32 = arith.constant 0 : index
    %c0_33 = arith.constant 0 : index
    %30 = vector.load %arg20[%c0_32, %c0_33] : memref<32x128xf32, #tpu.memory_space<vmem>>, vector<32x128xf32>
    tpu.vector_store %arg20[%c0_32, %c0_33], %29 {strides = array<i32>} : memref<32x128xf32, #tpu.memory_space<vmem>>, vector<32x128xf32>,
    %c2_i32 = arith.constant 2 : i32
    %31 = arith.cmpi eq, %arg1, %c2_i32 : i32
    %32 = arith.extui %31 : i1 to i32
    %c0_i32_34 = arith.constant 0 : i32
    %33 = arith.cmpi ne, %32, %c0_i32_34 : i32
    scf.if %33 {
      %c0_35 = arith.constant 0 : index
      %c0_36 = arith.constant 0 : index
      %34 = vector.load %arg2[%c0_35, %c0_36] : memref<32x128xf32, #tpu.memory_space<vmem>>, vector<32x128xf32>
      %c0_37 = arith.constant 0 : index
      %c0_38 = arith.constant 0 : index
      %35 = vector.load %arg20[%c0_37, %c0_38] : memref<32x128xf32, #tpu.memory_space<vmem>>, vector<32x128xf32>
      %cst_39 = arith.constant 0.000000e+00 : f32
      %36 = vector.broadcast %cst_39 : f32 to vector<32x128xf32>
      %37 = arith.cmpf ogt, %35, %36 : vector<32x128xf32>
      %cst_40 = arith.constant 1.000000e+00 : f32
      %38 = vector.broadcast %cst_40 : f32 to vector<32x128xf32>
      %39 = arith.select %37, %35, %38 : vector<32x128xi1>, vector<32x128xf32>
      %c0_41 = arith.constant 0 : index
      %c0_42 = arith.constant 0 : index
      %40 = vector.load %arg19[%c0_41, %c0_42] : memref<32x128xf32, #tpu.memory_space<vmem>>, vector<32x128xf32>
      %41 = tpu.reciprocal %39 {approx = true} : vector<32x128xf32> -> vector<32x128xf32>
      %42 = arith.mulf %40, %41 : vector<32x128xf32>
      %43 = arith.truncf %42 : vector<32x128xf32> to vector<32x128xbf16>
      %c0_43 = arith.constant 0 : index
      %c0_44 = arith.constant 0 : index
      %44 = vector.load %arg6[%c0_43, %c0_44] : memref<128x128xbf16, #tpu.memory_space<vmem>>, vector<128x128xbf16>
      %cst_45 = arith.constant dense<0.000000e+00> : vector<32x128xf32>
      %45 = tpu.matmul %43, %44, %cst_45 {dimension_numbers = #tpu.dot_dimension_numbers<[1], [0], [0], [1], [0, 0, 1, 1], [], []>} : vector<32x128xbf16>, vector<128x128xbf16>, vector<32x128xf32> -> vector<32x128xf32>
      %46 = tpu.iota {dimensions = array<i32: 1>} : vector<32x128xi32>
      %c48_i32 = arith.constant 48 : i32
      %47 = vector.broadcast %c48_i32 : i32 to vector<32x128xi32>
      %48 = arith.cmpi slt, %46, %47 : vector<32x128xi32>
      %49 = arith.addf %34, %45 : vector<32x128xf32>
      %cst_46 = arith.constant 0.000000e+00 : f32
      %50 = vector.broadcast %cst_46 : f32 to vector<32x128xf32>
      %51 = arith.select %48, %49, %50 : vector<32x128xi1>, vector<32x128xf32>
      %cst_47 = arith.constant dense<0.000000e+00> : vector<32xf32>
      %52 = vector.multi_reduction <add>, %51, %cst_47 [1] : vector<32x128xf32> to vector<32xf32>
      %53 = vector.shape_cast %52 : vector<32xf32> to vector<32x1xf32>
      %cst_48 = arith.constant 0.020833334 : f32
      %54 = vector.broadcast %cst_48 : f32 to vector<32x1xf32>
      %55 = arith.mulf %53, %54 : vector<32x1xf32>
      %56 = vector.broadcast %55 : vector<32x1xf32> to vector<32x128xf32>
      %57 = arith.subf %51, %56 : vector<32x128xf32>
      %cst_49 = arith.constant 0.000000e+00 : f32
      %58 = vector.broadcast %cst_49 : f32 to vector<32x128xf32>
      %59 = arith.select %48, %57, %58 : vector<32x128xi1>, vector<32x128xf32>
      %60 = arith.mulf %59, %59 : vector<32x128xf32>
      %cst_50 = arith.constant dense<0.000000e+00> : vector<32xf32>
      %61 = vector.multi_reduction <add>, %60, %cst_50 [1] : vector<32x128xf32> to vector<32xf32>
      %62 = vector.shape_cast %61 : vector<32xf32> to vector<32x1xf32>
      %cst_51 = arith.constant 0.020833334 : f32
      %63 = vector.broadcast %cst_51 : f32 to vector<32x1xf32>
      %64 = arith.mulf %62, %63 : vector<32x1xf32>
      %cst_52 = arith.constant 9.99999974E-6 : f32
      %65 = vector.broadcast %cst_52 : f32 to vector<32x1xf32>
      %66 = arith.addf %64, %65 : vector<32x1xf32>
      %67 = math.rsqrt %66 : vector<32x1xf32>
      %68 = vector.broadcast %67 : vector<32x1xf32> to vector<32x128xf32>
      %69 = arith.mulf %59, %68 : vector<32x128xf32>
      %c0_53 = arith.constant 0 : index
      %c0_54 = arith.constant 0 : index
      %70 = vector.load %arg7[%c0_53, %c0_54] : memref<1x128xf32, #tpu.memory_space<vmem>>, vector<1x128xf32>
      %71 = vector.broadcast %70 : vector<1x128xf32> to vector<32x128xf32>
      %72 = arith.mulf %69, %71 : vector<32x128xf32>
      %c0_55 = arith.constant 0 : index
      %c0_56 = arith.constant 0 : index
      %73 = vector.load %arg8[%c0_55, %c0_56] : memref<1x128xf32, #tpu.memory_space<vmem>>, vector<1x128xf32>
      %74 = vector.broadcast %73 : vector<1x128xf32> to vector<32x128xf32>
      %75 = arith.addf %72, %74 : vector<32x128xf32>
      %c0_57 = arith.constant 0 : index
      %c0_58 = arith.constant 0 : index
      %76 = vector.load %arg15[%c0_57, %c0_58] : memref<32x128xf32, #tpu.memory_space<vmem>>, vector<32x128xf32>
      tpu.vector_store %arg15[%c0_57, %c0_58], %75 {strides = array<i32>} : memref<32x128xf32, #tpu.memory_space<vmem>>, vector<32x128xf32>,
    } else {
    }
    return
  }
  func.func @transform_0(%arg0: i32, %arg1: i32) -> (i32, i32) {
    %c0_i32 = arith.constant 0 : i32
    %c0_i32_0 = arith.constant 0 : i32
    return %arg0, %c0_i32 : i32, i32
  }
  func.func @transform_1(%arg0: i32, %arg1: i32) -> (i32, i32) {
    %c0_i32 = arith.constant 0 : i32
    %c0_i32_0 = arith.constant 0 : i32
    %c0_i32_1 = arith.constant 0 : i32
    return %c0_i32, %c0_i32_0 : i32, i32
  }
  func.func @transform_2(%arg0: i32, %arg1: i32) -> (i32, i32) {
    %c0_i32 = arith.constant 0 : i32
    %c0_i32_0 = arith.constant 0 : i32
    %c0_i32_1 = arith.constant 0 : i32
    return %c0_i32, %c0_i32_0 : i32, i32
  }
  func.func @transform_3(%arg0: i32, %arg1: i32) -> (i32, i32) {
    %c0_i32 = arith.constant 0 : i32
    %c0_i32_0 = arith.constant 0 : i32
    %c0_i32_1 = arith.constant 0 : i32
    return %c0_i32, %c0_i32_0 : i32, i32
  }
  func.func @transform_4(%arg0: i32, %arg1: i32) -> (i32, i32) {
    %c0_i32 = arith.constant 0 : i32
    %c0_i32_0 = arith.constant 0 : i32
    %c0_i32_1 = arith.constant 0 : i32
    return %c0_i32, %c0_i32_0 : i32, i32
  }
  func.func @transform_5(%arg0: i32, %arg1: i32) -> (i32, i32) {
    %c0_i32 = arith.constant 0 : i32
    %c0_i32_0 = arith.constant 0 : i32
    %c0_i32_1 = arith.constant 0 : i32
    return %c0_i32, %c0_i32_0 : i32, i32
  }
  func.func @transform_6(%arg0: i32, %arg1: i32) -> (i32, i32) {
    %c0_i32 = arith.constant 0 : i32
    %c0_i32_0 = arith.constant 0 : i32
    %c0_i32_1 = arith.constant 0 : i32
    return %c0_i32, %c0_i32_0 : i32, i32
  }
  func.func @transform_7(%arg0: i32, %arg1: i32) -> (i32, i32) {
    %c0_i32 = arith.constant 0 : i32
    %c0_i32_0 = arith.constant 0 : i32
    return %c0_i32, %arg1 : i32, i32
  }
  func.func @transform_8(%arg0: i32, %arg1: i32) -> (i32, i32) {
    %c0_i32 = arith.constant 0 : i32
    %c0_i32_0 = arith.constant 0 : i32
    return %c0_i32, %arg1 : i32, i32
  }
  func.func @transform_9(%arg0: i32, %arg1: i32) -> (i32, i32) {
    %c0_i32 = arith.constant 0 : i32
    %c0_i32_0 = arith.constant 0 : i32
    return %arg1, %c0_i32 : i32, i32
  }
  func.func @transform_10(%arg0: i32, %arg1: i32) -> (i32, i32) {
    %c0_i32 = arith.constant 0 : i32
    %c0_i32_0 = arith.constant 0 : i32
    return %c0_i32, %arg1 : i32, i32
  }
  func.func @transform_11(%arg0: i32, %arg1: i32) -> (i32, i32) {
    %c0_i32 = arith.constant 0 : i32
    %c0_i32_0 = arith.constant 0 : i32
    return %arg1, %c0_i32 : i32, i32
  }
  func.func @transform_12(%arg0: i32, %arg1: i32) -> (i32, i32) {
    %c0_i32 = arith.constant 0 : i32
    %c0_i32_0 = arith.constant 0 : i32
    %c0_i32_1 = arith.constant 0 : i32
    return %c0_i32, %c0_i32_0 : i32, i32
  }
  func.func @transform_13(%arg0: i32, %arg1: i32) -> (i32, i32) {
    %c0_i32 = arith.constant 0 : i32
    %c0_i32_0 = arith.constant 0 : i32
    return %arg0, %c0_i32 : i32, i32
  }
}

module attributes {stable_mosaic.version = 11 : i64} {
  func.func @agt_kernel(%arg0: i32, %arg1: i32, %arg2: memref<32x128xf32, #tpu.memory_space<vmem>>, %arg3: memref<128x128xbf16, #tpu.memory_space<vmem>>, %arg4: memref<128x128xbf16, #tpu.memory_space<vmem>>, %arg5: memref<128x128xbf16, #tpu.memory_space<vmem>>, %arg6: memref<128x128xbf16, #tpu.memory_space<vmem>>, %arg7: memref<1x128xf32, #tpu.memory_space<vmem>>, %arg8: memref<1x128xf32, #tpu.memory_space<vmem>>, %arg9: memref<128x128xbf16, #tpu.memory_space<vmem>>, %arg10: memref<128x128xbf16, #tpu.memory_space<vmem>>, %arg11: memref<128x128xbf16, #tpu.memory_space<vmem>>, %arg12: memref<128x128xbf16, #tpu.memory_space<vmem>>, %arg13: memref<128x128xbf16, #tpu.memory_space<vmem>>, %arg14: memref<128x128xbf16, #tpu.memory_space<vmem>>, %arg15: memref<32x128xf32, #tpu.memory_space<vmem>>, %arg16: memref<32x128xbf16, #tpu.memory_space<vmem>>, %arg17: memref<32x128xbf16, #tpu.memory_space<vmem>>, %arg18: memref<32x128xbf16, #tpu.memory_space<vmem>>, %arg19: memref<32x128xf32, #tpu.memory_space<vmem>>, %arg20: memref<32x128xf32, #tpu.memory_space<vmem>>) attributes {dimension_semantics = [#tpu.dimension_semantics<parallel>, #tpu.dimension_semantics<arbitrary>], iteration_bounds = array<i64: 2, 3>, scalar_prefetch = 0 : i64, scratch_operands = 5 : i64, tpu.core_type = #tpu.core_type<tc>, window_params = [{transform_indices = @transform_0, window_bounds = array<i64: 32, 128>}, {pipeline_mode = #tpu.pipeline_mode<synchronous>, transform_indices = @transform_1, window_bounds = array<i64: 128, 128>}, {pipeline_mode = #tpu.pipeline_mode<synchronous>, transform_indices = @transform_2, window_bounds = array<i64: 128, 128>}, {pipeline_mode = #tpu.pipeline_mode<synchronous>, transform_indices = @transform_3, window_bounds = array<i64: 128, 128>}, {pipeline_mode = #tpu.pipeline_mode<synchronous>, transform_indices = @transform_4, window_bounds = array<i64: 128, 128>}, {pipeline_mode = #tpu.pipeline_mode<synchronous>, transform_indices = @transform_5, window_bounds = array<i64: 1, 128>}, {pipeline_mode = #tpu.pipeline_mode<synchronous>, transform_indices = @transform_6, window_bounds = array<i64: 1, 128>}, {transform_indices = @transform_7, window_bounds = array<i64: 128, 128>}, {transform_indices = @transform_8, window_bounds = array<i64: 128, 128>}, {transform_indices = @transform_9, window_bounds = array<i64: 128, 128>}, {transform_indices = @transform_10, window_bounds = array<i64: 128, 128>}, {transform_indices = @transform_11, window_bounds = array<i64: 128, 128>}, {pipeline_mode = #tpu.pipeline_mode<synchronous>, transform_indices = @transform_12, window_bounds = array<i64: 128, 128>}, {transform_indices = @transform_13, window_bounds = array<i64: 32, 128>}]} {
    %c0_i32 = arith.constant 0 : i32
    %0 = arith.cmpi eq, %arg1, %c0_i32 : i32
    %1 = arith.extui %0 : i1 to i32
    %c0_i32_0 = arith.constant 0 : i32
    %2 = arith.cmpi ne, %1, %c0_i32_0 : i32
    scf.if %2 {
      %c0_35 = arith.constant 0 : index
      %c0_36 = arith.constant 0 : index
      %34 = vector.load %arg2[%c0_35, %c0_36] : memref<32x128xf32, #tpu.memory_space<vmem>>, vector<32x128xf32>
      %35 = arith.truncf %34 : vector<32x128xf32> to vector<32x128xbf16>
      %c0_37 = arith.constant 0 : index
      %c0_38 = arith.constant 0 : index
      %36 = vector.load %arg3[%c0_37, %c0_38] : memref<128x128xbf16, #tpu.memory_space<vmem>>, vector<128x128xbf16>
      %cst_39 = arith.constant dense<0.000000e+00> : vector<32x128xf32>
      %37 = tpu.matmul %35, %36, %cst_39 {dimension_numbers = #tpu.dot_dimension_numbers<[1], [0], [0], [1], [0, 0, 1, 1], [], []>} : vector<32x128xbf16>, vector<128x128xbf16>, vector<32x128xf32> -> vector<32x128xf32>
      %c0_40 = arith.constant 0 : index
      %c0_41 = arith.constant 0 : index
      %38 = vector.load %arg4[%c0_40, %c0_41] : memref<128x128xbf16, #tpu.memory_space<vmem>>, vector<128x128xbf16>
      %cst_42 = arith.constant dense<0.000000e+00> : vector<32x128xf32>
      %39 = tpu.matmul %35, %38, %cst_42 {dimension_numbers = #tpu.dot_dimension_numbers<[1], [0], [0], [1], [0, 0, 1, 1], [], []>} : vector<32x128xbf16>, vector<128x128xbf16>, vector<32x128xf32> -> vector<32x128xf32>
      %c0_43 = arith.constant 0 : index
      %c0_44 = arith.constant 0 : index
      %40 = vector.load %arg5[%c0_43, %c0_44] : memref<128x128xbf16, #tpu.memory_space<vmem>>, vector<128x128xbf16>
      %cst_45 = arith.constant dense<0.000000e+00> : vector<32x128xf32>
      %41 = tpu.matmul %35, %40, %cst_45 {dimension_numbers = #tpu.dot_dimension_numbers<[1], [0], [0], [1], [0, 0, 1, 1], [], []>} : vector<32x128xbf16>, vector<128x128xbf16>, vector<32x128xf32> -> vector<32x128xf32>
      %cst_46 = arith.constant 0.000000e+00 : f32
      %42 = vector.broadcast %cst_46 : f32 to vector<32x128xf32>
      %43 = arith.maximumf %37, %42 : vector<32x128xf32>
      %44 = arith.truncf %43 : vector<32x128xf32> to vector<32x128xbf16>
      %c0_47 = arith.constant 0 : index
      %c0_48 = arith.constant 0 : index
      %45 = vector.load %arg16[%c0_47, %c0_48] : memref<32x128xbf16, #tpu.memory_space<vmem>>, vector<32x128xbf16>
      tpu.vector_store %arg16[%c0_47, %c0_48], %44 {strides = array<i32>} : memref<32x128xbf16, #tpu.memory_space<vmem>>, vector<32x128xbf16>,
      %cst_49 = arith.constant 0.000000e+00 : f32
      %46 = vector.broadcast %cst_49 : f32 to vector<32x128xf32>
      %47 = arith.maximumf %39, %46 : vector<32x128xf32>
      %48 = arith.truncf %47 : vector<32x128xf32> to vector<32x128xbf16>
      %c0_50 = arith.constant 0 : index
      %c0_51 = arith.constant 0 : index
      %49 = vector.load %arg17[%c0_50, %c0_51] : memref<32x128xbf16, #tpu.memory_space<vmem>>, vector<32x128xbf16>
      tpu.vector_store %arg17[%c0_50, %c0_51], %48 {strides = array<i32>} : memref<32x128xbf16, #tpu.memory_space<vmem>>, vector<32x128xbf16>,
      %50 = arith.truncf %41 : vector<32x128xf32> to vector<32x128xbf16>
      %c0_52 = arith.constant 0 : index
      %c0_53 = arith.constant 0 : index
      %51 = vector.load %arg18[%c0_52, %c0_53] : memref<32x128xbf16, #tpu.memory_space<vmem>>, vector<32x128xbf16>
      tpu.vector_store %arg18[%c0_52, %c0_53], %50 {strides = array<i32>} : memref<32x128xbf16, #tpu.memory_space<vmem>>, vector<32x128xbf16>,
      %cst_54 = arith.constant 0.000000e+00 : f32
      %52 = vector.broadcast %cst_54 : f32 to vector<32x128xf32>
      %c0_55 = arith.constant 0 : index
      %c0_56 = arith.constant 0 : index
      %53 = vector.load %arg19[%c0_55, %c0_56] : memref<32x128xf32, #tpu.memory_space<vmem>>, vector<32x128xf32>
      tpu.vector_store %arg19[%c0_55, %c0_56], %52 {strides = array<i32>} : memref<32x128xf32, #tpu.memory_space<vmem>>, vector<32x128xf32>,
      %cst_57 = arith.constant 0.000000e+00 : f32
      %54 = vector.broadcast %cst_57 : f32 to vector<32x128xf32>
      %c0_58 = arith.constant 0 : index
      %c0_59 = arith.constant 0 : index
      %55 = vector.load %arg20[%c0_58, %c0_59] : memref<32x128xf32, #tpu.memory_space<vmem>>, vector<32x128xf32>
      tpu.vector_store %arg20[%c0_58, %c0_59], %54 {strides = array<i32>} : memref<32x128xf32, #tpu.memory_space<vmem>>, vector<32x128xf32>,
    } else {
    }
    %c0 = arith.constant 0 : index
    %c0_1 = arith.constant 0 : index
    %3 = vector.load %arg16[%c0, %c0_1] : memref<32x128xbf16, #tpu.memory_space<vmem>>, vector<32x128xbf16>
    %c0_2 = arith.constant 0 : index
    %c0_3 = arith.constant 0 : index
    %4 = vector.load %arg9[%c0_2, %c0_3] : memref<128x128xbf16, #tpu.memory_space<vmem>>, vector<128x128xbf16>
    %cst = arith.constant dense<0.000000e+00> : vector<32x128xf32>
    %5 = tpu.matmul %3, %4, %cst {dimension_numbers = #tpu.dot_dimension_numbers<[1], [0], [0], [1], [0, 0, 1, 1], [], []>} : vector<32x128xbf16>, vector<128x128xbf16>, vector<32x128xf32> -> vector<32x128xf32>
    %c0_4 = arith.constant 0 : index
    %c0_5 = arith.constant 0 : index
    %6 = vector.load %arg17[%c0_4, %c0_5] : memref<32x128xbf16, #tpu.memory_space<vmem>>, vector<32x128xbf16>
    %c0_6 = arith.constant 0 : index
    %c0_7 = arith.constant 0 : index
    %7 = vector.load %arg10[%c0_6, %c0_7] : memref<128x128xbf16, #tpu.memory_space<vmem>>, vector<128x128xbf16>
    %cst_8 = arith.constant dense<0.000000e+00> : vector<32x128xf32>
    %8 = tpu.matmul %6, %7, %cst_8 {dimension_numbers = #tpu.dot_dimension_numbers<[1], [0], [0], [1], [0, 0, 1, 1], [], []>} : vector<32x128xbf16>, vector<128x128xbf16>, vector<32x128xf32> -> vector<32x128xf32>
    %c0_9 = arith.constant 0 : index
    %c0_10 = arith.constant 0 : index
    %9 = vector.load %arg18[%c0_9, %c0_10] : memref<32x128xbf16, #tpu.memory_space<vmem>>, vector<32x128xbf16>
    %c0_11 = arith.constant 0 : index
    %c0_12 = arith.constant 0 : index
    %10 = vector.load %arg10[%c0_11, %c0_12] : memref<128x128xbf16, #tpu.memory_space<vmem>>, vector<128x128xbf16>
    %cst_13 = arith.constant dense<0.000000e+00> : vector<32x128xf32>
    %11 = tpu.matmul %9, %10, %cst_13 {dimension_numbers = #tpu.dot_dimension_numbers<[1], [0], [0], [1], [0, 0, 1, 1], [], []>} : vector<32x128xbf16>, vector<128x128xbf16>, vector<32x128xf32> -> vector<32x128xf32>
    %12 = arith.mulf %5, %8 : vector<32x128xf32>
    %13 = arith.truncf %12 : vector<32x128xf32> to vector<32x128xbf16>
    %c0_14 = arith.constant 0 : index
    %c0_15 = arith.constant 0 : index
    %14 = vector.load %arg11[%c0_14, %c0_15] : memref<128x128xbf16, #tpu.memory_space<vmem>>, vector<128x128xbf16>
    %cst_16 = arith.constant dense<0.000000e+00> : vector<32x128xf32>
    %15 = tpu.matmul %13, %14, %cst_16 {dimension_numbers = #tpu.dot_dimension_numbers<[1], [0], [0], [1], [0, 0, 1, 1], [], []>} : vector<32x128xbf16>, vector<128x128xbf16>, vector<32x128xf32> -> vector<32x128xf32>
    %16 = arith.truncf %15 : vector<32x128xf32> to vector<32x128xbf16>
    %c0_17 = arith.constant 0 : index
    %c0_18 = arith.constant 0 : index
    %17 = vector.load %arg12[%c0_17, %c0_18] : memref<128x128xbf16, #tpu.memory_space<vmem>>, vector<128x128xbf16>
    %cst_19 = arith.constant dense<0.000000e+00> : vector<32x128xf32>
    %18 = tpu.matmul %16, %17, %cst_19 {dimension_numbers = #tpu.dot_dimension_numbers<[1], [0], [0], [1], [0, 0, 1, 1], [], []>} : vector<32x128xbf16>, vector<128x128xbf16>, vector<32x128xf32> -> vector<32x128xf32>
    %c0_20 = arith.constant 0 : index
    %c0_21 = arith.constant 0 : index
    %19 = vector.load %arg19[%c0_20, %c0_21] : memref<32x128xf32, #tpu.memory_space<vmem>>, vector<32x128xf32>
    %20 = arith.mulf %18, %11 : vector<32x128xf32>
    %21 = arith.truncf %20 : vector<32x128xf32> to vector<32x128xbf16>
    %c0_22 = arith.constant 0 : index
    %c0_23 = arith.constant 0 : index
    %22 = vector.load %arg13[%c0_22, %c0_23] : memref<128x128xbf16, #tpu.memory_space<vmem>>, vector<128x128xbf16>
    %cst_24 = arith.constant dense<0.000000e+00> : vector<32x128xf32>
    %23 = tpu.matmul %21, %22, %cst_24 {dimension_numbers = #tpu.dot_dimension_numbers<[1], [0], [0], [1], [0, 0, 1, 1], [], []>} : vector<32x128xbf16>, vector<128x128xbf16>, vector<32x128xf32> -> vector<32x128xf32>
    %24 = arith.addf %19, %23 : vector<32x128xf32>
    %c0_25 = arith.constant 0 : index
    %c0_26 = arith.constant 0 : index
    %25 = vector.load %arg19[%c0_25, %c0_26] : memref<32x128xf32, #tpu.memory_space<vmem>>, vector<32x128xf32>
    tpu.vector_store %arg19[%c0_25, %c0_26], %24 {strides = array<i32>} : memref<32x128xf32, #tpu.memory_space<vmem>>, vector<32x128xf32>,
    %c0_27 = arith.constant 0 : index
    %c0_28 = arith.constant 0 : index
    %26 = vector.load %arg20[%c0_27, %c0_28] : memref<32x128xf32, #tpu.memory_space<vmem>>, vector<32x128xf32>
    %c0_29 = arith.constant 0 : index
    %c0_30 = arith.constant 0 : index
    %27 = vector.load %arg14[%c0_29, %c0_30] : memref<128x128xbf16, #tpu.memory_space<vmem>>, vector<128x128xbf16>
    %cst_31 = arith.constant dense<0.000000e+00> : vector<32x128xf32>
    %28 = tpu.matmul %16, %27, %cst_31 {dimension_numbers = #tpu.dot_dimension_numbers<[1], [0], [0], [1], [0, 0, 1, 1], [], []>} : vector<32x128xbf16>, vector<128x128xbf16>, vector<32x128xf32> -> vector<32x128xf32>
    %29 = arith.addf %26, %28 : vector<32x128xf32>
    %c0_32 = arith.constant 0 : index
    %c0_33 = arith.constant 0 : index
    %30 = vector.load %arg20[%c0_32, %c0_33] : memref<32x128xf32, #tpu.memory_space<vmem>>, vector<32x128xf32>
    tpu.vector_store %arg20[%c0_32, %c0_33], %29 {strides = array<i32>} : memref<32x128xf32, #tpu.memory_space<vmem>>, vector<32x128xf32>,
    %c2_i32 = arith.constant 2 : i32
    %31 = arith.cmpi eq, %arg1, %c2_i32 : i32
    %32 = arith.extui %31 : i1 to i32
    %c0_i32_34 = arith.constant 0 : i32
    %33 = arith.cmpi ne, %32, %c0_i32_34 : i32
    scf.if %33 {
      %c0_35 = arith.constant 0 : index
      %c0_36 = arith.constant 0 : index
      %34 = vector.load %arg2[%c0_35, %c0_36] : memref<32x128xf32, #tpu.memory_space<vmem>>, vector<32x128xf32>
      %c0_37 = arith.constant 0 : index
      %c0_38 = arith.constant 0 : index
      %35 = vector.load %arg20[%c0_37, %c0_38] : memref<32x128xf32, #tpu.memory_space<vmem>>, vector<32x128xf32>
      %cst_39 = arith.constant 0.000000e+00 : f32
      %36 = vector.broadcast %cst_39 : f32 to vector<32x128xf32>
      %37 = arith.cmpf ogt, %35, %36 : vector<32x128xf32>
      %cst_40 = arith.constant 1.000000e+00 : f32
      %38 = vector.broadcast %cst_40 : f32 to vector<32x128xf32>
      %39 = arith.select %37, %35, %38 : vector<32x128xi1>, vector<32x128xf32>
      %c0_41 = arith.constant 0 : index
      %c0_42 = arith.constant 0 : index
      %40 = vector.load %arg19[%c0_41, %c0_42] : memref<32x128xf32, #tpu.memory_space<vmem>>, vector<32x128xf32>
      %41 = tpu.reciprocal %39 {approx = true} : vector<32x128xf32> -> vector<32x128xf32>
      %42 = arith.mulf %40, %41 : vector<32x128xf32>
      %43 = arith.truncf %42 : vector<32x128xf32> to vector<32x128xbf16>
      %c0_43 = arith.constant 0 : index
      %c0_44 = arith.constant 0 : index
      %44 = vector.load %arg6[%c0_43, %c0_44] : memref<128x128xbf16, #tpu.memory_space<vmem>>, vector<128x128xbf16>
      %cst_45 = arith.constant dense<0.000000e+00> : vector<32x128xf32>
      %45 = tpu.matmul %43, %44, %cst_45 {dimension_numbers = #tpu.dot_dimension_numbers<[1], [0], [0], [1], [0, 0, 1, 1], [], []>} : vector<32x128xbf16>, vector<128x128xbf16>, vector<32x128xf32> -> vector<32x128xf32>
      %46 = tpu.iota {dimensions = array<i32: 1>} : vector<32x128xi32>
      %c48_i32 = arith.constant 48 : i32
      %47 = vector.broadcast %c48_i32 : i32 to vector<32x128xi32>
      %48 = arith.cmpi slt, %46, %47 : vector<32x128xi32>
      %49 = arith.addf %34, %45 : vector<32x128xf32>
      %cst_46 = arith.constant 0.000000e+00 : f32
      %50 = vector.broadcast %cst_46 : f32 to vector<32x128xf32>
      %51 = arith.select %48, %49, %50 : vector<32x128xi1>, vector<32x128xf32>
      %cst_47 = arith.constant dense<0.000000e+00> : vector<32xf32>
      %52 = vector.multi_reduction <add>, %51, %cst_47 [1] : vector<32x128xf32> to vector<32xf32>
      %53 = vector.shape_cast %52 : vector<32xf32> to vector<32x1xf32>
      %cst_48 = arith.constant 0.020833334 : f32
      %54 = vector.broadcast %cst_48 : f32 to vector<32x1xf32>
      %55 = arith.mulf %53, %54 : vector<32x1xf32>
      %56 = vector.broadcast %55 : vector<32x1xf32> to vector<32x128xf32>
      %57 = arith.subf %51, %56 : vector<32x128xf32>
      %cst_49 = arith.constant 0.000000e+00 : f32
      %58 = vector.broadcast %cst_49 : f32 to vector<32x128xf32>
      %59 = arith.select %48, %57, %58 : vector<32x128xi1>, vector<32x128xf32>
      %60 = arith.mulf %59, %59 : vector<32x128xf32>
      %cst_50 = arith.constant dense<0.000000e+00> : vector<32xf32>
      %61 = vector.multi_reduction <add>, %60, %cst_50 [1] : vector<32x128xf32> to vector<32xf32>
      %62 = vector.shape_cast %61 : vector<32xf32> to vector<32x1xf32>
      %cst_51 = arith.constant 0.020833334 : f32
      %63 = vector.broadcast %cst_51 : f32 to vector<32x1xf32>
      %64 = arith.mulf %62, %63 : vector<32x1xf32>
      %cst_52 = arith.constant 9.99999974E-6 : f32
      %65 = vector.broadcast %cst_52 : f32 to vector<32x1xf32>
      %66 = arith.addf %64, %65 : vector<32x1xf32>
      %67 = math.rsqrt %66 : vector<32x1xf32>
      %68 = vector.broadcast %67 : vector<32x1xf32> to vector<32x128xf32>
      %69 = arith.mulf %59, %68 : vector<32x128xf32>
      %c0_53 = arith.constant 0 : index
      %c0_54 = arith.constant 0 : index
      %70 = vector.load %arg7[%c0_53, %c0_54] : memref<1x128xf32, #tpu.memory_space<vmem>>, vector<1x128xf32>
      %71 = vector.broadcast %70 : vector<1x128xf32> to vector<32x128xf32>
      %72 = arith.mulf %69, %71 : vector<32x128xf32>
      %c0_55 = arith.constant 0 : index
      %c0_56 = arith.constant 0 : index
      %73 = vector.load %arg8[%c0_55, %c0_56] : memref<1x128xf32, #tpu.memory_space<vmem>>, vector<1x128xf32>
      %74 = vector.broadcast %73 : vector<1x128xf32> to vector<32x128xf32>
      %75 = arith.addf %72, %74 : vector<32x128xf32>
      %c0_57 = arith.constant 0 : index
      %c0_58 = arith.constant 0 : index
      %76 = vector.load %arg15[%c0_57, %c0_58] : memref<32x128xf32, #tpu.memory_space<vmem>>, vector<32x128xf32>
      tpu.vector_store %arg15[%c0_57, %c0_58], %75 {strides = array<i32>} : memref<32x128xf32, #tpu.memory_space<vmem>>, vector<32x128xf32>,
    } else {
    }
    return
  }
  func.func @transform_0(%arg0: i32, %arg1: i32) -> (i32, i32) {
    %c0_i32 = arith.constant 0 : i32
    %c0_i32_0 = arith.constant 0 : i32
    return %arg0, %c0_i32 : i32, i32
  }
  func.func @transform_1(%arg0: i32, %arg1: i32) -> (i32, i32) {
    %c0_i32 = arith.constant 0 : i32
    %c0_i32_0 = arith.constant 0 : i32
    %c0_i32_1 = arith.constant 0 : i32
    return %c0_i32, %c0_i32_0 : i32, i32
  }
  func.func @transform_2(%arg0: i32, %arg1: i32) -> (i32, i32) {
    %c0_i32 = arith.constant 0 : i32
    %c0_i32_0 = arith.constant 0 : i32
    %c0_i32_1 = arith.constant 0 : i32
    return %c0_i32, %c0_i32_0 : i32, i32
  }
  func.func @transform_3(%arg0: i32, %arg1: i32) -> (i32, i32) {
    %c0_i32 = arith.constant 0 : i32
    %c0_i32_0 = arith.constant 0 : i32
    %c0_i32_1 = arith.constant 0 : i32
    return %c0_i32, %c0_i32_0 : i32, i32
  }
  func.func @transform_4(%arg0: i32, %arg1: i32) -> (i32, i32) {
    %c0_i32 = arith.constant 0 : i32
    %c0_i32_0 = arith.constant 0 : i32
    %c0_i32_1 = arith.constant 0 : i32
    return %c0_i32, %c0_i32_0 : i32, i32
  }
  func.func @transform_5(%arg0: i32, %arg1: i32) -> (i32, i32) {
    %c0_i32 = arith.constant 0 : i32
    %c0_i32_0 = arith.constant 0 : i32
    %c0_i32_1 = arith.constant 0 : i32
    return %c0_i32, %c0_i32_0 : i32, i32
  }
  func.func @transform_6(%arg0: i32, %arg1: i32) -> (i32, i32) {
    %c0_i32 = arith.constant 0 : i32
    %c0_i32_0 = arith.constant 0 : i32
    %c0_i32_1 = arith.constant 0 : i32
    return %c0_i32, %c0_i32_0 : i32, i32
  }
  func.func @transform_7(%arg0: i32, %arg1: i32) -> (i32, i32) {
    %c0_i32 = arith.constant 0 : i32
    %c0_i32_0 = arith.constant 0 : i32
    return %c0_i32, %arg1 : i32, i32
  }
  func.func @transform_8(%arg0: i32, %arg1: i32) -> (i32, i32) {
    %c0_i32 = arith.constant 0 : i32
    %c0_i32_0 = arith.constant 0 : i32
    return %c0_i32, %arg1 : i32, i32
  }
  func.func @transform_9(%arg0: i32, %arg1: i32) -> (i32, i32) {
    %c0_i32 = arith.constant 0 : i32
    %c0_i32_0 = arith.constant 0 : i32
    return %arg1, %c0_i32 : i32, i32
  }
  func.func @transform_10(%arg0: i32, %arg1: i32) -> (i32, i32) {
    %c0_i32 = arith.constant 0 : i32
    %c0_i32_0 = arith.constant 0 : i32
    return %c0_i32, %arg1 : i32, i32
  }
  func.func @transform_11(%arg0: i32, %arg1: i32) -> (i32, i32) {
    %c0_i32 = arith.constant 0 : i32
    %c0_i32_0 = arith.constant 0 : i32
    return %arg1, %c0_i32 : i32, i32
  }
  func.func @transform_12(%arg0: i32, %arg1: i32) -> (i32, i32) {
    %c0_i32 = arith.constant 0 : i32
    %c0_i32_0 = arith.constant 0 : i32
    %c0_i32_1 = arith.constant 0 : i32
    return %c0_i32, %c0_i32_0 : i32, i32
  }
  func.func @transform_13(%arg0: i32, %arg1: i32) -> (i32, i32) {
    %c0_i32 = arith.constant 0 : i32
    %c0_i32_0 = arith.constant 0 : i32
    return %arg0, %c0_i32 : i32, i32
  }
}

</mosaic_0001>

<llo_original>
// kernel: tpu_custom_call.1
$region0: #{tpu_custom_call.1}
  #allocation0 [shape = 'u32[]', space=smem, size = 0x4, offset = 0x4, fixed_abs, tag = 'smem constant byte address 0x4 - core index']
  #allocation1 [shape = 'u32[144,128]{1,0:T(1,128)}', space=vmem, size = 0x12000, scoped, tag = 'internal scratch']
  #allocation2 [shape = 'bf16[32,128]{1,0:T(16,128)(2,1)}', space=vmem, size = 0x2000, scoped, tag = 'scratch operand']
  #allocation3 [shape = 'bf16[32,128]{1,0:T(16,128)(2,1)}', space=vmem, size = 0x2000, scoped, tag = 'scratch operand']
  #allocation4 [shape = 'bf16[32,128]{1,0:T(16,128)(2,1)}', space=vmem, size = 0x2000, scoped, tag = 'scratch operand']
  #allocation5 [shape = 'f32[32,128]{1,0:T(8,128)}', space=vmem, size = 0x4000, scoped, tag = 'scratch operand']
  #allocation6 [shape = 'f32[32,128]{1,0:T(8,128)}', space=vmem, size = 0x4000, scoped, tag = 'scratch operand']
  %s0 = inlined_call_operand.hbm [shape: f32[64,128], index: 0, kind: input, shape index: {}]
  %s1 = inlined_call_operand.hbm [shape: bf16[128,128], index: 1, kind: input, shape index: {}]
  %s2 = inlined_call_operand.hbm [shape: bf16[128,128], index: 2, kind: input, shape index: {}]
  %s3 = inlined_call_operand.hbm [shape: bf16[128,128], index: 3, kind: input, shape index: {}]
  %s4 = inlined_call_operand.hbm [shape: bf16[128,128], index: 4, kind: input, shape index: {}]
  %s5 = inlined_call_operand.vmem [shape: f32[1,128], index: 5, kind: input, shape index: {}]
  %s6 = inlined_call_operand.vmem [shape: f32[1,128], index: 6, kind: input, shape index: {}]
  %s7 = inlined_call_operand.hbm [shape: bf16[128,384], index: 7, kind: input, shape index: {}]
  %s8 = inlined_call_operand.hbm [shape: bf16[128,384], index: 8, kind: input, shape index: {}]
  %s9 = inlined_call_operand.hbm [shape: bf16[384,128], index: 9, kind: input, shape index: {}]
  %s10 = inlined_call_operand.hbm [shape: bf16[128,384], index: 10, kind: input, shape index: {}]
  %s11 = inlined_call_operand.hbm [shape: bf16[384,128], index: 11, kind: input, shape index: {}]
  %s12 = inlined_call_operand.hbm [shape: bf16[128,128], index: 12, kind: input, shape index: {}]
  %s13 = inlined_call_operand.hbm [shape: f32[64,128], index: 13, kind: output, shape index: {}]
  %s14 = sld [smem:[#allocation0]]
  $region137: #{tpu_custom_call.1} parent=0
    _
  %s16 = ssub.s32 1, %s14
  %s17 = scalar_select 0, %s16, %s14
  $region1: #{tpu_custom_call.1} parent=0
    #allocation7 [shape = 'u8[32768]{0}', space=vmem, size = 0x8000, scoped, tag = 'input window, operand 0']
    #allocation8 [shape = 's32[2]{0}', space=sflag, size = 0x8, scoped, tag = 'scoped memory for tpu_custom_call.1']
    #allocation9 [shape = 's32[2]{0}', space=sflag, size = 0x8, scoped, tag = 'scoped memory for tpu_custom_call.1']
    #allocation10 [shape = 'u8[32768]{0}', space=vmem, size = 0x8000, scoped, tag = 'input window, operand 1, single buffered']
    #allocation11 [shape = 's32[1]{0}', space=sflag, size = 0x4, scoped, tag = 'scoped memory for tpu_custom_call.1']
    #allocation12 [shape = 'u8[32768]{0}', space=vmem, size = 0x8000, scoped, tag = 'input window, operand 2, single buffered']
    #allocation13 [shape = 'u8[32768]{0}', space=vmem, size = 0x8000, scoped, tag = 'input window, operand 3, single buffered']
    #allocation14 [shape = 's32[1]{0}', space=sflag, size = 0x4, scoped, tag = 'scoped memory for tpu_custom_call.1']
    #allocation15 [shape = 'u8[32768]{0}', space=vmem, size = 0x8000, scoped, tag = 'input window, operand 4, single buffered']
    #allocation16 [shape = 'u8[65536]{0}', space=vmem, size = 0x10000, scoped, tag = 'input window, operand 7']
    #allocation17 [shape = 's32[2]{0}', space=sflag, size = 0x8, scoped, tag = 'scoped memory for tpu_custom_call.1']
    #allocation18 [shape = 'u8[65536]{0}', space=vmem, size = 0x10000, scoped, tag = 'input window, operand 8']
    #allocation19 [shape = 'u8[65536]{0}', space=vmem, size = 0x10000, scoped, tag = 'input window, operand 9']
    #allocation20 [shape = 's32[2]{0}', space=sflag, size = 0x8, scoped, tag = 'scoped memory for tpu_custom_call.1']
    #allocation21 [shape = 'u8[65536]{0}', space=vmem, size = 0x10000, scoped, tag = 'input window, operand 10']
    #allocation22 [shape = 'u8[65536]{0}', space=vmem, size = 0x10000, scoped, tag = 'input window, operand 11']
    #allocation23 [shape = 's32[2]{0}', space=sflag, size = 0x8, scoped, tag = 'scoped memory for tpu_custom_call.1']
    #allocation24 [shape = 'u8[32768]{0}', space=vmem, size = 0x8000, scoped, tag = 'input window, operand 12, single buffered']
    #allocation25 [shape = 'u8[32768]{0}', space=vmem, size = 0x8000, scoped, tag = 'output window, operand 0']
    %18 = vsyncpa [#allocation8], 0
    %s19 = scalar_lea.sflag [#allocation8], 1
    %20 = vsyncpa %s19, 0
    %21 = vsyncpa [#allocation11], 0
    %22 = vsyncpa [#allocation14], 0
    %23 = vsyncpa [#allocation17], 0
    %s24 = scalar_lea.sflag [#allocation17], 1
    %25 = vsyncpa %s24, 0
    %26 = vsyncpa [#allocation20], 0
    %s27 = scalar_lea.sflag [#allocation20], 1
    %28 = vsyncpa %s27, 0
    %29 = vsyncpa [#allocation23], 0
    %s30 = scalar_lea.sflag [#allocation23], 1
    %31 = vsyncpa %s30, 0
    %32 = vsyncpa [#allocation9], 0
    %s33 = scalar_lea.sflag [#allocation9], 1
    %34 = vsyncpa %s33, 0
    loop: start=0, step=1, limit=8
    $region2: #{tpu_custom_call.1} parent=1 // loop_pre_header
      _
    $region3: #{tpu_custom_call.1} parent=1 // loop_header
      %s36 = sphi 0, %s40
      %p37 = scmp.ge.s32.totalorder %s36, 8
      %s43 = sphi 0, %s55
      %s44 = sphi 0, %s51
      %s45 = sphi 0, %s43
      %s46 = sphi 0, %s44
      %s47 = sphi 0, %s45
      %s48 = sphi 0, %s46
      %s58 = sphi 0, %s60
      %s61 = sphi 0, %s58
      %s62 = sphi 0, %s61
      %s78 = sphi 0, %s62
      %s82 = sphi 0, %s82
      %s84 = sphi 0, %s82
      %s85 = sphi 0, %s84
      %s99 = sphi 0, %s85
      %s103 = sphi 0, %s103
      %s105 = sphi 0, %s103
      %s106 = sphi 0, %s105
      %s120 = sphi 0, %s106
      %s124 = sphi 0, %s124
      %s126 = sphi 0, %s124
      %s127 = sphi 0, %s126
      %s141 = sphi 0, %s127
      %s145 = sphi 0, %s145
      %s147 = sphi 0, %s145
      %s148 = sphi 0, %s147
      %s162 = sphi 0, %s148
      %s166 = sphi 0, %s166
      %s168 = sphi 0, %s166
      %s169 = sphi 0, %s168
      %s183 = sphi 0, %s169
      %s187 = sphi 0, %s187
      %s189 = sphi 0, %s187
      %s190 = sphi 0, %s189
      %s204 = sphi 0, %s190
      %s210 = sphi 0, %s212
      %s213 = sphi 0, %s210
      %s214 = sphi 0, %s213
      %s230 = sphi 0, %s214
      %s236 = sphi 0, %s238
      %s239 = sphi 0, %s236
      %s240 = sphi 0, %s239
      %s256 = sphi 0, %s240
      %s262 = sphi 0, %s264
      %s265 = sphi 0, %s262
      %s266 = sphi 0, %s265
      %s282 = sphi 0, %s266
      %s288 = sphi 0, %s290
      %s291 = sphi 0, %s288
      %s292 = sphi 0, %s291
      %s308 = sphi 0, %s292
      %s314 = sphi 0, %s316
      %s317 = sphi 0, %s314
      %s318 = sphi 0, %s317
      %s334 = sphi 0, %s318
      %s338 = sphi 0, %s338
      %s340 = sphi 0, %s338
      %s341 = sphi 0, %s340
      %s355 = sphi 0, %s341
      %s361 = sphi 0, %s363
      %s364 = sphi 0, %s361
      %s365 = sphi 0, %s364
      %s381 = sphi 0, %s365
    $region4: #{tpu_custom_call.1} parent=1 // loop_header_branch
      %39 = sbr.rel (%p37) target = $region8
    $region5: #{tpu_custom_call.1} parent=1 // loop_body
      %s41 = ssub.s32 %s36, 1
      %s42 = ssub.s32 %s36, 2
      %s49 = sadd.s32 1, %s44
      %p50 = scmp.ge.s32.totalorder %s49, 3
      %s51 = scalar_select %p50, 0, %s49
      %s52 = sadd.s32 1, %s43
      %s53 = scalar_select %p50, %s52, %s43
      %p54 = scmp.ge.s32.totalorder %s53, 2
      %s55 = scalar_select %p54, 0, %s53
      %s56 = ssub.s32 %s43, %s55
      %p57 = scmp.eq.s32.totalorder %s56, 0
      %s59 = sadd.s32 %s58, 1
      %s60 = scalar_select %p57, %s58, %s59
      %p63 = pneg %p57
      %p64 = scmp.eq.s32.totalorder %s36, 5
      %p65 = por %p63, %p64
      %p66 = scmp.ne.s32.totalorder %s58, %s61
      %p67 = scmp.eq.s32.totalorder %s36, 0
      %p68 = por %p66, %p67
      %p69 = scmp.ne.s32.totalorder %s58, %s61
      %p70 = scmp.eq.s32.totalorder %s41, 5
      %p71 = por %p69, %p70
      %p72 = scmp.ne.s32.totalorder %s61, %s62
      %p73 = scmp.eq.s32.totalorder %s41, 0
      %p74 = por %p72, %p73
      %p75 = scmp.ne.s32.totalorder %s61, %s62
      %p76 = scmp.eq.s32.totalorder %s42, 5
      %p77 = por %p75, %p76
      %p79 = scmp.ne.s32.totalorder %s62, %s78
      %p80 = scmp.eq.s32.totalorder %s42, 0
      %p81 = por %p79, %p80
      %s83 = sadd.s32 %s82, 1
      %p86 = scmp.eq.s32.totalorder %s36, 5
      %p87 = scmp.ne.s32.totalorder %s82, %s84
      %p88 = scmp.eq.s32.totalorder %s36, 0
      %p89 = por %p87, %p88
      %p90 = scmp.ne.s32.totalorder %s82, %s84
      %p91 = scmp.eq.s32.totalorder %s41, 5
      %p92 = por %p90, %p91
      %p93 = scmp.ne.s32.totalorder %s84, %s85
      %p94 = scmp.eq.s32.totalorder %s41, 0
      %p95 = por %p93, %p94
      %p96 = scmp.ne.s32.totalorder %s84, %s85
      %p97 = scmp.eq.s32.totalorder %s42, 5
      %p98 = por %p96, %p97
      %p100 = scmp.ne.s32.totalorder %s85, %s99
      %p101 = scmp.eq.s32.totalorder %s42, 0
      %p102 = por %p100, %p101
      %s104 = sadd.s32 %s103, 1
      %p107 = scmp.eq.s32.totalorder %s36, 5
      %p108 = scmp.ne.s32.totalorder %s103, %s105
      %p109 = scmp.eq.s32.totalorder %s36, 0
      %p110 = por %p108, %p109
      %p111 = scmp.ne.s32.totalorder %s103, %s105
      %p112 = scmp.eq.s32.totalorder %s41, 5
      %p113 = por %p111, %p112
      %p114 = scmp.ne.s32.totalorder %s105, %s106
      %p115 = scmp.eq.s32.totalorder %s41, 0
      %p116 = por %p114, %p115
      %p117 = scmp.ne.s32.totalorder %s105, %s106
      %p118 = scmp.eq.s32.totalorder %s42, 5
      %p119 = por %p117, %p118
      %p121 = scmp.ne.s32.totalorder %s106, %s120
      %p122 = scmp.eq.s32.totalorder %s42, 0
      %p123 = por %p121, %p122
      %s125 = sadd.s32 %s124, 1
      %p128 = scmp.eq.s32.totalorder %s36, 5
      %p129 = scmp.ne.s32.totalorder %s124, %s126
      %p130 = scmp.eq.s32.totalorder %s36, 0
      %p131 = por %p129, %p130
      %p132 = scmp.ne.s32.totalorder %s124, %s126
      %p133 = scmp.eq.s32.totalorder %s41, 5
      %p134 = por %p132, %p133
      %p135 = scmp.ne.s32.totalorder %s126, %s127
      %p136 = scmp.eq.s32.totalorder %s41, 0
      %p137 = por %p135, %p136
      %p138 = scmp.ne.s32.totalorder %s126, %s127
      %p139 = scmp.eq.s32.totalorder %s42, 5
      %p140 = por %p138, %p139
      %p142 = scmp.ne.s32.totalorder %s127, %s141
      %p143 = scmp.eq.s32.totalorder %s42, 0
      %p144 = por %p142, %p143
      %s146 = sadd.s32 %s145, 1
      %p149 = scmp.eq.s32.totalorder %s36, 5
      %p150 = scmp.ne.s32.totalorder %s145, %s147
      %p151 = scmp.eq.s32.totalorder %s36, 0
      %p152 = por %p150, %p151
      %p153 = scmp.ne.s32.totalorder %s145, %s147
      %p154 = scmp.eq.s32.totalorder %s41, 5
      %p155 = por %p153, %p154
      %p156 = scmp.ne.s32.totalorder %s147, %s148
      %p157 = scmp.eq.s32.totalorder %s41, 0
      %p158 = por %p156, %p157
      %p159 = scmp.ne.s32.totalorder %s147, %s148
      %p160 = scmp.eq.s32.totalorder %s42, 5
      %p161 = por %p159, %p160
      %p163 = scmp.ne.s32.totalorder %s148, %s162
      %p164 = scmp.eq.s32.totalorder %s42, 0
      %p165 = por %p163, %p164
      %s167 = sadd.s32 %s166, 1
      %p170 = scmp.eq.s32.totalorder %s36, 5
      %p171 = scmp.ne.s32.totalorder %s166, %s168
      %p172 = scmp.eq.s32.totalorder %s36, 0
      %p173 = por %p171, %p172
      %p174 = scmp.ne.s32.totalorder %s166, %s168
      %p175 = scmp.eq.s32.totalorder %s41, 5
      %p176 = por %p174, %p175
      %p177 = scmp.ne.s32.totalorder %s168, %s169
      %p178 = scmp.eq.s32.totalorder %s41, 0
      %p179 = por %p177, %p178
      %p180 = scmp.ne.s32.totalorder %s168, %s169
      %p181 = scmp.eq.s32.totalorder %s42, 5
      %p182 = por %p180, %p181
      %p184 = scmp.ne.s32.totalorder %s169, %s183
      %p185 = scmp.eq.s32.totalorder %s42, 0
      %p186 = por %p184, %p185
      %s188 = sadd.s32 %s187, 1
      %p191 = scmp.eq.s32.totalorder %s36, 5
      %p192 = scmp.ne.s32.totalorder %s187, %s189
      %p193 = scmp.eq.s32.totalorder %s36, 0
      %p194 = por %p192, %p193
      %p195 = scmp.ne.s32.totalorder %s187, %s189
      %p196 = scmp.eq.s32.totalorder %s41, 5
      %p197 = por %p195, %p196
      %p198 = scmp.ne.s32.totalorder %s189, %s190
      %p199 = scmp.eq.s32.totalorder %s41, 0
      %p200 = por %p198, %p199
      %p201 = scmp.ne.s32.totalorder %s189, %s190
      %p202 = scmp.eq.s32.totalorder %s42, 5
      %p203 = por %p201, %p202
      %p205 = scmp.ne.s32.totalorder %s190, %s204
      %p206 = scmp.eq.s32.totalorder %s42, 0
      %p207 = por %p205, %p206
      %s208 = ssub.s32 %s44, %s51
      %p209 = scmp.eq.s32.totalorder %s208, 0
      %s211 = sadd.s32 %s210, 1
      %s212 = scalar_select %p209, %s210, %s211
      %p215 = pneg %p209
      %p216 = scmp.eq.s32.totalorder %s36, 5
      %p217 = por %p215, %p216
      %p218 = scmp.ne.s32.totalorder %s210, %s213
      %p219 = scmp.eq.s32.totalorder %s36, 0
      %p220 = por %p218, %p219
      %p221 = scmp.ne.s32.totalorder %s210, %s213
      %p222 = scmp.eq.s32.totalorder %s41, 5
      %p223 = por %p221, %p222
      %p224 = scmp.ne.s32.totalorder %s213, %s214
      %p225 = scmp.eq.s32.totalorder %s41, 0
      %p226 = por %p224, %p225
      %p227 = scmp.ne.s32.totalorder %s213, %s214
      %p228 = scmp.eq.s32.totalorder %s42, 5
      %p229 = por %p227, %p228
      %p231 = scmp.ne.s32.totalorder %s214, %s230
      %p232 = scmp.eq.s32.totalorder %s42, 0
      %p233 = por %p231, %p232
      %s234 = ssub.s32 %s44, %s51
      %p235 = scmp.eq.s32.totalorder %s234, 0
      %s237 = sadd.s32 %s236, 1
      %s238 = scalar_select %p235, %s236, %s237
      %p241 = pneg %p235
      %p242 = scmp.eq.s32.totalorder %s36, 5
      %p243 = por %p241, %p242
      %p244 = scmp.ne.s32.totalorder %s236, %s239
      %p245 = scmp.eq.s32.totalorder %s36, 0
      %p246 = por %p244, %p245
      %p247 = scmp.ne.s32.totalorder %s236, %s239
      %p248 = scmp.eq.s32.totalorder %s41, 5
      %p249 = por %p247, %p248
      %p250 = scmp.ne.s32.totalorder %s239, %s240
      %p251 = scmp.eq.s32.totalorder %s41, 0
      %p252 = por %p250, %p251
      %p253 = scmp.ne.s32.totalorder %s239, %s240
      %p254 = scmp.eq.s32.totalorder %s42, 5
      %p255 = por %p253, %p254
      %p257 = scmp.ne.s32.totalorder %s240, %s256
      %p258 = scmp.eq.s32.totalorder %s42, 0
      %p259 = por %p257, %p258
      %s260 = ssub.s32 %s44, %s51
      %p261 = scmp.eq.s32.totalorder %s260, 0
      %s263 = sadd.s32 %s262, 1
      %s264 = scalar_select %p261, %s262, %s263
      %p267 = pneg %p261
      %p268 = scmp.eq.s32.totalorder %s36, 5
      %p269 = por %p267, %p268
      %p270 = scmp.ne.s32.totalorder %s262, %s265
      %p271 = scmp.eq.s32.totalorder %s36, 0
      %p272 = por %p270, %p271
      %p273 = scmp.ne.s32.totalorder %s262, %s265
      %p274 = scmp.eq.s32.totalorder %s41, 5
      %p275 = por %p273, %p274
      %p276 = scmp.ne.s32.totalorder %s265, %s266
      %p277 = scmp.eq.s32.totalorder %s41, 0
      %p278 = por %p276, %p277
      %p279 = scmp.ne.s32.totalorder %s265, %s266
      %p280 = scmp.eq.s32.totalorder %s42, 5
      %p281 = por %p279, %p280
      %p283 = scmp.ne.s32.totalorder %s266, %s282
      %p284 = scmp.eq.s32.totalorder %s42, 0
      %p285 = por %p283, %p284
      %s286 = ssub.s32 %s44, %s51
      %p287 = scmp.eq.s32.totalorder %s286, 0
      %s289 = sadd.s32 %s288, 1
      %s290 = scalar_select %p287, %s288, %s289
      %p293 = pneg %p287
      %p294 = scmp.eq.s32.totalorder %s36, 5
      %p295 = por %p293, %p294
      %p296 = scmp.ne.s32.totalorder %s288, %s291
      %p297 = scmp.eq.s32.totalorder %s36, 0
      %p298 = por %p296, %p297
      %p299 = scmp.ne.s32.totalorder %s288, %s291
      %p300 = scmp.eq.s32.totalorder %s41, 5
      %p301 = por %p299, %p300
      %p302 = scmp.ne.s32.totalorder %s291, %s292
      %p303 = scmp.eq.s32.totalorder %s41, 0
      %p304 = por %p302, %p303
      %p305 = scmp.ne.s32.totalorder %s291, %s292
      %p306 = scmp.eq.s32.totalorder %s42, 5
      %p307 = por %p305, %p306
      %p309 = scmp.ne.s32.totalorder %s292, %s308
      %p310 = scmp.eq.s32.totalorder %s42, 0
      %p311 = por %p309, %p310
      %s312 = ssub.s32 %s44, %s51
      %p313 = scmp.eq.s32.totalorder %s312, 0
      %s315 = sadd.s32 %s314, 1
      %s316 = scalar_select %p313, %s314, %s315
      %p319 = pneg %p313
      %p320 = scmp.eq.s32.totalorder %s36, 5
      %p321 = por %p319, %p320
      %p322 = scmp.ne.s32.totalorder %s314, %s317
      %p323 = scmp.eq.s32.totalorder %s36, 0
      %p324 = por %p322, %p323
      %p325 = scmp.ne.s32.totalorder %s314, %s317
      %p326 = scmp.eq.s32.totalorder %s41, 5
      %p327 = por %p325, %p326
      %p328 = scmp.ne.s32.totalorder %s317, %s318
      %p329 = scmp.eq.s32.totalorder %s41, 0
      %p330 = por %p328, %p329
      %p331 = scmp.ne.s32.totalorder %s317, %s318
      %p332 = scmp.eq.s32.totalorder %s42, 5
      %p333 = por %p331, %p332
      %p335 = scmp.ne.s32.totalorder %s318, %s334
      %p336 = scmp.eq.s32.totalorder %s42, 0
      %p337 = por %p335, %p336
      %s339 = sadd.s32 %s338, 1
      %p342 = scmp.eq.s32.totalorder %s36, 5
      %p343 = scmp.ne.s32.totalorder %s338, %s340
      %p344 = scmp.eq.s32.totalorder %s36, 0
      %p345 = por %p343, %p344
      %p346 = scmp.ne.s32.totalorder %s338, %s340
      %p347 = scmp.eq.s32.totalorder %s41, 5
      %p348 = por %p346, %p347
      %p349 = scmp.ne.s32.totalorder %s340, %s341
      %p350 = scmp.eq.s32.totalorder %s41, 0
      %p351 = por %p349, %p350
      %p352 = scmp.ne.s32.totalorder %s340, %s341
      %p353 = scmp.eq.s32.totalorder %s42, 5
      %p354 = por %p352, %p353
      %p356 = scmp.ne.s32.totalorder %s341, %s355
      %p357 = scmp.eq.s32.totalorder %s42, 0
      %p358 = por %p356, %p357
      %s359 = ssub.s32 %s43, %s55
      %p360 = scmp.eq.s32.totalorder %s359, 0
      %s362 = sadd.s32 %s361, 1
      %s363 = scalar_select %p360, %s361, %s362
      %p366 = pneg %p360
      %p367 = scmp.eq.s32.totalorder %s36, 5
      %p368 = por %p366, %p367
      %p369 = scmp.ne.s32.totalorder %s361, %s364
      %p370 = scmp.eq.s32.totalorder %s36, 0
      %p371 = por %p369, %p370
      %p372 = scmp.ne.s32.totalorder %s361, %s364
      %p373 = scmp.eq.s32.totalorder %s41, 5
      %p374 = por %p372, %p373
      %p375 = scmp.ne.s32.totalorder %s364, %s365
      %p376 = scmp.eq.s32.totalorder %s41, 0
      %p377 = por %p375, %p376
      %p378 = scmp.ne.s32.totalorder %s364, %s365
      %p379 = scmp.eq.s32.totalorder %s42, 5
      %p380 = por %p378, %p379
      %p382 = scmp.ne.s32.totalorder %s365, %s381
      %p383 = scmp.eq.s32.totalorder %s42, 0
      %p384 = por %p382, %p383
      %p385 = scmp.le.s32.totalorder 1, %s36
      %p386 = scmp.lt.s32.totalorder %s36, 7
      %p387 = pnand %p385, %p386
      %p388 = pneg %p387
      // Predicated region
      $region9: #{tpu_custom_call.1} parent=5 // pred_check
        _
      $region10: #{tpu_custom_call.1} parent=5 // pred_check_branch
        %390 = sbr.rel (%p387) target = $region12
      $region11: #{tpu_custom_call.1} parent=5 // pred_region
        %s391 = ssub.s32 %s36, 1
        // Predicated region
        $region13: #{tpu_custom_call.1} parent=11 // pred_check
          %p392 = pneg %p95
        $region14: #{tpu_custom_call.1} parent=11 // pred_check_branch
          %394 = sbr.rel (%p392) target = $region16
        $region15: #{tpu_custom_call.1} parent=11 // pred_region
          %s396 = ssub.s32 1024, 1024
          %397 = vsyncadd [#allocation11], %s396
          %s398 = sshll.u32 [#allocation10], 4
          %s399 = int_to_ptr.vmem [resolvable:$true] %s398
          %404 = dma.hbm_to_vmem [thread:$0]  %s1, 1024, %s399, [#allocation11], 64, 64, 4
        $region16: #{tpu_custom_call.1} parent=11 // pred_fallthru
          _
        // Predicated region
        $region17: #{tpu_custom_call.1} parent=11 // pred_check
          %p405 = pneg %p116
        $region18: #{tpu_custom_call.1} parent=11 // pred_check_branch
          %407 = sbr.rel (%p405) target = $region20
        $region19: #{tpu_custom_call.1} parent=11 // pred_region
          %s409 = ssub.s32 1024, 1024
          %410 = vsyncadd [#allocation11], %s409
          %s411 = sshll.u32 [#allocation12], 4
          %s412 = int_to_ptr.vmem [resolvable:$true] %s411
          %417 = dma.hbm_to_vmem [thread:$0]  %s2, 1024, %s412, [#allocation11], 64, 64, 4
        $region20: #{tpu_custom_call.1} parent=11 // pred_fallthru
          _
        // Predicated region
        $region21: #{tpu_custom_call.1} parent=11 // pred_check
          %p418 = pneg %p137
        $region22: #{tpu_custom_call.1} parent=11 // pred_check_branch
          %420 = sbr.rel (%p418) target = $region24
        $region23: #{tpu_custom_call.1} parent=11 // pred_region
          %s422 = ssub.s32 1024, 1024
          %423 = vsyncadd [#allocation14], %s422
          %s424 = sshll.u32 [#allocation13], 4
          %s425 = int_to_ptr.vmem [resolvable:$true] %s424
          %430 = dma.hbm_to_vmem [thread:$0]  %s3, 1024, %s425, [#allocation14], 64, 64, 4
        $region24: #{tpu_custom_call.1} parent=11 // pred_fallthru
          _
        // Predicated region
        $region25: #{tpu_custom_call.1} parent=11 // pred_check
          %p431 = pneg %p158
        $region26: #{tpu_custom_call.1} parent=11 // pred_check_branch
          %433 = sbr.rel (%p431) target = $region28
        $region27: #{tpu_custom_call.1} parent=11 // pred_region
          %s435 = ssub.s32 1024, 1024
          %436 = vsyncadd [#allocation14], %s435
          %s437 = sshll.u32 [#allocation15], 4
          %s438 = int_to_ptr.vmem [resolvable:$true] %s437
          %443 = dma.hbm_to_vmem [thread:$0]  %s4, 1024, %s438, [#allocation14], 64, 64, 4
        $region28: #{tpu_custom_call.1} parent=11 // pred_fallthru
          _
        // Predicated region
        $region29: #{tpu_custom_call.1} parent=11 // pred_check
          %p444 = pneg %p179
        $region30: #{tpu_custom_call.1} parent=11 // pred_check_branch
          %446 = sbr.rel (%p444) target = $region32
        $region31: #{tpu_custom_call.1} parent=11 // pred_region
          _
        $region32: #{tpu_custom_call.1} parent=11 // pred_fallthru
          _
        // Predicated region
        $region33: #{tpu_custom_call.1} parent=11 // pred_check
          %p447 = pneg %p200
        $region34: #{tpu_custom_call.1} parent=11 // pred_check_branch
          %449 = sbr.rel (%p447) target = $region36
        $region35: #{tpu_custom_call.1} parent=11 // pred_region
          _
        $region36: #{tpu_custom_call.1} parent=11 // pred_fallthru
          _
        // Predicated region
        $region37: #{tpu_custom_call.1} parent=11 // pred_check
          %p450 = pneg %p351
        $region38: #{tpu_custom_call.1} parent=11 // pred_check_branch
          %452 = sbr.rel (%p450) target = $region40
        $region39: #{tpu_custom_call.1} parent=11 // pred_region
          %s454 = ssub.s32 1024, 1024
          %455 = vsyncadd [#allocation23], %s454
          %s456 = sshll.u32 [#allocation24], 4
          %s457 = int_to_ptr.vmem [resolvable:$true] %s456
          %462 = dma.hbm_to_vmem [thread:$0]  %s12, 1024, %s457, [#allocation23], 64, 64, 4
        $region40: #{tpu_custom_call.1} parent=11 // pred_fallthru
          _
      $region12: #{tpu_custom_call.1} parent=5 // pred_fallthru
        _
      %p463 = scmp.lt.s32.totalorder %s36, 6
      // Predicated region
      $region41: #{tpu_custom_call.1} parent=5 // pred_check
        %p464 = pneg %p463
      $region42: #{tpu_custom_call.1} parent=5 // pred_check_branch
        %466 = sbr.rel (%p464) target = $region44
      $region43: #{tpu_custom_call.1} parent=5 // pred_region
        // Predicated region
        $region45: #{tpu_custom_call.1} parent=43 // pred_check
          %p467 = pneg %p68
        $region46: #{tpu_custom_call.1} parent=43 // pred_check_branch
          %469 = sbr.rel (%p467) target = $region48
        $region47: #{tpu_custom_call.1} parent=43 // pred_region
          %s470 = sand.u32 %s58, 1
          %s471 = scalar_lea.sflag [#allocation8], %s470
          %s472 = sand.u32 %s58, 1
          %s473 = smul.addr %s472, 32
          %s474 = scalar_lea.vmem [#allocation7], %s473
          %s475 = smul.u32 4, %s43
          %s477 = ssub.s32 512, 512
          %478 = vsyncadd %s471, %s477
          %s479 = smul.addr %s475, 128
          %s480 = scalar_lea.hbm %s0, %s479
          %s481 = sshll.u32 %s474, 4
          %s482 = int_to_ptr.vmem [resolvable:$true] %s481
          %487 = dma.hbm_to_vmem [thread:$0]  %s480, 512, %s482, %s471, 128, 128, 8
        $region48: #{tpu_custom_call.1} parent=43 // pred_fallthru
          _
        // Predicated region
        $region49: #{tpu_custom_call.1} parent=43 // pred_check
          %p488 = pneg %p220
        $region50: #{tpu_custom_call.1} parent=43 // pred_check_branch
          %490 = sbr.rel (%p488) target = $region52
        $region51: #{tpu_custom_call.1} parent=43 // pred_region
          %s491 = sand.u32 %s36, 1
          %s492 = scalar_lea.sflag [#allocation17], %s491
          %s493 = sand.u32 %s210, 1
          %s494 = smul.addr %s493, 64
          %s495 = scalar_lea.vmem [#allocation16], %s494
          %s497 = ssub.s32 1024, 1024
          %498 = vsyncadd %s492, %s497
          %s499 = smul.addr %s44, 64
          %s500 = scalar_lea.hbm %s7, %s499
          %s501 = sshll.u32 %s495, 4
          %s502 = int_to_ptr.vmem [resolvable:$true] %s501
          %507 = dma.hbm_to_vmem [thread:$0]  %s500, 1024, %s502, %s492, 192, 64, 4
        $region52: #{tpu_custom_call.1} parent=43 // pred_fallthru
          _
        // Predicated region
        $region53: #{tpu_custom_call.1} parent=43 // pred_check
          %p508 = pneg %p246
        $region54: #{tpu_custom_call.1} parent=43 // pred_check_branch
          %510 = sbr.rel (%p508) target = $region56
        $region55: #{tpu_custom_call.1} parent=43 // pred_region
          %s511 = sand.u32 %s36, 1
          %s512 = scalar_lea.sflag [#allocation17], %s511
          %s513 = sand.u32 %s236, 1
          %s514 = smul.addr %s513, 64
          %s515 = scalar_lea.vmem [#allocation18], %s514
          %s517 = ssub.s32 1024, 1024
          %518 = vsyncadd %s512, %s517
          %s519 = smul.addr %s44, 64
          %s520 = scalar_lea.hbm %s8, %s519
          %s521 = sshll.u32 %s515, 4
          %s522 = int_to_ptr.vmem [resolvable:$true] %s521
          %527 = dma.hbm_to_vmem [thread:$0]  %s520, 1024, %s522, %s512, 192, 64, 4
        $region56: #{tpu_custom_call.1} parent=43 // pred_fallthru
          _
        // Predicated region
        $region57: #{tpu_custom_call.1} parent=43 // pred_check
          %p528 = pneg %p272
        $region58: #{tpu_custom_call.1} parent=43 // pred_check_branch
          %530 = sbr.rel (%p528) target = $region60
        $region59: #{tpu_custom_call.1} parent=43 // pred_region
          %s531 = sand.u32 %s36, 1
          %s532 = scalar_lea.sflag [#allocation20], %s531
          %s533 = sand.u32 %s262, 1
          %s534 = smul.addr %s533, 64
          %s535 = scalar_lea.vmem [#allocation19], %s534
          %s536 = smul.u32 16, %s44
          %s538 = ssub.s32 1024, 1024
          %539 = vsyncadd %s532, %s538
          %s540 = smul.addr %s536, 64
          %s541 = scalar_lea.hbm %s9, %s540
          %s542 = sshll.u32 %s535, 4
          %s543 = int_to_ptr.vmem [resolvable:$true] %s542
          %548 = dma.hbm_to_vmem [thread:$0]  %s541, 1024, %s543, %s532, 64, 64, 4
        $region60: #{tpu_custom_call.1} parent=43 // pred_fallthru
          _
        // Predicated region
        $region61: #{tpu_custom_call.1} parent=43 // pred_check
          %p549 = pneg %p298
        $region62: #{tpu_custom_call.1} parent=43 // pred_check_branch
          %551 = sbr.rel (%p549) target = $region64
        $region63: #{tpu_custom_call.1} parent=43 // pred_region
          %s552 = sand.u32 %s36, 1
          %s553 = scalar_lea.sflag [#allocation20], %s552
          %s554 = sand.u32 %s288, 1
          %s555 = smul.addr %s554, 64
          %s556 = scalar_lea.vmem [#allocation21], %s555
          %s558 = ssub.s32 1024, 1024
          %559 = vsyncadd %s553, %s558
          %s560 = smul.addr %s44, 64
          %s561 = scalar_lea.hbm %s10, %s560
          %s562 = sshll.u32 %s556, 4
          %s563 = int_to_ptr.vmem [resolvable:$true] %s562
          %568 = dma.hbm_to_vmem [thread:$0]  %s561, 1024, %s563, %s553, 192, 64, 4
        $region64: #{tpu_custom_call.1} parent=43 // pred_fallthru
          _
        // Predicated region
        $region65: #{tpu_custom_call.1} parent=43 // pred_check
          %p569 = pneg %p324
        $region66: #{tpu_custom_call.1} parent=43 // pred_check_branch
          %571 = sbr.rel (%p569) target = $region68
        $region67: #{tpu_custom_call.1} parent=43 // pred_region
          %s572 = sand.u32 %s36, 1
          %s573 = scalar_lea.sflag [#allocation23], %s572
          %s574 = sand.u32 %s314, 1
          %s575 = smul.addr %s574, 64
          %s576 = scalar_lea.vmem [#allocation22], %s575
          %s577 = smul.u32 16, %s44
          %s579 = ssub.s32 1024, 1024
          %580 = vsyncadd %s573, %s579
          %s581 = smul.addr %s577, 64
          %s582 = scalar_lea.hbm %s11, %s581
          %s583 = sshll.u32 %s576, 4
          %s584 = int_to_ptr.vmem [resolvable:$true] %s583
          %589 = dma.hbm_to_vmem [thread:$0]  %s582, 1024, %s584, %s573, 64, 64, 4
        $region68: #{tpu_custom_call.1} parent=43 // pred_fallthru
          _
      $region44: #{tpu_custom_call.1} parent=5 // pred_fallthru
        _
      %p590 = scmp.le.s32.totalorder 1, %s36
      %p591 = scmp.lt.s32.totalorder %s36, 7
      %p592 = pnand %p590, %p591
      %p593 = pneg %p592
      // Predicated region
      $region69: #{tpu_custom_call.1} parent=5 // pred_check
        _
      $region70: #{tpu_custom_call.1} parent=5 // pred_check_branch
        %595 = sbr.rel (%p592) target = $region72
      $region71: #{tpu_custom_call.1} parent=5 // pred_region
        %s596 = ssub.s32 %s36, 1
        %s597 = sand.u32 %s61, 1
        %s598 = scalar_lea.sflag [#allocation8], %s597
        %s599 = sand.u32 %s61, 1
        %s600 = smul.addr %s599, 32
        %s601 = scalar_lea.vmem [#allocation7], %s600
        // Predicated region
        $region73: #{tpu_custom_call.1} parent=71 // pred_check
          %p602 = pneg %p74
        $region74: #{tpu_custom_call.1} parent=71 // pred_check_branch
          %604 = sbr.rel (%p602) target = $region76
        $region75: #{tpu_custom_call.1} parent=71 // pred_region
          %605 = dma.done %s598, 512
        $region76: #{tpu_custom_call.1} parent=71 // pred_fallthru
          _
        // Predicated region
        $region77: #{tpu_custom_call.1} parent=71 // pred_check
          %p606 = pneg %p95
        $region78: #{tpu_custom_call.1} parent=71 // pred_check_branch
          %608 = sbr.rel (%p606) target = $region80
        $region79: #{tpu_custom_call.1} parent=71 // pred_region
          %609 = dma.done [#allocation11], 1024
        $region80: #{tpu_custom_call.1} parent=71 // pred_fallthru
          _
        // Predicated region
        $region81: #{tpu_custom_call.1} parent=71 // pred_check
          %p610 = pneg %p116
        $region82: #{tpu_custom_call.1} parent=71 // pred_check_branch
          %612 = sbr.rel (%p610) target = $region84
        $region83: #{tpu_custom_call.1} parent=71 // pred_region
          %613 = dma.done [#allocation11], 1024
        $region84: #{tpu_custom_call.1} parent=71 // pred_fallthru
          _
        // Predicated region
        $region85: #{tpu_custom_call.1} parent=71 // pred_check
          %p614 = pneg %p137
        $region86: #{tpu_custom_call.1} parent=71 // pred_check_branch
          %616 = sbr.rel (%p614) target = $region88
        $region87: #{tpu_custom_call.1} parent=71 // pred_region
          %617 = dma.done [#allocation14], 1024
        $region88: #{tpu_custom_call.1} parent=71 // pred_fallthru
          _
        // Predicated region
        $region89: #{tpu_custom_call.1} parent=71 // pred_check
          %p618 = pneg %p158
        $region90: #{tpu_custom_call.1} parent=71 // pred_check_branch
          %620 = sbr.rel (%p618) target = $region92
        $region91: #{tpu_custom_call.1} parent=71 // pred_region
          %621 = dma.done [#allocation14], 1024
        $region92: #{tpu_custom_call.1} parent=71 // pred_fallthru
          _
        %s622 = sand.u32 %s41, 1
        %s623 = scalar_lea.sflag [#allocation17], %s622
        %s624 = sand.u32 %s213, 1
        %s625 = smul.addr %s624, 64
        %s626 = scalar_lea.vmem [#allocation16], %s625
        // Predicated region
        $region93: #{tpu_custom_call.1} parent=71 // pred_check
          %p627 = pneg %p226
        $region94: #{tpu_custom_call.1} parent=71 // pred_check_branch
          %629 = sbr.rel (%p627) target = $region96
        $region95: #{tpu_custom_call.1} parent=71 // pred_region
          %630 = dma.done %s623, 1024
        $region96: #{tpu_custom_call.1} parent=71 // pred_fallthru
          _
        %s631 = sand.u32 %s41, 1
        %s632 = scalar_lea.sflag [#allocation17], %s631
        %s633 = sand.u32 %s239, 1
        %s634 = smul.addr %s633, 64
        %s635 = scalar_lea.vmem [#allocation18], %s634
        // Predicated region
        $region97: #{tpu_custom_call.1} parent=71 // pred_check
          %p636 = pneg %p252
        $region98: #{tpu_custom_call.1} parent=71 // pred_check_branch
          %638 = sbr.rel (%p636) target = $region100
        $region99: #{tpu_custom_call.1} parent=71 // pred_region
          %639 = dma.done %s632, 1024
        $region100: #{tpu_custom_call.1} parent=71 // pred_fallthru
          _
        %s640 = sand.u32 %s41, 1
        %s641 = scalar_lea.sflag [#allocation20], %s640
        %s642 = sand.u32 %s265, 1
        %s643 = smul.addr %s642, 64
        %s644 = scalar_lea.vmem [#allocation19], %s643
        // Predicated region
        $region101: #{tpu_custom_call.1} parent=71 // pred_check
          %p645 = pneg %p278
        $region102: #{tpu_custom_call.1} parent=71 // pred_check_branch
          %647 = sbr.rel (%p645) target = $region104
        $region103: #{tpu_custom_call.1} parent=71 // pred_region
          %648 = dma.done %s641, 1024
        $region104: #{tpu_custom_call.1} parent=71 // pred_fallthru
          _
        %s649 = sand.u32 %s41, 1
        %s650 = scalar_lea.sflag [#allocation20], %s649
        %s651 = sand.u32 %s291, 1
        %s652 = smul.addr %s651, 64
        %s653 = scalar_lea.vmem [#allocation21], %s652
        // Predicated region
        $region105: #{tpu_custom_call.1} parent=71 // pred_check
          %p654 = pneg %p304
        $region106: #{tpu_custom_call.1} parent=71 // pred_check_branch
          %656 = sbr.rel (%p654) target = $region108
        $region107: #{tpu_custom_call.1} parent=71 // pred_region
          %657 = dma.done %s650, 1024
        $region108: #{tpu_custom_call.1} parent=71 // pred_fallthru
          _
        %s658 = sand.u32 %s41, 1
        %s659 = scalar_lea.sflag [#allocation23], %s658
        %s660 = sand.u32 %s317, 1
        %s661 = smul.addr %s660, 64
        %s662 = scalar_lea.vmem [#allocation22], %s661
        // Predicated region
        $region109: #{tpu_custom_call.1} parent=71 // pred_check
          %p663 = pneg %p330
        $region110: #{tpu_custom_call.1} parent=71 // pred_check_branch
          %665 = sbr.rel (%p663) target = $region112
        $region111: #{tpu_custom_call.1} parent=71 // pred_region
          %666 = dma.done %s659, 1024
        $region112: #{tpu_custom_call.1} parent=71 // pred_fallthru
          _
        // Predicated region
        $region113: #{tpu_custom_call.1} parent=71 // pred_check
          %p667 = pneg %p351
        $region114: #{tpu_custom_call.1} parent=71 // pred_check_branch
          %669 = sbr.rel (%p667) target = $region116
        $region115: #{tpu_custom_call.1} parent=71 // pred_region
          %670 = dma.done [#allocation23], 1024
        $region116: #{tpu_custom_call.1} parent=71 // pred_fallthru
          _
        %s671 = sand.u32 %s61, 1
        %s672 = scalar_lea.sflag [#allocation8], %s671
        %s673 = sand.u32 %s61, 1
        %s674 = smul.addr %s673, 32
        %s675 = scalar_lea.vmem [#allocation7], %s674
        %p676 = pneg %p74
        %p677 = pneg %p71
        %p678 = pneg %p95
        %p679 = pneg %p92
        %p680 = pneg %p116
        %p681 = pneg %p113
        %p682 = pneg %p137
        %p683 = pneg %p134
        %p684 = pneg %p158
        %p685 = pneg %p155
        %p686 = pneg %p179
        %p687 = pneg %p176
        %p688 = pneg %p200
        %p689 = pneg %p197
        %s690 = sand.u32 %s41, 1
        %s691 = scalar_lea.sflag [#allocation17], %s690
        %s692 = sand.u32 %s213, 1
        %s693 = smul.addr %s692, 64
        %s694 = scalar_lea.vmem [#allocation16], %s693
        %p695 = pneg %p226
        %p696 = pneg %p223
        %s697 = sand.u32 %s41, 1
        %s698 = scalar_lea.sflag [#allocation17], %s697
        %s699 = sand.u32 %s239, 1
        %s700 = smul.addr %s699, 64
        %s701 = scalar_lea.vmem [#allocation18], %s700
        %p702 = pneg %p252
        %p703 = pneg %p249
        %s704 = sand.u32 %s41, 1
        %s705 = scalar_lea.sflag [#allocation20], %s704
        %s706 = sand.u32 %s265, 1
        %s707 = smul.addr %s706, 64
        %s708 = scalar_lea.vmem [#allocation19], %s707
        %p709 = pneg %p278
        %p710 = pneg %p275
        %s711 = sand.u32 %s41, 1
        %s712 = scalar_lea.sflag [#allocation20], %s711
        %s713 = sand.u32 %s291, 1
        %s714 = smul.addr %s713, 64
        %s715 = scalar_lea.vmem [#allocation21], %s714
        %p716 = pneg %p304
        %p717 = pneg %p301
        %s718 = sand.u32 %s41, 1
        %s719 = scalar_lea.sflag [#allocation23], %s718
        %s720 = sand.u32 %s317, 1
        %s721 = smul.addr %s720, 64
        %s722 = scalar_lea.vmem [#allocation22], %s721
        %p723 = pneg %p330
        %p724 = pneg %p327
        %p725 = pneg %p351
        %p726 = pneg %p348
        %p727 = pneg %p377
        %p728 = pneg %p374
        %s729 = sand.u32 %s364, 1
        %s730 = scalar_lea.sflag [#allocation9], %s729
        %s731 = sand.u32 %s364, 1
        %s732 = smul.addr %s731, 32
        %s733 = scalar_lea.vmem [#allocation25], %s732
        %s734 = smul.u32 4, %s45
        %s735 = smul.u32 16, %s46
        %s736 = smul.u32 16, %s46
        %s737 = smul.u32 4, %s45
        %p739 = scmp.eq.s32.totalorder %s46, 0
        // Predicated region
        $region117: #{tpu_custom_call.1} parent=71 // pred_check
          %p740 = pneg %p739
        $region118: #{tpu_custom_call.1} parent=71 // pred_check_branch
          %742 = sbr.rel (%p740) target = $region120
        $region119: #{tpu_custom_call.1} parent=71 // pred_region
          %v743 = vld [vmem:[%s601] sm:$0xff]
          %v744 = vld [vmem:[%s601 + $0x8] sm:$0xff]
          %v745 = vld [vmem:[%s601 + $0x10] sm:$0xff]
          %v746 = vld [vmem:[%s601 + $0x18] sm:$0xff]
          %v747 = vpack.c.bf16 %v744, %v743
          %v748 = vpack.c.bf16 %v746, %v745
          %v749 = vld [vmem:[#allocation10] sm:$0xf]
          %v750 = vld [vmem:[#allocation10 + $0x4] sm:$0xf]
          %v751 = vld [vmem:[#allocation10 + $0x8] sm:$0xf]
          %v752 = vld [vmem:[#allocation10 + $0xc] sm:$0xf]
          %v753 = vld [vmem:[#allocation10 + $0x10] sm:$0xf]
          %v754 = vld [vmem:[#allocation10 + $0x14] sm:$0xf]
          %v755 = vld [vmem:[#allocation10 + $0x18] sm:$0xf]
          %v756 = vld [vmem:[#allocation10 + $0x1c] sm:$0xf]
          %v757 = vld [vmem:[#allocation10 + $0x20] sm:$0xf]
          %v758 = vld [vmem:[#allocation10 + $0x24] sm:$0xf]
          %v759 = vld [vmem:[#allocation10 + $0x28] sm:$0xf]
          %v760 = vld [vmem:[#allocation10 + $0x2c] sm:$0xf]
          %v761 = vld [vmem:[#allocation10 + $0x30] sm:$0xf]
          %v762 = vld [vmem:[#allocation10 + $0x34] sm:$0xf]
          %v763 = vld [vmem:[#allocation10 + $0x38] sm:$0xf]
          %v764 = vld [vmem:[#allocation10 + $0x3c] sm:$0xf]
          %v781 = vunpack.c.l.b16 %v749
          %v782 = vunpack.c.l.b16 %v750
          %v783 = vunpack.c.l.b16 %v751
          %v784 = vunpack.c.l.b16 %v752
          %v785 = vunpack.c.l.b16 %v753
          %v786 = vunpack.c.l.b16 %v754
          %v787 = vunpack.c.l.b16 %v755
          %v788 = vunpack.c.l.b16 %v756
          %v789 = vunpack.c.l.b16 %v757
          %v790 = vunpack.c.l.b16 %v758
          %v791 = vunpack.c.l.b16 %v759
          %v792 = vunpack.c.l.b16 %v760
          %v793 = vunpack.c.l.b16 %v761
          %v794 = vunpack.c.l.b16 %v762
          %v795 = vunpack.c.l.b16 %v763
          %v796 = vunpack.c.l.b16 %v764
          %v797 = vpack.c.b16 %v782, %v781
          %v798 = vpack.c.b16 %v784, %v783
          %v799 = vpack.c.b16 %v786, %v785
          %v800 = vpack.c.b16 %v788, %v787
          %v801 = vpack.c.b16 %v790, %v789
          %v802 = vpack.c.b16 %v792, %v791
          %v803 = vpack.c.b16 %v794, %v793
          %v804 = vpack.c.b16 %v796, %v795
          %813 = vmatprep.subr.bf16.mxu0 0
          %814 = vmatpush1.bf16.msra.mxu0 %v797
          %815 = vmatprep.subr.bf16.mxu0 0
          %816 = vmatpush1.bf16.msra.mxu0 %v798
          %817 = vmatprep.subr.bf16.mxu0 0
          %818 = vmatpush1.bf16.msra.mxu0 %v799
          %819 = vmatprep.subr.bf16.mxu0 0
          %820 = vmatpush1.bf16.msra.mxu0 %v800
          %821 = vmatprep.subr.bf16.mxu0 0
          %822 = vmatpush1.bf16.msra.mxu0 %v801
          %823 = vmatprep.subr.bf16.mxu0 0
          %824 = vmatpush1.bf16.msra.mxu0 %v802
          %825 = vmatprep.subr.bf16.mxu0 0
          %826 = vmatpush1.bf16.msra.mxu0 %v803
          %827 = vmatprep.subr.bf16.mxu0 0
          %828 = vmatpush1.bf16.msra.mxu0 %v804
          %829 = vmatprep.subr.bf16.mxu0 0
          %830 = vmatpush1.bf16.msra.mxu0 0
          %831 = vmatprep.subr.bf16.mxu0 0
          %832 = vmatpush1.bf16.msra.mxu0 0
          %833 = vmatprep.subr.bf16.mxu0 0
          %834 = vmatpush1.bf16.msra.mxu0 0
          %835 = vmatprep.subr.bf16.mxu0 0
          %836 = vmatpush1.bf16.msra.mxu0 0
          %837 = vmatprep.subr.bf16.mxu0 0
          %838 = vmatpush1.bf16.msra.mxu0 0
          %839 = vmatprep.subr.bf16.mxu0 0
          %840 = vmatpush1.bf16.msra.mxu0 0
          %841 = vmatprep.subr.bf16.mxu0 0
          %842 = vmatpush1.bf16.msra.mxu0 0
          %843 = vmatprep.subr.bf16.mxu0 0
          %844 = vmatpush1.bf16.msra.mxu0 0
          %845 = vmatprep.mubr.bf16.mxu0 0
          %846 = vmatmul.mubr.bf16.gmra.mrb[0].mxu0 %v747
          %v847 = vpop.f32.mrb[0].mxu0
          %v848 = vadd.f32 0.0, %v847
          %v849 = vpop.f32.mrb[0].mxu0
          %v850 = vpop.f32.mrb[0].mxu0
          %v851 = vadd.f32 0.0, %v850
          %v852 = vpop.f32.mrb[0].mxu0
          %853 = vmatprep.mubr.bf16.mxu0 0
          %854 = vmatmul.mubr.bf16.gmra.mrb[0].mxu0 %v748
          %v855 = vpop.f32.mrb[0].mxu0
          %v856 = vadd.f32 0.0, %v855
          %v857 = vpop.f32.mrb[0].mxu0
          %v858 = vpop.f32.mrb[0].mxu0
          %v859 = vadd.f32 0.0, %v858
          %v860 = vpop.f32.mrb[0].mxu0
          %861 = vdwg.mxu0
          %v862 = vld [vmem:[#allocation12] sm:$0xf]
          %v863 = vld [vmem:[#allocation12 + $0x4] sm:$0xf]
          %v864 = vld [vmem:[#allocation12 + $0x8] sm:$0xf]
          %v865 = vld [vmem:[#allocation12 + $0xc] sm:$0xf]
          %v866 = vld [vmem:[#allocation12 + $0x10] sm:$0xf]
          %v867 = vld [vmem:[#allocation12 + $0x14] sm:$0xf]
          %v868 = vld [vmem:[#allocation12 + $0x18] sm:$0xf]
          %v869 = vld [vmem:[#allocation12 + $0x1c] sm:$0xf]
          %v870 = vld [vmem:[#allocation12 + $0x20] sm:$0xf]
          %v871 = vld [vmem:[#allocation12 + $0x24] sm:$0xf]
          %v872 = vld [vmem:[#allocation12 + $0x28] sm:$0xf]
          %v873 = vld [vmem:[#allocation12 + $0x2c] sm:$0xf]
          %v874 = vld [vmem:[#allocation12 + $0x30] sm:$0xf]
          %v875 = vld [vmem:[#allocation12 + $0x34] sm:$0xf]
          %v876 = vld [vmem:[#allocation12 + $0x38] sm:$0xf]
          %v877 = vld [vmem:[#allocation12 + $0x3c] sm:$0xf]
          %v894 = vunpack.c.l.b16 %v862
          %v895 = vunpack.c.l.b16 %v863
          %v896 = vunpack.c.l.b16 %v864
          %v897 = vunpack.c.l.b16 %v865
          %v898 = vunpack.c.l.b16 %v866
          %v899 = vunpack.c.l.b16 %v867
          %v900 = vunpack.c.l.b16 %v868
          %v901 = vunpack.c.l.b16 %v869
          %v902 = vunpack.c.l.b16 %v870
          %v903 = vunpack.c.l.b16 %v871
          %v904 = vunpack.c.l.b16 %v872
          %v905 = vunpack.c.l.b16 %v873
          %v906 = vunpack.c.l.b16 %v874
          %v907 = vunpack.c.l.b16 %v875
          %v908 = vunpack.c.l.b16 %v876
          %v909 = vunpack.c.l.b16 %v877
          %v910 = vpack.c.b16 %v895, %v894
          %v911 = vpack.c.b16 %v897, %v896
          %v912 = vpack.c.b16 %v899, %v898
          %v913 = vpack.c.b16 %v901, %v900
          %v914 = vpack.c.b16 %v903, %v902
          %v915 = vpack.c.b16 %v905, %v904
          %v916 = vpack.c.b16 %v907, %v906
          %v917 = vpack.c.b16 %v909, %v908
          %926 = vmatprep.subr.bf16.mxu0 0
          %927 = vmatpush1.bf16.msra.mxu0 %v910
          %928 = vmatprep.subr.bf16.mxu0 0
          %929 = vmatpush1.bf16.msra.mxu0 %v911
          %930 = vmatprep.subr.bf16.mxu0 0
          %931 = vmatpush1.bf16.msra.mxu0 %v912
          %932 = vmatprep.subr.bf16.mxu0 0
          %933 = vmatpush1.bf16.msra.mxu0 %v913
          %934 = vmatprep.subr.bf16.mxu0 0
          %935 = vmatpush1.bf16.msra.mxu0 %v914
          %936 = vmatprep.subr.bf16.mxu0 0
          %937 = vmatpush1.bf16.msra.mxu0 %v915
          %938 = vmatprep.subr.bf16.mxu0 0
          %939 = vmatpush1.bf16.msra.mxu0 %v916
          %940 = vmatprep.subr.bf16.mxu0 0
          %941 = vmatpush1.bf16.msra.mxu0 %v917
          %942 = vmatprep.subr.bf16.mxu0 0
          %943 = vmatpush1.bf16.msra.mxu0 0
          %944 = vmatprep.subr.bf16.mxu0 0
          %945 = vmatpush1.bf16.msra.mxu0 0
          %946 = vmatprep.subr.bf16.mxu0 0
          %947 = vmatpush1.bf16.msra.mxu0 0
          %948 = vmatprep.subr.bf16.mxu0 0
          %949 = vmatpush1.bf16.msra.mxu0 0
          %950 = vmatprep.subr.bf16.mxu0 0
          %951 = vmatpush1.bf16.msra.mxu0 0
          %952 = vmatprep.subr.bf16.mxu0 0
          %953 = vmatpush1.bf16.msra.mxu0 0
          %954 = vmatprep.subr.bf16.mxu0 0
          %955 = vmatpush1.bf16.msra.mxu0 0
          %956 = vmatprep.subr.bf16.mxu0 0
          %957 = vmatpush1.bf16.msra.mxu0 0
          %958 = vmatprep.mubr.bf16.mxu0 0
          %959 = vmatmul.mubr.bf16.gmra.mrb[0].mxu0 %v747
          %v960 = vpop.f32.mrb[0].mxu0
          %v961 = vadd.f32 0.0, %v960
          %v962 = vpop.f32.mrb[0].mxu0
          %v963 = vpop.f32.mrb[0].mxu0
          %v964 = vadd.f32 0.0, %v963
          %v965 = vpop.f32.mrb[0].mxu0
          %966 = vmatprep.mubr.bf16.mxu0 0
          %967 = vmatmul.mubr.bf16.gmra.mrb[0].mxu0 %v748
          %v968 = vpop.f32.mrb[0].mxu0
          %v969 = vadd.f32 0.0, %v968
          %v970 = vpop.f32.mrb[0].mxu0
          %v971 = vpop.f32.mrb[0].mxu0
          %v972 = vadd.f32 0.0, %v971
          %v973 = vpop.f32.mrb[0].mxu0
          %974 = vdwg.mxu0
          %v975 = vld [vmem:[#allocation13] sm:$0xf]
          %v976 = vld [vmem:[#allocation13 + $0x4] sm:$0xf]
          %v977 = vld [vmem:[#allocation13 + $0x8] sm:$0xf]
          %v978 = vld [vmem:[#allocation13 + $0xc] sm:$0xf]
          %v979 = vld [vmem:[#allocation13 + $0x10] sm:$0xf]
          %v980 = vld [vmem:[#allocation13 + $0x14] sm:$0xf]
          %v981 = vld [vmem:[#allocation13 + $0x18] sm:$0xf]
          %v982 = vld [vmem:[#allocation13 + $0x1c] sm:$0xf]
          %v983 = vld [vmem:[#allocation13 + $0x20] sm:$0xf]
          %v984 = vld [vmem:[#allocation13 + $0x24] sm:$0xf]
          %v985 = vld [vmem:[#allocation13 + $0x28] sm:$0xf]
          %v986 = vld [vmem:[#allocation13 + $0x2c] sm:$0xf]
          %v987 = vld [vmem:[#allocation13 + $0x30] sm:$0xf]
          %v988 = vld [vmem:[#allocation13 + $0x34] sm:$0xf]
          %v989 = vld [vmem:[#allocation13 + $0x38] sm:$0xf]
          %v990 = vld [vmem:[#allocation13 + $0x3c] sm:$0xf]
          %v1007 = vunpack.c.l.b16 %v975
          %v1008 = vunpack.c.l.b16 %v976
          %v1009 = vunpack.c.l.b16 %v977
          %v1010 = vunpack.c.l.b16 %v978
          %v1011 = vunpack.c.l.b16 %v979
          %v1012 = vunpack.c.l.b16 %v980
          %v1013 = vunpack.c.l.b16 %v981
          %v1014 = vunpack.c.l.b16 %v982
          %v1015 = vunpack.c.l.b16 %v983
          %v1016 = vunpack.c.l.b16 %v984
          %v1017 = vunpack.c.l.b16 %v985
          %v1018 = vunpack.c.l.b16 %v986
          %v1019 = vunpack.c.l.b16 %v987
          %v1020 = vunpack.c.l.b16 %v988
          %v1021 = vunpack.c.l.b16 %v989
          %v1022 = vunpack.c.l.b16 %v990
          %v1023 = vpack.c.b16 %v1008, %v1007
          %v1024 = vpack.c.b16 %v1010, %v1009
          %v1025 = vpack.c.b16 %v1012, %v1011
          %v1026 = vpack.c.b16 %v1014, %v1013
          %v1027 = vpack.c.b16 %v1016, %v1015
          %v1028 = vpack.c.b16 %v1018, %v1017
          %v1029 = vpack.c.b16 %v1020, %v1019
          %v1030 = vpack.c.b16 %v1022, %v1021
          %1039 = vmatprep.subr.bf16.mxu0 0
          %1040 = vmatpush1.bf16.msra.mxu0 %v1023
          %1041 = vmatprep.subr.bf16.mxu0 0
          %1042 = vmatpush1.bf16.msra.mxu0 %v1024
          %1043 = vmatprep.subr.bf16.mxu0 0
          %1044 = vmatpush1.bf16.msra.mxu0 %v1025
          %1045 = vmatprep.subr.bf16.mxu0 0
          %1046 = vmatpush1.bf16.msra.mxu0 %v1026
          %1047 = vmatprep.subr.bf16.mxu0 0
          %1048 = vmatpush1.bf16.msra.mxu0 %v1027
          %1049 = vmatprep.subr.bf16.mxu0 0
          %1050 = vmatpush1.bf16.msra.mxu0 %v1028
          %1051 = vmatprep.subr.bf16.mxu0 0
          %1052 = vmatpush1.bf16.msra.mxu0 %v1029
          %1053 = vmatprep.subr.bf16.mxu0 0
          %1054 = vmatpush1.bf16.msra.mxu0 %v1030
          %1055 = vmatprep.subr.bf16.mxu0 0
          %1056 = vmatpush1.bf16.msra.mxu0 0
          %1057 = vmatprep.subr.bf16.mxu0 0
          %1058 = vmatpush1.bf16.msra.mxu0 0
          %1059 = vmatprep.subr.bf16.mxu0 0
          %1060 = vmatpush1.bf16.msra.mxu0 0
          %1061 = vmatprep.subr.bf16.mxu0 0
          %1062 = vmatpush1.bf16.msra.mxu0 0
          %1063 = vmatprep.subr.bf16.mxu0 0
          %1064 = vmatpush1.bf16.msra.mxu0 0
          %1065 = vmatprep.subr.bf16.mxu0 0
          %1066 = vmatpush1.bf16.msra.mxu0 0
          %1067 = vmatprep.subr.bf16.mxu0 0
          %1068 = vmatpush1.bf16.msra.mxu0 0
          %1069 = vmatprep.subr.bf16.mxu0 0
          %1070 = vmatpush1.bf16.msra.mxu0 0
          %1071 = vmatprep.mubr.bf16.mxu0 0
          %1072 = vmatmul.mubr.bf16.gmra.mrb[0].mxu0 %v747
          %v1073 = vpop.f32.mrb[0].mxu0
          %v1074 = vadd.f32 0.0, %v1073
          %v1075 = vpop.f32.mrb[0].mxu0
          %v1076 = vpop.f32.mrb[0].mxu0
          %v1077 = vadd.f32 0.0, %v1076
          %v1078 = vpop.f32.mrb[0].mxu0
          %1079 = vmatprep.mubr.bf16.mxu0 0
          %1080 = vmatmul.mubr.bf16.gmra.mrb[0].mxu0 %v748
          %v1081 = vpop.f32.mrb[0].mxu0
          %v1082 = vadd.f32 0.0, %v1081
          %v1083 = vpop.f32.mrb[0].mxu0
          %v1084 = vpop.f32.mrb[0].mxu0
          %v1085 = vadd.f32 0.0, %v1084
          %v1086 = vpop.f32.mrb[0].mxu0
          %1087 = vdwg.mxu0
          %v1088 = vmax.f32 %v848, 0.0
          %v1089 = vmax.f32 %v851, 0.0
          %v1090 = vmax.f32 %v856, 0.0
          %v1091 = vmax.f32 %v859, 0.0
          %v1092 = vpack.c.bf16 %v1089, %v1088
          %v1093 = vpack.c.bf16 %v1091, %v1090
          %1094 = vst [vmem:[#allocation2] sm:$0xff] %v1092
          %1095 = vst [vmem:[#allocation2 + $0x8] sm:$0xff] %v1093
          %v1096 = vmax.f32 %v961, 0.0
          %v1097 = vmax.f32 %v964, 0.0
          %v1098 = vmax.f32 %v969, 0.0
          %v1099 = vmax.f32 %v972, 0.0
          %v1100 = vpack.c.bf16 %v1097, %v1096
          %v1101 = vpack.c.bf16 %v1099, %v1098
          %1102 = vst [vmem:[#allocation3] sm:$0xff] %v1100
          %1103 = vst [vmem:[#allocation3 + $0x8] sm:$0xff] %v1101
          %v1104 = vpack.c.bf16 %v1077, %v1074
          %v1105 = vpack.c.bf16 %v1085, %v1082
          %1106 = vst [vmem:[#allocation4] sm:$0xff] %v1104
          %1107 = vst [vmem:[#allocation4 + $0x8] sm:$0xff] %v1105
          %1108 = vst [vmem:[#allocation5] sm:$0xff] 0.0
          %1109 = vst [vmem:[#allocation5 + $0x8] sm:$0xff] 0.0
          %1110 = vst [vmem:[#allocation5 + $0x10] sm:$0xff] 0.0
          %1111 = vst [vmem:[#allocation5 + $0x18] sm:$0xff] 0.0
          %1112 = vst [vmem:[#allocation6] sm:$0xff] 0.0
          %1113 = vst [vmem:[#allocation6 + $0x8] sm:$0xff] 0.0
          %1114 = vst [vmem:[#allocation6 + $0x10] sm:$0xff] 0.0
          %1115 = vst [vmem:[#allocation6 + $0x18] sm:$0xff] 0.0
        $region120: #{tpu_custom_call.1} parent=71 // pred_fallthru
          _
        %v1116 = vld [vmem:[#allocation2] sm:$0xff]
        %v1117 = vld [vmem:[#allocation2 + $0x8] sm:$0xff]
        %v1118 = vld [vmem:[%s626] sm:$0xf]
        %v1119 = vld [vmem:[%s626 + $0x4] sm:$0xf]
        %v1120 = vld [vmem:[%s626 + $0x8] sm:$0xf]
        %v1121 = vld [vmem:[%s626 + $0xc] sm:$0xf]
        %v1122 = vld [vmem:[%s626 + $0x10] sm:$0xf]
        %v1123 = vld [vmem:[%s626 + $0x14] sm:$0xf]
        %v1124 = vld [vmem:[%s626 + $0x18] sm:$0xf]
        %v1125 = vld [vmem:[%s626 + $0x1c] sm:$0xf]
        %v1126 = vld [vmem:[%s626 + $0x20] sm:$0xf]
        %v1127 = vld [vmem:[%s626 + $0x24] sm:$0xf]
        %v1128 = vld [vmem:[%s626 + $0x28] sm:$0xf]
        %v1129 = vld [vmem:[%s626 + $0x2c] sm:$0xf]
        %v1130 = vld [vmem:[%s626 + $0x30] sm:$0xf]
        %v1131 = vld [vmem:[%s626 + $0x34] sm:$0xf]
        %v1132 = vld [vmem:[%s626 + $0x38] sm:$0xf]
        %v1133 = vld [vmem:[%s626 + $0x3c] sm:$0xf]
        %v1150 = vunpack.c.l.b16 %v1118
        %v1151 = vunpack.c.l.b16 %v1119
        %v1152 = vunpack.c.l.b16 %v1120
        %v1153 = vunpack.c.l.b16 %v1121
        %v1154 = vunpack.c.l.b16 %v1122
        %v1155 = vunpack.c.l.b16 %v1123
        %v1156 = vunpack.c.l.b16 %v1124
        %v1157 = vunpack.c.l.b16 %v1125
        %v1158 = vunpack.c.l.b16 %v1126
        %v1159 = vunpack.c.l.b16 %v1127
        %v1160 = vunpack.c.l.b16 %v1128
        %v1161 = vunpack.c.l.b16 %v1129
        %v1162 = vunpack.c.l.b16 %v1130
        %v1163 = vunpack.c.l.b16 %v1131
        %v1164 = vunpack.c.l.b16 %v1132
        %v1165 = vunpack.c.l.b16 %v1133
        %v1166 = vpack.c.b16 %v1151, %v1150
        %v1167 = vpack.c.b16 %v1153, %v1152
        %v1168 = vpack.c.b16 %v1155, %v1154
        %v1169 = vpack.c.b16 %v1157, %v1156
        %v1170 = vpack.c.b16 %v1159, %v1158
        %v1171 = vpack.c.b16 %v1161, %v1160
        %v1172 = vpack.c.b16 %v1163, %v1162
        %v1173 = vpack.c.b16 %v1165, %v1164
        %1182 = vmatprep.subr.bf16.mxu0 0
        %1183 = vmatpush1.bf16.msra.mxu0 %v1166
        %1184 = vmatprep.subr.bf16.mxu0 0
        %1185 = vmatpush1.bf16.msra.mxu0 %v1167
        %1186 = vmatprep.subr.bf16.mxu0 0
        %1187 = vmatpush1.bf16.msra.mxu0 %v1168
        %1188 = vmatprep.subr.bf16.mxu0 0
        %1189 = vmatpush1.bf16.msra.mxu0 %v1169
        %1190 = vmatprep.subr.bf16.mxu0 0
        %1191 = vmatpush1.bf16.msra.mxu0 %v1170
        %1192 = vmatprep.subr.bf16.mxu0 0
        %1193 = vmatpush1.bf16.msra.mxu0 %v1171
        %1194 = vmatprep.subr.bf16.mxu0 0
        %1195 = vmatpush1.bf16.msra.mxu0 %v1172
        %1196 = vmatprep.subr.bf16.mxu0 0
        %1197 = vmatpush1.bf16.msra.mxu0 %v1173
        %1198 = vmatprep.subr.bf16.mxu0 0
        %1199 = vmatpush1.bf16.msra.mxu0 0
        %1200 = vmatprep.subr.bf16.mxu0 0
        %1201 = vmatpush1.bf16.msra.mxu0 0
        %1202 = vmatprep.subr.bf16.mxu0 0
        %1203 = vmatpush1.bf16.msra.mxu0 0
        %1204 = vmatprep.subr.bf16.mxu0 0
        %1205 = vmatpush1.bf16.msra.mxu0 0
        %1206 = vmatprep.subr.bf16.mxu0 0
        %1207 = vmatpush1.bf16.msra.mxu0 0
        %1208 = vmatprep.subr.bf16.mxu0 0
        %1209 = vmatpush1.bf16.msra.mxu0 0
        %1210 = vmatprep.subr.bf16.mxu0 0
        %1211 = vmatpush1.bf16.msra.mxu0 0
        %1212 = vmatprep.subr.bf16.mxu0 0
        %1213 = vmatpush1.bf16.msra.mxu0 0
        %1214 = vmatprep.mubr.bf16.mxu0 0
        %1215 = vmatmul.mubr.bf16.gmra.mrb[0].mxu0 %v1116
        %v1216 = vpop.f32.mrb[0].mxu0
        %v1217 = vadd.f32 0.0, %v1216
        %v1218 = vpop.f32.mrb[0].mxu0
        %v1219 = vpop.f32.mrb[0].mxu0
        %v1220 = vadd.f32 0.0, %v1219
        %v1221 = vpop.f32.mrb[0].mxu0
        %1222 = vmatprep.mubr.bf16.mxu0 0
        %1223 = vmatmul.mubr.bf16.gmra.mrb[0].mxu0 %v1117
        %v1224 = vpop.f32.mrb[0].mxu0
        %v1225 = vadd.f32 0.0, %v1224
        %v1226 = vpop.f32.mrb[0].mxu0
        %v1227 = vpop.f32.mrb[0].mxu0
        %v1228 = vadd.f32 0.0, %v1227
        %v1229 = vpop.f32.mrb[0].mxu0
        %1230 = vdwg.mxu0
        %v1231 = vld [vmem:[#allocation3] sm:$0xff]
        %v1232 = vld [vmem:[#allocation3 + $0x8] sm:$0xff]
        %v1233 = vld [vmem:[%s635] sm:$0xf]
        %v1234 = vld [vmem:[%s635 + $0x4] sm:$0xf]
        %v1235 = vld [vmem:[%s635 + $0x8] sm:$0xf]
        %v1236 = vld [vmem:[%s635 + $0xc] sm:$0xf]
        %v1237 = vld [vmem:[%s635 + $0x10] sm:$0xf]
        %v1238 = vld [vmem:[%s635 + $0x14] sm:$0xf]
        %v1239 = vld [vmem:[%s635 + $0x18] sm:$0xf]
        %v1240 = vld [vmem:[%s635 + $0x1c] sm:$0xf]
        %v1241 = vld [vmem:[%s635 + $0x20] sm:$0xf]
        %v1242 = vld [vmem:[%s635 + $0x24] sm:$0xf]
        %v1243 = vld [vmem:[%s635 + $0x28] sm:$0xf]
        %v1244 = vld [vmem:[%s635 + $0x2c] sm:$0xf]
        %v1245 = vld [vmem:[%s635 + $0x30] sm:$0xf]
        %v1246 = vld [vmem:[%s635 + $0x34] sm:$0xf]
        %v1247 = vld [vmem:[%s635 + $0x38] sm:$0xf]
        %v1248 = vld [vmem:[%s635 + $0x3c] sm:$0xf]
        %v1265 = vunpack.c.l.b16 %v1233
        %v1266 = vunpack.c.l.b16 %v1234
        %v1267 = vunpack.c.l.b16 %v1235
        %v1268 = vunpack.c.l.b16 %v1236
        %v1269 = vunpack.c.l.b16 %v1237
        %v1270 = vunpack.c.l.b16 %v1238
        %v1271 = vunpack.c.l.b16 %v1239
        %v1272 = vunpack.c.l.b16 %v1240
        %v1273 = vunpack.c.l.b16 %v1241
        %v1274 = vunpack.c.l.b16 %v1242
        %v1275 = vunpack.c.l.b16 %v1243
        %v1276 = vunpack.c.l.b16 %v1244
        %v1277 = vunpack.c.l.b16 %v1245
        %v1278 = vunpack.c.l.b16 %v1246
        %v1279 = vunpack.c.l.b16 %v1247
        %v1280 = vunpack.c.l.b16 %v1248
        %v1281 = vpack.c.b16 %v1266, %v1265
        %v1282 = vpack.c.b16 %v1268, %v1267
        %v1283 = vpack.c.b16 %v1270, %v1269
        %v1284 = vpack.c.b16 %v1272, %v1271
        %v1285 = vpack.c.b16 %v1274, %v1273
        %v1286 = vpack.c.b16 %v1276, %v1275
        %v1287 = vpack.c.b16 %v1278, %v1277
        %v1288 = vpack.c.b16 %v1280, %v1279
        %1297 = vmatprep.subr.bf16.mxu0 0
        %1298 = vmatpush1.bf16.msra.mxu0 %v1281
        %1299 = vmatprep.subr.bf16.mxu0 0
        %1300 = vmatpush1.bf16.msra.mxu0 %v1282
        %1301 = vmatprep.subr.bf16.mxu0 0
        %1302 = vmatpush1.bf16.msra.mxu0 %v1283
        %1303 = vmatprep.subr.bf16.mxu0 0
        %1304 = vmatpush1.bf16.msra.mxu0 %v1284
        %1305 = vmatprep.subr.bf16.mxu0 0
        %1306 = vmatpush1.bf16.msra.mxu0 %v1285
        %1307 = vmatprep.subr.bf16.mxu0 0
        %1308 = vmatpush1.bf16.msra.mxu0 %v1286
        %1309 = vmatprep.subr.bf16.mxu0 0
        %1310 = vmatpush1.bf16.msra.mxu0 %v1287
        %1311 = vmatprep.subr.bf16.mxu0 0
        %1312 = vmatpush1.bf16.msra.mxu0 %v1288
        %1313 = vmatprep.subr.bf16.mxu0 0
        %1314 = vmatpush1.bf16.msra.mxu0 0
        %1315 = vmatprep.subr.bf16.mxu0 0
        %1316 = vmatpush1.bf16.msra.mxu0 0
        %1317 = vmatprep.subr.bf16.mxu0 0
        %1318 = vmatpush1.bf16.msra.mxu0 0
        %1319 = vmatprep.subr.bf16.mxu0 0
        %1320 = vmatpush1.bf16.msra.mxu0 0
        %1321 = vmatprep.subr.bf16.mxu0 0
        %1322 = vmatpush1.bf16.msra.mxu0 0
        %1323 = vmatprep.subr.bf16.mxu0 0
        %1324 = vmatpush1.bf16.msra.mxu0 0
        %1325 = vmatprep.subr.bf16.mxu0 0
        %1326 = vmatpush1.bf16.msra.mxu0 0
        %1327 = vmatprep.subr.bf16.mxu0 0
        %1328 = vmatpush1.bf16.msra.mxu0 0
        %1329 = vmatprep.mubr.bf16.mxu0 0
        %1330 = vmatmul.mubr.bf16.gmra.mrb[0].mxu0 %v1231
        %v1331 = vpop.f32.mrb[0].mxu0
        %v1332 = vadd.f32 0.0, %v1331
        %v1333 = vpop.f32.mrb[0].mxu0
        %v1334 = vpop.f32.mrb[0].mxu0
        %v1335 = vadd.f32 0.0, %v1334
        %v1336 = vpop.f32.mrb[0].mxu0
        %1337 = vmatprep.mubr.bf16.mxu0 0
        %1338 = vmatmul.mubr.bf16.gmra.mrb[0].mxu0 %v1232
        %v1339 = vpop.f32.mrb[0].mxu0
        %v1340 = vadd.f32 0.0, %v1339
        %v1341 = vpop.f32.mrb[0].mxu0
        %v1342 = vpop.f32.mrb[0].mxu0
        %v1343 = vadd.f32 0.0, %v1342
        %v1344 = vpop.f32.mrb[0].mxu0
        %1345 = vdwg.mxu0
        %v1346 = vld [vmem:[#allocation4] sm:$0xff]
        %v1347 = vld [vmem:[#allocation4 + $0x8] sm:$0xff]
        %1348 = vmatprep.subr.bf16.mxu0 0
        %1349 = vmatpush1.bf16.msra.mxu0 %v1281
        %1350 = vmatprep.subr.bf16.mxu0 0
        %1351 = vmatpush1.bf16.msra.mxu0 %v1282
        %1352 = vmatprep.subr.bf16.mxu0 0
        %1353 = vmatpush1.bf16.msra.mxu0 %v1283
        %1354 = vmatprep.subr.bf16.mxu0 0
        %1355 = vmatpush1.bf16.msra.mxu0 %v1284
        %1356 = vmatprep.subr.bf16.mxu0 0
        %1357 = vmatpush1.bf16.msra.mxu0 %v1285
        %1358 = vmatprep.subr.bf16.mxu0 0
        %1359 = vmatpush1.bf16.msra.mxu0 %v1286
        %1360 = vmatprep.subr.bf16.mxu0 0
        %1361 = vmatpush1.bf16.msra.mxu0 %v1287
        %1362 = vmatprep.subr.bf16.mxu0 0
        %1363 = vmatpush1.bf16.msra.mxu0 %v1288
        %1364 = vmatprep.subr.bf16.mxu0 0
        %1365 = vmatpush1.bf16.msra.mxu0 0
        %1366 = vmatprep.subr.bf16.mxu0 0
        %1367 = vmatpush1.bf16.msra.mxu0 0
        %1368 = vmatprep.subr.bf16.mxu0 0
        %1369 = vmatpush1.bf16.msra.mxu0 0
        %1370 = vmatprep.subr.bf16.mxu0 0
        %1371 = vmatpush1.bf16.msra.mxu0 0
        %1372 = vmatprep.subr.bf16.mxu0 0
        %1373 = vmatpush1.bf16.msra.mxu0 0
        %1374 = vmatprep.subr.bf16.mxu0 0
        %1375 = vmatpush1.bf16.msra.mxu0 0
        %1376 = vmatprep.subr.bf16.mxu0 0
        %1377 = vmatpush1.bf16.msra.mxu0 0
        %1378 = vmatprep.subr.bf16.mxu0 0
        %1379 = vmatpush1.bf16.msra.mxu0 0
        %1380 = vmatprep.mubr.bf16.mxu0 0
        %1381 = vmatmul.mubr.bf16.gmra.mrb[0].mxu0 %v1346
        %v1382 = vpop.f32.mrb[0].mxu0
        %v1383 = vadd.f32 0.0, %v1382
        %v1384 = vpop.f32.mrb[0].mxu0
        %v1385 = vpop.f32.mrb[0].mxu0
        %v1386 = vadd.f32 0.0, %v1385
        %v1387 = vpop.f32.mrb[0].mxu0
        %1388 = vmatprep.mubr.bf16.mxu0 0
        %1389 = vmatmul.mubr.bf16.gmra.mrb[0].mxu0 %v1347
        %v1390 = vpop.f32.mrb[0].mxu0
        %v1391 = vadd.f32 0.0, %v1390
        %v1392 = vpop.f32.mrb[0].mxu0
        %v1393 = vpop.f32.mrb[0].mxu0
        %v1394 = vadd.f32 0.0, %v1393
        %v1395 = vpop.f32.mrb[0].mxu0
        %1396 = vdwg.mxu0
        %v1397 = vmul.f32 %v1217, %v1332
        %v1398 = vmul.f32 %v1220, %v1335
        %v1399 = vmul.f32 %v1225, %v1340
        %v1400 = vmul.f32 %v1228, %v1343
        %v1401 = vpack.c.bf16 %v1398, %v1397
        %v1402 = vpack.c.bf16 %v1400, %v1399
        %v1403 = vld [vmem:[%s644] sm:$0xf]
        %v1404 = vld [vmem:[%s644 + $0x4] sm:$0xf]
        %v1405 = vld [vmem:[%s644 + $0x8] sm:$0xf]
        %v1406 = vld [vmem:[%s644 + $0xc] sm:$0xf]
        %v1407 = vld [vmem:[%s644 + $0x10] sm:$0xf]
        %v1408 = vld [vmem:[%s644 + $0x14] sm:$0xf]
        %v1409 = vld [vmem:[%s644 + $0x18] sm:$0xf]
        %v1410 = vld [vmem:[%s644 + $0x1c] sm:$0xf]
        %v1411 = vld [vmem:[%s644 + $0x20] sm:$0xf]
        %v1412 = vld [vmem:[%s644 + $0x24] sm:$0xf]
        %v1413 = vld [vmem:[%s644 + $0x28] sm:$0xf]
        %v1414 = vld [vmem:[%s644 + $0x2c] sm:$0xf]
        %v1415 = vld [vmem:[%s644 + $0x30] sm:$0xf]
        %v1416 = vld [vmem:[%s644 + $0x34] sm:$0xf]
        %v1417 = vld [vmem:[%s644 + $0x38] sm:$0xf]
        %v1418 = vld [vmem:[%s644 + $0x3c] sm:$0xf]
        %v1435 = vunpack.c.l.b16 %v1403
        %v1436 = vunpack.c.l.b16 %v1404
        %v1437 = vunpack.c.l.b16 %v1405
        %v1438 = vunpack.c.l.b16 %v1406
        %v1439 = vunpack.c.l.b16 %v1407
        %v1440 = vunpack.c.l.b16 %v1408
        %v1441 = vunpack.c.l.b16 %v1409
        %v1442 = vunpack.c.l.b16 %v1410
        %v1443 = vunpack.c.l.b16 %v1411
        %v1444 = vunpack.c.l.b16 %v1412
        %v1445 = vunpack.c.l.b16 %v1413
        %v1446 = vunpack.c.l.b16 %v1414
        %v1447 = vunpack.c.l.b16 %v1415
        %v1448 = vunpack.c.l.b16 %v1416
        %v1449 = vunpack.c.l.b16 %v1417
        %v1450 = vunpack.c.l.b16 %v1418
        %v1451 = vpack.c.b16 %v1436, %v1435
        %v1452 = vpack.c.b16 %v1438, %v1437
        %v1453 = vpack.c.b16 %v1440, %v1439
        %v1454 = vpack.c.b16 %v1442, %v1441
        %v1455 = vpack.c.b16 %v1444, %v1443
        %v1456 = vpack.c.b16 %v1446, %v1445
        %v1457 = vpack.c.b16 %v1448, %v1447
        %v1458 = vpack.c.b16 %v1450, %v1449
        %1467 = vmatprep.subr.bf16.mxu0 0
        %1468 = vmatpush1.bf16.msra.mxu0 %v1451
        %1469 = vmatprep.subr.bf16.mxu0 0
        %1470 = vmatpush1.bf16.msra.mxu0 %v1452
        %1471 = vmatprep.subr.bf16.mxu0 0
        %1472 = vmatpush1.bf16.msra.mxu0 %v1453
        %1473 = vmatprep.subr.bf16.mxu0 0
        %1474 = vmatpush1.bf16.msra.mxu0 %v1454
        %1475 = vmatprep.subr.bf16.mxu0 0
        %1476 = vmatpush1.bf16.msra.mxu0 %v1455
        %1477 = vmatprep.subr.bf16.mxu0 0
        %1478 = vmatpush1.bf16.msra.mxu0 %v1456
        %1479 = vmatprep.subr.bf16.mxu0 0
        %1480 = vmatpush1.bf16.msra.mxu0 %v1457
        %1481 = vmatprep.subr.bf16.mxu0 0
        %1482 = vmatpush1.bf16.msra.mxu0 %v1458
        %1483 = vmatprep.subr.bf16.mxu0 0
        %1484 = vmatpush1.bf16.msra.mxu0 0
        %1485 = vmatprep.subr.bf16.mxu0 0
        %1486 = vmatpush1.bf16.msra.mxu0 0
        %1487 = vmatprep.subr.bf16.mxu0 0
        %1488 = vmatpush1.bf16.msra.mxu0 0
        %1489 = vmatprep.subr.bf16.mxu0 0
        %1490 = vmatpush1.bf16.msra.mxu0 0
        %1491 = vmatprep.subr.bf16.mxu0 0
        %1492 = vmatpush1.bf16.msra.mxu0 0
        %1493 = vmatprep.subr.bf16.mxu0 0
        %1494 = vmatpush1.bf16.msra.mxu0 0
        %1495 = vmatprep.subr.bf16.mxu0 0
        %1496 = vmatpush1.bf16.msra.mxu0 0
        %1497 = vmatprep.subr.bf16.mxu0 0
        %1498 = vmatpush1.bf16.msra.mxu0 0
        %1499 = vmatprep.mubr.bf16.mxu0 0
        %1500 = vmatmul.mubr.bf16.gmra.mrb[0].mxu0 %v1401
        %v1501 = vpop.f32.mrb[0].mxu0
        %v1502 = vadd.f32 0.0, %v1501
        %v1503 = vpop.f32.mrb[0].mxu0
        %v1504 = vpop.f32.mrb[0].mxu0
        %v1505 = vadd.f32 0.0, %v1504
        %v1506 = vpop.f32.mrb[0].mxu0
        %1507 = vmatprep.mubr.bf16.mxu0 0
        %1508 = vmatmul.mubr.bf16.gmra.mrb[0].mxu0 %v1402
        %v1509 = vpop.f32.mrb[0].mxu0
        %v1510 = vadd.f32 0.0, %v1509
        %v1511 = vpop.f32.mrb[0].mxu0
        %v1512 = vpop.f32.mrb[0].mxu0
        %v1513 = vadd.f32 0.0, %v1512
        %v1514 = vpop.f32.mrb[0].mxu0
        %1515 = vdwg.mxu0
        %v1516 = vpack.c.bf16 %v1505, %v1502
        %v1517 = vpack.c.bf16 %v1513, %v1510
        %v1518 = vld [vmem:[%s653] sm:$0xf]
        %v1519 = vld [vmem:[%s653 + $0x4] sm:$0xf]
        %v1520 = vld [vmem:[%s653 + $0x8] sm:$0xf]
        %v1521 = vld [vmem:[%s653 + $0xc] sm:$0xf]
        %v1522 = vld [vmem:[%s653 + $0x10] sm:$0xf]
        %v1523 = vld [vmem:[%s653 + $0x14] sm:$0xf]
        %v1524 = vld [vmem:[%s653 + $0x18] sm:$0xf]
        %v1525 = vld [vmem:[%s653 + $0x1c] sm:$0xf]
        %v1526 = vld [vmem:[%s653 + $0x20] sm:$0xf]
        %v1527 = vld [vmem:[%s653 + $0x24] sm:$0xf]
        %v1528 = vld [vmem:[%s653 + $0x28] sm:$0xf]
        %v1529 = vld [vmem:[%s653 + $0x2c] sm:$0xf]
        %v1530 = vld [vmem:[%s653 + $0x30] sm:$0xf]
        %v1531 = vld [vmem:[%s653 + $0x34] sm:$0xf]
        %v1532 = vld [vmem:[%s653 + $0x38] sm:$0xf]
        %v1533 = vld [vmem:[%s653 + $0x3c] sm:$0xf]
        %v1550 = vunpack.c.l.b16 %v1518
        %v1551 = vunpack.c.l.b16 %v1519
        %v1552 = vunpack.c.l.b16 %v1520
        %v1553 = vunpack.c.l.b16 %v1521
        %v1554 = vunpack.c.l.b16 %v1522
        %v1555 = vunpack.c.l.b16 %v1523
        %v1556 = vunpack.c.l.b16 %v1524
        %v1557 = vunpack.c.l.b16 %v1525
        %v1558 = vunpack.c.l.b16 %v1526
        %v1559 = vunpack.c.l.b16 %v1527
        %v1560 = vunpack.c.l.b16 %v1528
        %v1561 = vunpack.c.l.b16 %v1529
        %v1562 = vunpack.c.l.b16 %v1530
        %v1563 = vunpack.c.l.b16 %v1531
        %v1564 = vunpack.c.l.b16 %v1532
        %v1565 = vunpack.c.l.b16 %v1533
        %v1566 = vpack.c.b16 %v1551, %v1550
        %v1567 = vpack.c.b16 %v1553, %v1552
        %v1568 = vpack.c.b16 %v1555, %v1554
        %v1569 = vpack.c.b16 %v1557, %v1556
        %v1570 = vpack.c.b16 %v1559, %v1558
        %v1571 = vpack.c.b16 %v1561, %v1560
        %v1572 = vpack.c.b16 %v1563, %v1562
        %v1573 = vpack.c.b16 %v1565, %v1564
        %1582 = vmatprep.subr.bf16.mxu0 0
        %1583 = vmatpush1.bf16.msra.mxu0 %v1566
        %1584 = vmatprep.subr.bf16.mxu0 0
        %1585 = vmatpush1.bf16.msra.mxu0 %v1567
        %1586 = vmatprep.subr.bf16.mxu0 0
        %1587 = vmatpush1.bf16.msra.mxu0 %v1568
        %1588 = vmatprep.subr.bf16.mxu0 0
        %1589 = vmatpush1.bf16.msra.mxu0 %v1569
        %1590 = vmatprep.subr.bf16.mxu0 0
        %1591 = vmatpush1.bf16.msra.mxu0 %v1570
        %1592 = vmatprep.subr.bf16.mxu0 0
        %1593 = vmatpush1.bf16.msra.mxu0 %v1571
        %1594 = vmatprep.subr.bf16.mxu0 0
        %1595 = vmatpush1.bf16.msra.mxu0 %v1572
        %1596 = vmatprep.subr.bf16.mxu0 0
        %1597 = vmatpush1.bf16.msra.mxu0 %v1573
        %1598 = vmatprep.subr.bf16.mxu0 0
        %1599 = vmatpush1.bf16.msra.mxu0 0
        %1600 = vmatprep.subr.bf16.mxu0 0
        %1601 = vmatpush1.bf16.msra.mxu0 0
        %1602 = vmatprep.subr.bf16.mxu0 0
        %1603 = vmatpush1.bf16.msra.mxu0 0
        %1604 = vmatprep.subr.bf16.mxu0 0
        %1605 = vmatpush1.bf16.msra.mxu0 0
        %1606 = vmatprep.subr.bf16.mxu0 0
        %1607 = vmatpush1.bf16.msra.mxu0 0
        %1608 = vmatprep.subr.bf16.mxu0 0
        %1609 = vmatpush1.bf16.msra.mxu0 0
        %1610 = vmatprep.subr.bf16.mxu0 0
        %1611 = vmatpush1.bf16.msra.mxu0 0
        %1612 = vmatprep.subr.bf16.mxu0 0
        %1613 = vmatpush1.bf16.msra.mxu0 0
        %1614 = vmatprep.mubr.bf16.mxu0 0
        %1615 = vmatmul.mubr.bf16.gmra.mrb[0].mxu0 %v1516
        %v1616 = vpop.f32.mrb[0].mxu0
        %v1617 = vadd.f32 0.0, %v1616
        %v1618 = vpop.f32.mrb[0].mxu0
        %v1619 = vpop.f32.mrb[0].mxu0
        %v1620 = vadd.f32 0.0, %v1619
        %v1621 = vpop.f32.mrb[0].mxu0
        %1622 = vmatprep.mubr.bf16.mxu0 0
        %1623 = vmatmul.mubr.bf16.gmra.mrb[0].mxu0 %v1517
        %v1624 = vpop.f32.mrb[0].mxu0
        %v1625 = vadd.f32 0.0, %v1624
        %v1626 = vpop.f32.mrb[0].mxu0
        %v1627 = vpop.f32.mrb[0].mxu0
        %v1628 = vadd.f32 0.0, %v1627
        %v1629 = vpop.f32.mrb[0].mxu0
        %1630 = vdwg.mxu0
        %v1631 = vld [vmem:[#allocation5] sm:$0xff]
        %v1632 = vld [vmem:[#allocation5 + $0x8] sm:$0xff]
        %v1633 = vld [vmem:[#allocation5 + $0x10] sm:$0xff]
        %v1634 = vld [vmem:[#allocation5 + $0x18] sm:$0xff]
        %v1635 = vmul.f32 %v1617, %v1383
        %v1636 = vmul.f32 %v1620, %v1386
        %v1637 = vmul.f32 %v1625, %v1391
        %v1638 = vmul.f32 %v1628, %v1394
        %v1639 = vpack.c.bf16 %v1636, %v1635
        %v1640 = vpack.c.bf16 %v1638, %v1637
        %v1641 = vld [vmem:[%s662] sm:$0xf]
        %v1642 = vld [vmem:[%s662 + $0x4] sm:$0xf]
        %v1643 = vld [vmem:[%s662 + $0x8] sm:$0xf]
        %v1644 = vld [vmem:[%s662 + $0xc] sm:$0xf]
        %v1645 = vld [vmem:[%s662 + $0x10] sm:$0xf]
        %v1646 = vld [vmem:[%s662 + $0x14] sm:$0xf]
        %v1647 = vld [vmem:[%s662 + $0x18] sm:$0xf]
        %v1648 = vld [vmem:[%s662 + $0x1c] sm:$0xf]
        %v1649 = vld [vmem:[%s662 + $0x20] sm:$0xf]
        %v1650 = vld [vmem:[%s662 + $0x24] sm:$0xf]
        %v1651 = vld [vmem:[%s662 + $0x28] sm:$0xf]
        %v1652 = vld [vmem:[%s662 + $0x2c] sm:$0xf]
        %v1653 = vld [vmem:[%s662 + $0x30] sm:$0xf]
        %v1654 = vld [vmem:[%s662 + $0x34] sm:$0xf]
        %v1655 = vld [vmem:[%s662 + $0x38] sm:$0xf]
        %v1656 = vld [vmem:[%s662 + $0x3c] sm:$0xf]
        %v1673 = vunpack.c.l.b16 %v1641
        %v1674 = vunpack.c.l.b16 %v1642
        %v1675 = vunpack.c.l.b16 %v1643
        %v1676 = vunpack.c.l.b16 %v1644
        %v1677 = vunpack.c.l.b16 %v1645
        %v1678 = vunpack.c.l.b16 %v1646
        %v1679 = vunpack.c.l.b16 %v1647
        %v1680 = vunpack.c.l.b16 %v1648
        %v1681 = vunpack.c.l.b16 %v1649
        %v1682 = vunpack.c.l.b16 %v1650
        %v1683 = vunpack.c.l.b16 %v1651
        %v1684 = vunpack.c.l.b16 %v1652
        %v1685 = vunpack.c.l.b16 %v1653
        %v1686 = vunpack.c.l.b16 %v1654
        %v1687 = vunpack.c.l.b16 %v1655
        %v1688 = vunpack.c.l.b16 %v1656
        %v1689 = vpack.c.b16 %v1674, %v1673
        %v1690 = vpack.c.b16 %v1676, %v1675
        %v1691 = vpack.c.b16 %v1678, %v1677
        %v1692 = vpack.c.b16 %v1680, %v1679
        %v1693 = vpack.c.b16 %v1682, %v1681
        %v1694 = vpack.c.b16 %v1684, %v1683
        %v1695 = vpack.c.b16 %v1686, %v1685
        %v1696 = vpack.c.b16 %v1688, %v1687
        %1705 = vmatprep.subr.bf16.mxu0 0
        %1706 = vmatpush1.bf16.msra.mxu0 %v1689
        %1707 = vmatprep.subr.bf16.mxu0 0
        %1708 = vmatpush1.bf16.msra.mxu0 %v1690
        %1709 = vmatprep.subr.bf16.mxu0 0
        %1710 = vmatpush1.bf16.msra.mxu0 %v1691
        %1711 = vmatprep.subr.bf16.mxu0 0
        %1712 = vmatpush1.bf16.msra.mxu0 %v1692
        %1713 = vmatprep.subr.bf16.mxu0 0
        %1714 = vmatpush1.bf16.msra.mxu0 %v1693
        %1715 = vmatprep.subr.bf16.mxu0 0
        %1716 = vmatpush1.bf16.msra.mxu0 %v1694
        %1717 = vmatprep.subr.bf16.mxu0 0
        %1718 = vmatpush1.bf16.msra.mxu0 %v1695
        %1719 = vmatprep.subr.bf16.mxu0 0
        %1720 = vmatpush1.bf16.msra.mxu0 %v1696
        %1721 = vmatprep.subr.bf16.mxu0 0
        %1722 = vmatpush1.bf16.msra.mxu0 0
        %1723 = vmatprep.subr.bf16.mxu0 0
        %1724 = vmatpush1.bf16.msra.mxu0 0
        %1725 = vmatprep.subr.bf16.mxu0 0
        %1726 = vmatpush1.bf16.msra.mxu0 0
        %1727 = vmatprep.subr.bf16.mxu0 0
        %1728 = vmatpush1.bf16.msra.mxu0 0
        %1729 = vmatprep.subr.bf16.mxu0 0
        %1730 = vmatpush1.bf16.msra.mxu0 0
        %1731 = vmatprep.subr.bf16.mxu0 0
        %1732 = vmatpush1.bf16.msra.mxu0 0
        %1733 = vmatprep.subr.bf16.mxu0 0
        %1734 = vmatpush1.bf16.msra.mxu0 0
        %1735 = vmatprep.subr.bf16.mxu0 0
        %1736 = vmatpush1.bf16.msra.mxu0 0
        %1737 = vmatprep.mubr.bf16.mxu0 0
        %1738 = vmatmul.mubr.bf16.gmra.mrb[0].mxu0 %v1639
        %v1739 = vpop.f32.mrb[0].mxu0
        %v1740 = vadd.f32 0.0, %v1739
        %v1741 = vpop.f32.mrb[0].mxu0
        %v1742 = vpop.f32.mrb[0].mxu0
        %v1743 = vadd.f32 0.0, %v1742
        %v1744 = vpop.f32.mrb[0].mxu0
        %1745 = vmatprep.mubr.bf16.mxu0 0
        %1746 = vmatmul.mubr.bf16.gmra.mrb[0].mxu0 %v1640
        %v1747 = vpop.f32.mrb[0].mxu0
        %v1748 = vadd.f32 0.0, %v1747
        %v1749 = vpop.f32.mrb[0].mxu0
        %v1750 = vpop.f32.mrb[0].mxu0
        %v1751 = vadd.f32 0.0, %v1750
        %v1752 = vpop.f32.mrb[0].mxu0
        %1753 = vdwg.mxu0
        %v1754 = vadd.f32 %v1631, %v1740
        %v1755 = vadd.f32 %v1632, %v1743
        %v1756 = vadd.f32 %v1633, %v1748
        %v1757 = vadd.f32 %v1634, %v1751
        %1758 = vst [vmem:[#allocation5] sm:$0xff] %v1754
        %1759 = vst [vmem:[#allocation5 + $0x8] sm:$0xff] %v1755
        %1760 = vst [vmem:[#allocation5 + $0x10] sm:$0xff] %v1756
        %1761 = vst [vmem:[#allocation5 + $0x18] sm:$0xff] %v1757
        %v1762 = vld [vmem:[#allocation6] sm:$0xff]
        %v1763 = vld [vmem:[#allocation6 + $0x8] sm:$0xff]
        %v1764 = vld [vmem:[#allocation6 + $0x10] sm:$0xff]
        %v1765 = vld [vmem:[#allocation6 + $0x18] sm:$0xff]
        %v1766 = vld [vmem:[#allocation24] sm:$0xf]
        %v1767 = vld [vmem:[#allocation24 + $0x4] sm:$0xf]
        %v1768 = vld [vmem:[#allocation24 + $0x8] sm:$0xf]
        %v1769 = vld [vmem:[#allocation24 + $0xc] sm:$0xf]
        %v1770 = vld [vmem:[#allocation24 + $0x10] sm:$0xf]
        %v1771 = vld [vmem:[#allocation24 + $0x14] sm:$0xf]
        %v1772 = vld [vmem:[#allocation24 + $0x18] sm:$0xf]
        %v1773 = vld [vmem:[#allocation24 + $0x1c] sm:$0xf]
        %v1774 = vld [vmem:[#allocation24 + $0x20] sm:$0xf]
        %v1775 = vld [vmem:[#allocation24 + $0x24] sm:$0xf]
        %v1776 = vld [vmem:[#allocation24 + $0x28] sm:$0xf]
        %v1777 = vld [vmem:[#allocation24 + $0x2c] sm:$0xf]
        %v1778 = vld [vmem:[#allocation24 + $0x30] sm:$0xf]
        %v1779 = vld [vmem:[#allocation24 + $0x34] sm:$0xf]
        %v1780 = vld [vmem:[#allocation24 + $0x38] sm:$0xf]
        %v1781 = vld [vmem:[#allocation24 + $0x3c] sm:$0xf]
        %v1798 = vunpack.c.l.b16 %v1766
        %v1799 = vunpack.c.l.b16 %v1767
        %v1800 = vunpack.c.l.b16 %v1768
        %v1801 = vunpack.c.l.b16 %v1769
        %v1802 = vunpack.c.l.b16 %v1770
        %v1803 = vunpack.c.l.b16 %v1771
        %v1804 = vunpack.c.l.b16 %v1772
        %v1805 = vunpack.c.l.b16 %v1773
        %v1806 = vunpack.c.l.b16 %v1774
        %v1807 = vunpack.c.l.b16 %v1775
        %v1808 = vunpack.c.l.b16 %v1776
        %v1809 = vunpack.c.l.b16 %v1777
        %v1810 = vunpack.c.l.b16 %v1778
        %v1811 = vunpack.c.l.b16 %v1779
        %v1812 = vunpack.c.l.b16 %v1780
        %v1813 = vunpack.c.l.b16 %v1781
        %v1814 = vpack.c.b16 %v1799, %v1798
        %v1815 = vpack.c.b16 %v1801, %v1800
        %v1816 = vpack.c.b16 %v1803, %v1802
        %v1817 = vpack.c.b16 %v1805, %v1804
        %v1818 = vpack.c.b16 %v1807, %v1806
        %v1819 = vpack.c.b16 %v1809, %v1808
        %v1820 = vpack.c.b16 %v1811, %v1810
        %v1821 = vpack.c.b16 %v1813, %v1812
        %1830 = vmatprep.subr.bf16.mxu0 0
        %1831 = vmatpush1.bf16.msra.mxu0 %v1814
        %1832 = vmatprep.subr.bf16.mxu0 0
        %1833 = vmatpush1.bf16.msra.mxu0 %v1815
        %1834 = vmatprep.subr.bf16.mxu0 0
        %1835 = vmatpush1.bf16.msra.mxu0 %v1816
        %1836 = vmatprep.subr.bf16.mxu0 0
        %1837 = vmatpush1.bf16.msra.mxu0 %v1817
        %1838 = vmatprep.subr.bf16.mxu0 0
        %1839 = vmatpush1.bf16.msra.mxu0 %v1818
        %1840 = vmatprep.subr.bf16.mxu0 0
        %1841 = vmatpush1.bf16.msra.mxu0 %v1819
        %1842 = vmatprep.subr.bf16.mxu0 0
        %1843 = vmatpush1.bf16.msra.mxu0 %v1820
        %1844 = vmatprep.subr.bf16.mxu0 0
        %1845 = vmatpush1.bf16.msra.mxu0 %v1821
        %1846 = vmatprep.subr.bf16.mxu0 0
        %1847 = vmatpush1.bf16.msra.mxu0 0
        %1848 = vmatprep.subr.bf16.mxu0 0
        %1849 = vmatpush1.bf16.msra.mxu0 0
        %1850 = vmatprep.subr.bf16.mxu0 0
        %1851 = vmatpush1.bf16.msra.mxu0 0
        %1852 = vmatprep.subr.bf16.mxu0 0
        %1853 = vmatpush1.bf16.msra.mxu0 0
        %1854 = vmatprep.subr.bf16.mxu0 0
        %1855 = vmatpush1.bf16.msra.mxu0 0
        %1856 = vmatprep.subr.bf16.mxu0 0
        %1857 = vmatpush1.bf16.msra.mxu0 0
        %1858 = vmatprep.subr.bf16.mxu0 0
        %1859 = vmatpush1.bf16.msra.mxu0 0
        %1860 = vmatprep.subr.bf16.mxu0 0
        %1861 = vmatpush1.bf16.msra.mxu0 0
        %1862 = vmatprep.mubr.bf16.mxu0 0
        %1863 = vmatmul.mubr.bf16.gmra.mrb[0].mxu0 %v1516
        %v1864 = vpop.f32.mrb[0].mxu0
        %v1865 = vadd.f32 0.0, %v1864
        %v1866 = vpop.f32.mrb[0].mxu0
        %v1867 = vpop.f32.mrb[0].mxu0
        %v1868 = vadd.f32 0.0, %v1867
        %v1869 = vpop.f32.mrb[0].mxu0
        %1870 = vmatprep.mubr.bf16.mxu0 0
        %1871 = vmatmul.mubr.bf16.gmra.mrb[0].mxu0 %v1517
        %v1872 = vpop.f32.mrb[0].mxu0
        %v1873 = vadd.f32 0.0, %v1872
        %v1874 = vpop.f32.mrb[0].mxu0
        %v1875 = vpop.f32.mrb[0].mxu0
        %v1876 = vadd.f32 0.0, %v1875
        %v1877 = vpop.f32.mrb[0].mxu0
        %1878 = vdwg.mxu0
        %v1879 = vadd.f32 %v1762, %v1865
        %v1880 = vadd.f32 %v1763, %v1868
        %v1881 = vadd.f32 %v1764, %v1873
        %v1882 = vadd.f32 %v1765, %v1876
        %1883 = vst [vmem:[#allocation6] sm:$0xff] %v1879
        %1884 = vst [vmem:[#allocation6 + $0x8] sm:$0xff] %v1880
        %1885 = vst [vmem:[#allocation6 + $0x10] sm:$0xff] %v1881
        %1886 = vst [vmem:[#allocation6 + $0x18] sm:$0xff] %v1882
        %p1887 = scmp.eq.s32.totalorder %s46, 2
        // Predicated region
        $region121: #{tpu_custom_call.1} parent=71 // pred_check
          %p1888 = pneg %p1887
        $region122: #{tpu_custom_call.1} parent=71 // pred_check_branch
          %1890 = sbr.rel (%p1888) target = $region124
        $region123: #{tpu_custom_call.1} parent=71 // pred_region
          %v1891 = vld [vmem:[%s601] sm:$0xff]
          %v1892 = vld [vmem:[%s601 + $0x8] sm:$0xff]
          %v1893 = vld [vmem:[%s601 + $0x10] sm:$0xff]
          %v1894 = vld [vmem:[%s601 + $0x18] sm:$0xff]
          %v1895 = vld [vmem:[#allocation6] sm:$0xff]
          %v1896 = vld [vmem:[#allocation6 + $0x8] sm:$0xff]
          %v1897 = vld [vmem:[#allocation6 + $0x10] sm:$0xff]
          %v1898 = vld [vmem:[#allocation6 + $0x18] sm:$0xff]
          %vm1899 = vcmp.gt.f32.partialorder %v1895, 0.0
          %vm1900 = vcmp.gt.f32.partialorder %v1896, 0.0
          %vm1901 = vcmp.gt.f32.partialorder %v1897, 0.0
          %vm1902 = vcmp.gt.f32.partialorder %v1898, 0.0
          %v1903 = vsel %vm1899, %v1895, 1.0
          %v1904 = vsel %vm1900, %v1896, 1.0
          %v1905 = vsel %vm1901, %v1897, 1.0
          %v1906 = vsel %vm1902, %v1898, 1.0
          %v1907 = vld [vmem:[#allocation5] sm:$0xff]
          %v1908 = vld [vmem:[#allocation5 + $0x8] sm:$0xff]
          %v1909 = vld [vmem:[#allocation5 + $0x10] sm:$0xff]
          %v1910 = vld [vmem:[#allocation5 + $0x18] sm:$0xff]
          %v1911 = vrcp.pop %v1903
          %v1912 = vrcp.pop %v1904
          %v1913 = vrcp.pop %v1905
          %v1914 = vrcp.pop %v1906
          %v1915 = vmul.f32 %v1907, %v1911
          %v1916 = vmul.f32 %v1908, %v1912
          %v1917 = vmul.f32 %v1909, %v1913
          %v1918 = vmul.f32 %v1910, %v1914
          %v1919 = vpack.c.bf16 %v1916, %v1915
          %v1920 = vpack.c.bf16 %v1918, %v1917
          %v1921 = vld [vmem:[#allocation15] sm:$0xf]
          %v1922 = vld [vmem:[#allocation15 + $0x4] sm:$0xf]
          %v1923 = vld [vmem:[#allocation15 + $0x8] sm:$0xf]
          %v1924 = vld [vmem:[#allocation15 + $0xc] sm:$0xf]
          %v1925 = vld [vmem:[#allocation15 + $0x10] sm:$0xf]
          %v1926 = vld [vmem:[#allocation15 + $0x14] sm:$0xf]
          %v1927 = vld [vmem:[#allocation15 + $0x18] sm:$0xf]
          %v1928 = vld [vmem:[#allocation15 + $0x1c] sm:$0xf]
          %v1929 = vld [vmem:[#allocation15 + $0x20] sm:$0xf]
          %v1930 = vld [vmem:[#allocation15 + $0x24] sm:$0xf]
          %v1931 = vld [vmem:[#allocation15 + $0x28] sm:$0xf]
          %v1932 = vld [vmem:[#allocation15 + $0x2c] sm:$0xf]
          %v1933 = vld [vmem:[#allocation15 + $0x30] sm:$0xf]
          %v1934 = vld [vmem:[#allocation15 + $0x34] sm:$0xf]
          %v1935 = vld [vmem:[#allocation15 + $0x38] sm:$0xf]
          %v1936 = vld [vmem:[#allocation15 + $0x3c] sm:$0xf]
          %v1953 = vunpack.c.l.b16 %v1921
          %v1954 = vunpack.c.l.b16 %v1922
          %v1955 = vunpack.c.l.b16 %v1923
          %v1956 = vunpack.c.l.b16 %v1924
          %v1957 = vunpack.c.l.b16 %v1925
          %v1958 = vunpack.c.l.b16 %v1926
          %v1959 = vunpack.c.l.b16 %v1927
          %v1960 = vunpack.c.l.b16 %v1928
          %v1961 = vunpack.c.l.b16 %v1929
          %v1962 = vunpack.c.l.b16 %v1930
          %v1963 = vunpack.c.l.b16 %v1931
          %v1964 = vunpack.c.l.b16 %v1932
          %v1965 = vunpack.c.l.b16 %v1933
          %v1966 = vunpack.c.l.b16 %v1934
          %v1967 = vunpack.c.l.b16 %v1935
          %v1968 = vunpack.c.l.b16 %v1936
          %v1969 = vpack.c.b16 %v1954, %v1953
          %v1970 = vpack.c.b16 %v1956, %v1955
          %v1971 = vpack.c.b16 %v1958, %v1957
          %v1972 = vpack.c.b16 %v1960, %v1959
          %v1973 = vpack.c.b16 %v1962, %v1961
          %v1974 = vpack.c.b16 %v1964, %v1963
          %v1975 = vpack.c.b16 %v1966, %v1965
          %v1976 = vpack.c.b16 %v1968, %v1967
          %1985 = vmatprep.subr.bf16.mxu0 0
          %1986 = vmatpush1.bf16.msra.mxu0 %v1969
          %1987 = vmatprep.subr.bf16.mxu0 0
          %1988 = vmatpush1.bf16.msra.mxu0 %v1970
          %1989 = vmatprep.subr.bf16.mxu0 0
          %1990 = vmatpush1.bf16.msra.mxu0 %v1971
          %1991 = vmatprep.subr.bf16.mxu0 0
          %1992 = vmatpush1.bf16.msra.mxu0 %v1972
          %1993 = vmatprep.subr.bf16.mxu0 0
          %1994 = vmatpush1.bf16.msra.mxu0 %v1973
          %1995 = vmatprep.subr.bf16.mxu0 0
          %1996 = vmatpush1.bf16.msra.mxu0 %v1974
          %1997 = vmatprep.subr.bf16.mxu0 0
          %1998 = vmatpush1.bf16.msra.mxu0 %v1975
          %1999 = vmatprep.subr.bf16.mxu0 0
          %2000 = vmatpush1.bf16.msra.mxu0 %v1976
          %2001 = vmatprep.subr.bf16.mxu0 0
          %2002 = vmatpush1.bf16.msra.mxu0 0
          %2003 = vmatprep.subr.bf16.mxu0 0
          %2004 = vmatpush1.bf16.msra.mxu0 0
          %2005 = vmatprep.subr.bf16.mxu0 0
          %2006 = vmatpush1.bf16.msra.mxu0 0
          %2007 = vmatprep.subr.bf16.mxu0 0
          %2008 = vmatpush1.bf16.msra.mxu0 0
          %2009 = vmatprep.subr.bf16.mxu0 0
          %2010 = vmatpush1.bf16.msra.mxu0 0
          %2011 = vmatprep.subr.bf16.mxu0 0
          %2012 = vmatpush1.bf16.msra.mxu0 0
          %2013 = vmatprep.subr.bf16.mxu0 0
          %2014 = vmatpush1.bf16.msra.mxu0 0
          %2015 = vmatprep.subr.bf16.mxu0 0
          %2016 = vmatpush1.bf16.msra.mxu0 0
          %2017 = vmatprep.mubr.bf16.mxu0 0
          %2018 = vmatmul.mubr.bf16.gmra.mrb[0].mxu0 %v1919
          %v2019 = vpop.f32.mrb[0].mxu0
          %v2020 = vadd.f32 0.0, %v2019
          %v2021 = vpop.f32.mrb[0].mxu0
          %v2022 = vpop.f32.mrb[0].mxu0
          %v2023 = vadd.f32 0.0, %v2022
          %v2024 = vpop.f32.mrb[0].mxu0
          %2025 = vmatprep.mubr.bf16.mxu0 0
          %2026 = vmatmul.mubr.bf16.gmra.mrb[0].mxu0 %v1920
          %v2027 = vpop.f32.mrb[0].mxu0
          %v2028 = vadd.f32 0.0, %v2027
          %v2029 = vpop.f32.mrb[0].mxu0
          %v2030 = vpop.f32.mrb[0].mxu0
          %v2031 = vadd.f32 0.0, %v2030
          %v2032 = vpop.f32.mrb[0].mxu0
          %2033 = vdwg.mxu0
          %v2034 = vlaneseq
          %v2035 = vand.u32 %v2034, 127
          %vm2036 = vcmp.lt.s32.totalorder %v2035, 48
          %v2037 = vadd.f32 %v1891, %v2020
          %v2038 = vadd.f32 %v1892, %v2023
          %v2039 = vadd.f32 %v1893, %v2028
          %v2040 = vadd.f32 %v1894, %v2031
          %v2041 = vsel %vm2036, %v2037, 0.0
          %v2042 = vsel %vm2036, %v2038, 0.0
          %v2043 = vsel %vm2036, %v2039, 0.0
          %v2044 = vsel %vm2036, %v2040, 0.0
          %2045 = vadd.xlane.f32.xlu0 %v2041
          %v2046 = vpop.xlane.xlu0 %2045
          %2047 = vadd.xlane.f32.xlu0 %v2042
          %v2048 = vpop.xlane.xlu0 %2047
          %2049 = vadd.xlane.f32.xlu0 %v2043
          %v2050 = vpop.xlane.xlu0 %2049
          %2051 = vadd.xlane.f32.xlu0 %v2044
          %v2052 = vpop.xlane.xlu0 %2051
          %v2053 = vmul.f32 %v2046, 0.020833334
          %v2054 = vmul.f32 %v2048, 0.020833334
          %v2055 = vmul.f32 %v2050, 0.020833334
          %v2056 = vmul.f32 %v2052, 0.020833334
          %v2057 = vsub.f32 %v2041, %v2053
          %v2058 = vsub.f32 %v2042, %v2054
          %v2059 = vsub.f32 %v2043, %v2055
          %v2060 = vsub.f32 %v2044, %v2056
          %v2061 = vsel %vm2036, %v2057, 0.0
          %v2062 = vsel %vm2036, %v2058, 0.0
          %v2063 = vsel %vm2036, %v2059, 0.0
          %v2064 = vsel %vm2036, %v2060, 0.0
          %v2065 = vmul.f32 %v2061, %v2061
          %v2066 = vmul.f32 %v2062, %v2062
          %v2067 = vmul.f32 %v2063, %v2063
          %v2068 = vmul.f32 %v2064, %v2064
          %2069 = vadd.xlane.f32.xlu0 %v2065
          %v2070 = vpop.xlane.xlu0 %2069
          %2071 = vadd.xlane.f32.xlu0 %v2066
          %v2072 = vpop.xlane.xlu0 %2071
          %2073 = vadd.xlane.f32.xlu0 %v2067
          %v2074 = vpop.xlane.xlu0 %2073
          %2075 = vadd.xlane.f32.xlu0 %v2068
          %v2076 = vpop.xlane.xlu0 %2075
          %v2077 = vmul.f32 %v2070, 0.020833334
          %v2078 = vmul.f32 %v2072, 0.020833334
          %v2079 = vmul.f32 %v2074, 0.020833334
          %v2080 = vmul.f32 %v2076, 0.020833334
          %v2081 = vadd.f32 %v2077, 1e-05
          %v2082 = vadd.f32 %v2078, 1e-05
          %v2083 = vadd.f32 %v2079, 1e-05
          %v2084 = vadd.f32 %v2080, 1e-05
          %v2085 = vrsqrt.pop %v2081
          %v2086 = vrsqrt.pop %v2082
          %v2087 = vrsqrt.pop %v2083
          %v2088 = vrsqrt.pop %v2084
          %v2089 = vmul.f32 %v2061, %v2085
          %v2090 = vmul.f32 %v2062, %v2086
          %v2091 = vmul.f32 %v2063, %v2087
          %v2092 = vmul.f32 %v2064, %v2088
          %v2093 = vld [vmem:[%s5] sm:$0x1]
          %v2095 = vlaneseq
          %v2096 = vshrl.u32 %v2095, 7
          %v2097 = vsub.s32 0, %v2096
          %v2098 = vrot.slane %v2093, %v2097
          %v2100 = vmul.f32 %v2089, %v2098
          %v2101 = vmul.f32 %v2090, %v2098
          %v2102 = vmul.f32 %v2091, %v2098
          %v2103 = vmul.f32 %v2092, %v2098
          %v2104 = vld [vmem:[%s6] sm:$0x1]
          %v2106 = vlaneseq
          %v2107 = vshrl.u32 %v2106, 7
          %v2108 = vsub.s32 0, %v2107
          %v2109 = vrot.slane %v2104, %v2108
          %v2111 = vadd.f32 %v2100, %v2109
          %v2112 = vadd.f32 %v2101, %v2109
          %v2113 = vadd.f32 %v2102, %v2109
          %v2114 = vadd.f32 %v2103, %v2109
          %2115 = vst [vmem:[%s733] sm:$0xff] %v2111
          %2116 = vst [vmem:[%s733 + $0x8] sm:$0xff] %v2112
          %2117 = vst [vmem:[%s733 + $0x10] sm:$0xff] %v2113
          %2118 = vst [vmem:[%s733 + $0x18] sm:$0xff] %v2114
        $region124: #{tpu_custom_call.1} parent=71 // pred_fallthru
          _
        %s2119 = sand.u32 %s364, 1
        %s2120 = scalar_lea.sflag [#allocation9], %s2119
        %s2121 = sand.u32 %s364, 1
        %s2122 = smul.addr %s2121, 32
        %s2123 = scalar_lea.vmem [#allocation25], %s2122
        // Predicated region
        $region125: #{tpu_custom_call.1} parent=71 // pred_check
          %p2124 = pneg %p374
        $region126: #{tpu_custom_call.1} parent=71 // pred_check_branch
          %2126 = sbr.rel (%p2124) target = $region128
        $region127: #{tpu_custom_call.1} parent=71 // pred_region
          %s2127 = smul.u32 4, %s45
          %s2129 = ssub.s32 512, 512
          %2130 = vsyncadd %s2120, %s2129
          %s2131 = smul.addr %s2127, 128
          %s2132 = scalar_lea.hbm %s13, %s2131
          %s2133 = sshll.u32 %s2123, 4
          %s2134 = int_to_ptr.vmem [resolvable:$true] %s2133
          %2139 = dma.vmem_to_hbm [thread:$0]  %s2134, 512, %s2132, %s2120, 128, 128, 8
        $region128: #{tpu_custom_call.1} parent=71 // pred_fallthru
          _
      $region72: #{tpu_custom_call.1} parent=5 // pred_fallthru
        _
      %p2140 = scmp.le.s32.totalorder 2, %s36
      // Predicated region
      $region129: #{tpu_custom_call.1} parent=5 // pred_check
        %p2141 = pneg %p2140
      $region130: #{tpu_custom_call.1} parent=5 // pred_check_branch
        %2143 = sbr.rel (%p2141) target = $region132
      $region131: #{tpu_custom_call.1} parent=5 // pred_region
        %s2144 = ssub.s32 %s36, 2
        // Predicated region
        $region133: #{tpu_custom_call.1} parent=131 // pred_check
          %p2145 = pneg %p380
        $region134: #{tpu_custom_call.1} parent=131 // pred_check_branch
          %2147 = sbr.rel (%p2145) target = $region136
        $region135: #{tpu_custom_call.1} parent=131 // pred_region
          %s2148 = sand.u32 %s365, 1
          %s2149 = scalar_lea.sflag [#allocation9], %s2148
          %s2150 = sand.u32 %s365, 1
          %s2151 = smul.addr %s2150, 32
          %s2152 = scalar_lea.vmem [#allocation25], %s2151
          %2153 = dma.done %s2149, 512
        $region136: #{tpu_custom_call.1} parent=131 // pred_fallthru
          _
      $region132: #{tpu_custom_call.1} parent=5 // pred_fallthru
        _
    $region6: #{tpu_custom_call.1} parent=1 // loop_footer
      %s40 = sadd.s32 1, %s36
    $region7: #{tpu_custom_call.1} parent=1 // loop_footer_branch
      %35 = sbr.rel target = $region3
    $region8: #{tpu_custom_call.1} parent=1 // loop_exit
      _
    %2154 = vsyncpa [#allocation8], 1
    %s2155 = scalar_lea.sflag [#allocation8], 1
    %2156 = vsyncpa %s2155, 1
    %2157 = vsyncpa [#allocation11], 1
    %2158 = vsyncpa [#allocation14], 1
    %2159 = vsyncpa [#allocation17], 1
    %s2160 = scalar_lea.sflag [#allocation17], 1
    %2161 = vsyncpa %s2160, 1
    %2162 = vsyncpa [#allocation20], 1
    %s2163 = scalar_lea.sflag [#allocation20], 1
    %2164 = vsyncpa %s2163, 1
    %2165 = vsyncpa [#allocation23], 1
    %s2166 = scalar_lea.sflag [#allocation23], 1
    %2167 = vsyncpa %s2166, 1
    %2168 = vsyncpa [#allocation9], 1
    %s2169 = scalar_lea.sflag [#allocation9], 1
    %2170 = vsyncpa %s2169, 1

// kernel: tpu_custom_call.1
$region0: #{tpu_custom_call.1}
  #allocation0 [shape = 'u32[]', space=smem, size = 0x4, offset = 0x4, fixed_abs, tag = 'smem constant byte address 0x4 - core index']
  #allocation1 [shape = 'u32[144,128]{1,0:T(1,128)}', space=vmem, size = 0x12000, scoped, tag = 'internal scratch']
  #allocation2 [shape = 'bf16[32,128]{1,0:T(16,128)(2,1)}', space=vmem, size = 0x2000, scoped, tag = 'scratch operand']
  #allocation3 [shape = 'bf16[32,128]{1,0:T(16,128)(2,1)}', space=vmem, size = 0x2000, scoped, tag = 'scratch operand']
  #allocation4 [shape = 'bf16[32,128]{1,0:T(16,128)(2,1)}', space=vmem, size = 0x2000, scoped, tag = 'scratch operand']
  #allocation5 [shape = 'f32[32,128]{1,0:T(8,128)}', space=vmem, size = 0x4000, scoped, tag = 'scratch operand']
  #allocation6 [shape = 'f32[32,128]{1,0:T(8,128)}', space=vmem, size = 0x4000, scoped, tag = 'scratch operand']
  %s0 = inlined_call_operand.hbm [shape: f32[64,128], index: 0, kind: input, shape index: {}]
  %s1 = inlined_call_operand.hbm [shape: bf16[128,128], index: 1, kind: input, shape index: {}]
  %s2 = inlined_call_operand.hbm [shape: bf16[128,128], index: 2, kind: input, shape index: {}]
  %s3 = inlined_call_operand.hbm [shape: bf16[128,128], index: 3, kind: input, shape index: {}]
  %s4 = inlined_call_operand.hbm [shape: bf16[128,128], index: 4, kind: input, shape index: {}]
  %s5 = inlined_call_operand.vmem [shape: f32[1,128], index: 5, kind: input, shape index: {}]
  %s6 = inlined_call_operand.vmem [shape: f32[1,128], index: 6, kind: input, shape index: {}]
  %s7 = inlined_call_operand.hbm [shape: bf16[128,384], index: 7, kind: input, shape index: {}]
  %s8 = inlined_call_operand.hbm [shape: bf16[128,384], index: 8, kind: input, shape index: {}]
  %s9 = inlined_call_operand.hbm [shape: bf16[384,128], index: 9, kind: input, shape index: {}]
  %s10 = inlined_call_operand.hbm [shape: bf16[128,384], index: 10, kind: input, shape index: {}]
  %s11 = inlined_call_operand.hbm [shape: bf16[384,128], index: 11, kind: input, shape index: {}]
  %s12 = inlined_call_operand.hbm [shape: bf16[128,128], index: 12, kind: input, shape index: {}]
  %s13 = inlined_call_operand.hbm [shape: f32[64,128], index: 13, kind: output, shape index: {}]
  %s14 = sld [smem:[#allocation0]]
  $region137: #{tpu_custom_call.1} parent=0
    _
  %s16 = ssub.s32 1, %s14
  %s17 = scalar_select 0, %s16, %s14
  $region1: #{tpu_custom_call.1} parent=0
    #allocation7 [shape = 'u8[32768]{0}', space=vmem, size = 0x8000, scoped, tag = 'input window, operand 0']
    #allocation8 [shape = 's32[2]{0}', space=sflag, size = 0x8, scoped, tag = 'scoped memory for tpu_custom_call.1']
    #allocation9 [shape = 's32[2]{0}', space=sflag, size = 0x8, scoped, tag = 'scoped memory for tpu_custom_call.1']
    #allocation10 [shape = 'u8[32768]{0}', space=vmem, size = 0x8000, scoped, tag = 'input window, operand 1, single buffered']
    #allocation11 [shape = 's32[1]{0}', space=sflag, size = 0x4, scoped, tag = 'scoped memory for tpu_custom_call.1']
    #allocation12 [shape = 'u8[32768]{0}', space=vmem, size = 0x8000, scoped, tag = 'input window, operand 2, single buffered']
    #allocation13 [shape = 'u8[32768]{0}', space=vmem, size = 0x8000, scoped, tag = 'input window, operand 3, single buffered']
    #allocation14 [shape = 's32[1]{0}', space=sflag, size = 0x4, scoped, tag = 'scoped memory for tpu_custom_call.1']
    #allocation15 [shape = 'u8[32768]{0}', space=vmem, size = 0x8000, scoped, tag = 'input window, operand 4, single buffered']
    #allocation16 [shape = 'u8[65536]{0}', space=vmem, size = 0x10000, scoped, tag = 'input window, operand 7']
    #allocation17 [shape = 's32[2]{0}', space=sflag, size = 0x8, scoped, tag = 'scoped memory for tpu_custom_call.1']
    #allocation18 [shape = 'u8[65536]{0}', space=vmem, size = 0x10000, scoped, tag = 'input window, operand 8']
    #allocation19 [shape = 'u8[65536]{0}', space=vmem, size = 0x10000, scoped, tag = 'input window, operand 9']
    #allocation20 [shape = 's32[2]{0}', space=sflag, size = 0x8, scoped, tag = 'scoped memory for tpu_custom_call.1']
    #allocation21 [shape = 'u8[65536]{0}', space=vmem, size = 0x10000, scoped, tag = 'input window, operand 10']
    #allocation22 [shape = 'u8[65536]{0}', space=vmem, size = 0x10000, scoped, tag = 'input window, operand 11']
    #allocation23 [shape = 's32[2]{0}', space=sflag, size = 0x8, scoped, tag = 'scoped memory for tpu_custom_call.1']
    #allocation24 [shape = 'u8[32768]{0}', space=vmem, size = 0x8000, scoped, tag = 'input window, operand 12, single buffered']
    #allocation25 [shape = 'u8[32768]{0}', space=vmem, size = 0x8000, scoped, tag = 'output window, operand 0']
    %18 = vsyncpa [#allocation8], 0
    %s19 = scalar_lea.sflag [#allocation8], 1
    %20 = vsyncpa %s19, 0
    %21 = vsyncpa [#allocation11], 0
    %22 = vsyncpa [#allocation14], 0
    %23 = vsyncpa [#allocation17], 0
    %s24 = scalar_lea.sflag [#allocation17], 1
    %25 = vsyncpa %s24, 0
    %26 = vsyncpa [#allocation20], 0
    %s27 = scalar_lea.sflag [#allocation20], 1
    %28 = vsyncpa %s27, 0
    %29 = vsyncpa [#allocation23], 0
    %s30 = scalar_lea.sflag [#allocation23], 1
    %31 = vsyncpa %s30, 0
    %32 = vsyncpa [#allocation9], 0
    %s33 = scalar_lea.sflag [#allocation9], 1
    %34 = vsyncpa %s33, 0
    loop: start=0, step=1, limit=8
    $region2: #{tpu_custom_call.1} parent=1 // loop_pre_header
      _
    $region3: #{tpu_custom_call.1} parent=1 // loop_header
      %s36 = sphi 0, %s40
      %p37 = scmp.ge.s32.totalorder %s36, 8
      %s43 = sphi 0, %s55
      %s44 = sphi 0, %s51
      %s45 = sphi 0, %s43
      %s46 = sphi 0, %s44
      %s47 = sphi 0, %s45
      %s48 = sphi 0, %s46
      %s58 = sphi 0, %s60
      %s61 = sphi 0, %s58
      %s62 = sphi 0, %s61
      %s78 = sphi 0, %s62
      %s82 = sphi 0, %s82
      %s84 = sphi 0, %s82
      %s85 = sphi 0, %s84
      %s99 = sphi 0, %s85
      %s103 = sphi 0, %s103
      %s105 = sphi 0, %s103
      %s106 = sphi 0, %s105
      %s120 = sphi 0, %s106
      %s124 = sphi 0, %s124
      %s126 = sphi 0, %s124
      %s127 = sphi 0, %s126
      %s141 = sphi 0, %s127
      %s145 = sphi 0, %s145
      %s147 = sphi 0, %s145
      %s148 = sphi 0, %s147
      %s162 = sphi 0, %s148
      %s166 = sphi 0, %s166
      %s168 = sphi 0, %s166
      %s169 = sphi 0, %s168
      %s183 = sphi 0, %s169
      %s187 = sphi 0, %s187
      %s189 = sphi 0, %s187
      %s190 = sphi 0, %s189
      %s204 = sphi 0, %s190
      %s210 = sphi 0, %s212
      %s213 = sphi 0, %s210
      %s214 = sphi 0, %s213
      %s230 = sphi 0, %s214
      %s236 = sphi 0, %s238
      %s239 = sphi 0, %s236
      %s240 = sphi 0, %s239
      %s256 = sphi 0, %s240
      %s262 = sphi 0, %s264
      %s265 = sphi 0, %s262
      %s266 = sphi 0, %s265
      %s282 = sphi 0, %s266
      %s288 = sphi 0, %s290
      %s291 = sphi 0, %s288
      %s292 = sphi 0, %s291
      %s308 = sphi 0, %s292
      %s314 = sphi 0, %s316
      %s317 = sphi 0, %s314
      %s318 = sphi 0, %s317
      %s334 = sphi 0, %s318
      %s338 = sphi 0, %s338
      %s340 = sphi 0, %s338
      %s341 = sphi 0, %s340
      %s355 = sphi 0, %s341
      %s361 = sphi 0, %s363
      %s364 = sphi 0, %s361
      %s365 = sphi 0, %s364
      %s381 = sphi 0, %s365
    $region4: #{tpu_custom_call.1} parent=1 // loop_header_branch
      %39 = sbr.rel (%p37) target = $region8
    $region5: #{tpu_custom_call.1} parent=1 // loop_body
      %s41 = ssub.s32 %s36, 1
      %s42 = ssub.s32 %s36, 2
      %s49 = sadd.s32 1, %s44
      %p50 = scmp.ge.s32.totalorder %s49, 3
      %s51 = scalar_select %p50, 0, %s49
      %s52 = sadd.s32 1, %s43
      %s53 = scalar_select %p50, %s52, %s43
      %p54 = scmp.ge.s32.totalorder %s53, 2
      %s55 = scalar_select %p54, 0, %s53
      %s56 = ssub.s32 %s43, %s55
      %p57 = scmp.eq.s32.totalorder %s56, 0
      %s59 = sadd.s32 %s58, 1
      %s60 = scalar_select %p57, %s58, %s59
      %p63 = pneg %p57
      %p64 = scmp.eq.s32.totalorder %s36, 5
      %p65 = por %p63, %p64
      %p66 = scmp.ne.s32.totalorder %s58, %s61
      %p67 = scmp.eq.s32.totalorder %s36, 0
      %p68 = por %p66, %p67
      %p69 = scmp.ne.s32.totalorder %s58, %s61
      %p70 = scmp.eq.s32.totalorder %s41, 5
      %p71 = por %p69, %p70
      %p72 = scmp.ne.s32.totalorder %s61, %s62
      %p73 = scmp.eq.s32.totalorder %s41, 0
      %p74 = por %p72, %p73
      %p75 = scmp.ne.s32.totalorder %s61, %s62
      %p76 = scmp.eq.s32.totalorder %s42, 5
      %p77 = por %p75, %p76
      %p79 = scmp.ne.s32.totalorder %s62, %s78
      %p80 = scmp.eq.s32.totalorder %s42, 0
      %p81 = por %p79, %p80
      %s83 = sadd.s32 %s82, 1
      %p86 = scmp.eq.s32.totalorder %s36, 5
      %p87 = scmp.ne.s32.totalorder %s82, %s84
      %p88 = scmp.eq.s32.totalorder %s36, 0
      %p89 = por %p87, %p88
      %p90 = scmp.ne.s32.totalorder %s82, %s84
      %p91 = scmp.eq.s32.totalorder %s41, 5
      %p92 = por %p90, %p91
      %p93 = scmp.ne.s32.totalorder %s84, %s85
      %p94 = scmp.eq.s32.totalorder %s41, 0
      %p95 = por %p93, %p94
      %p96 = scmp.ne.s32.totalorder %s84, %s85
      %p97 = scmp.eq.s32.totalorder %s42, 5
      %p98 = por %p96, %p97
      %p100 = scmp.ne.s32.totalorder %s85, %s99
      %p101 = scmp.eq.s32.totalorder %s42, 0
      %p102 = por %p100, %p101
      %s104 = sadd.s32 %s103, 1
      %p107 = scmp.eq.s32.totalorder %s36, 5
      %p108 = scmp.ne.s32.totalorder %s103, %s105
      %p109 = scmp.eq.s32.totalorder %s36, 0
      %p110 = por %p108, %p109
      %p111 = scmp.ne.s32.totalorder %s103, %s105
      %p112 = scmp.eq.s32.totalorder %s41, 5
      %p113 = por %p111, %p112
      %p114 = scmp.ne.s32.totalorder %s105, %s106
      %p115 = scmp.eq.s32.totalorder %s41, 0
      %p116 = por %p114, %p115
      %p117 = scmp.ne.s32.totalorder %s105, %s106
      %p118 = scmp.eq.s32.totalorder %s42, 5
      %p119 = por %p117, %p118
      %p121 = scmp.ne.s32.totalorder %s106, %s120
      %p122 = scmp.eq.s32.totalorder %s42, 0
      %p123 = por %p121, %p122
      %s125 = sadd.s32 %s124, 1
      %p128 = scmp.eq.s32.totalorder %s36, 5
      %p129 = scmp.ne.s32.totalorder %s124, %s126
      %p130 = scmp.eq.s32.totalorder %s36, 0
      %p131 = por %p129, %p130
      %p132 = scmp.ne.s32.totalorder %s124, %s126
      %p133 = scmp.eq.s32.totalorder %s41, 5
      %p134 = por %p132, %p133
      %p135 = scmp.ne.s32.totalorder %s126, %s127
      %p136 = scmp.eq.s32.totalorder %s41, 0
      %p137 = por %p135, %p136
      %p138 = scmp.ne.s32.totalorder %s126, %s127
      %p139 = scmp.eq.s32.totalorder %s42, 5
      %p140 = por %p138, %p139
      %p142 = scmp.ne.s32.totalorder %s127, %s141
      %p143 = scmp.eq.s32.totalorder %s42, 0
      %p144 = por %p142, %p143
      %s146 = sadd.s32 %s145, 1
      %p149 = scmp.eq.s32.totalorder %s36, 5
      %p150 = scmp.ne.s32.totalorder %s145, %s147
      %p151 = scmp.eq.s32.totalorder %s36, 0
      %p152 = por %p150, %p151
      %p153 = scmp.ne.s32.totalorder %s145, %s147
      %p154 = scmp.eq.s32.totalorder %s41, 5
      %p155 = por %p153, %p154
      %p156 = scmp.ne.s32.totalorder %s147, %s148
      %p157 = scmp.eq.s32.totalorder %s41, 0
      %p158 = por %p156, %p157
      %p159 = scmp.ne.s32.totalorder %s147, %s148
      %p160 = scmp.eq.s32.totalorder %s42, 5
      %p161 = por %p159, %p160
      %p163 = scmp.ne.s32.totalorder %s148, %s162
      %p164 = scmp.eq.s32.totalorder %s42, 0
      %p165 = por %p163, %p164
      %s167 = sadd.s32 %s166, 1
      %p170 = scmp.eq.s32.totalorder %s36, 5
      %p171 = scmp.ne.s32.totalorder %s166, %s168
      %p172 = scmp.eq.s32.totalorder %s36, 0
      %p173 = por %p171, %p172
      %p174 = scmp.ne.s32.totalorder %s166, %s168
      %p175 = scmp.eq.s32.totalorder %s41, 5
      %p176 = por %p174, %p175
      %p177 = scmp.ne.s32.totalorder %s168, %s169
      %p178 = scmp.eq.s32.totalorder %s41, 0
      %p179 = por %p177, %p178
      %p180 = scmp.ne.s32.totalorder %s168, %s169
      %p181 = scmp.eq.s32.totalorder %s42, 5
      %p182 = por %p180, %p181
      %p184 = scmp.ne.s32.totalorder %s169, %s183
      %p185 = scmp.eq.s32.totalorder %s42, 0
      %p186 = por %p184, %p185
      %s188 = sadd.s32 %s187, 1
      %p191 = scmp.eq.s32.totalorder %s36, 5
      %p192 = scmp.ne.s32.totalorder %s187, %s189
      %p193 = scmp.eq.s32.totalorder %s36, 0
      %p194 = por %p192, %p193
      %p195 = scmp.ne.s32.totalorder %s187, %s189
      %p196 = scmp.eq.s32.totalorder %s41, 5
      %p197 = por %p195, %p196
      %p198 = scmp.ne.s32.totalorder %s189, %s190
      %p199 = scmp.eq.s32.totalorder %s41, 0
      %p200 = por %p198, %p199
      %p201 = scmp.ne.s32.totalorder %s189, %s190
      %p202 = scmp.eq.s32.totalorder %s42, 5
      %p203 = por %p201, %p202
      %p205 = scmp.ne.s32.totalorder %s190, %s204
      %p206 = scmp.eq.s32.totalorder %s42, 0
      %p207 = por %p205, %p206
      %s208 = ssub.s32 %s44, %s51
      %p209 = scmp.eq.s32.totalorder %s208, 0
      %s211 = sadd.s32 %s210, 1
      %s212 = scalar_select %p209, %s210, %s211
      %p215 = pneg %p209
      %p216 = scmp.eq.s32.totalorder %s36, 5
      %p217 = por %p215, %p216
      %p218 = scmp.ne.s32.totalorder %s210, %s213
      %p219 = scmp.eq.s32.totalorder %s36, 0
      %p220 = por %p218, %p219
      %p221 = scmp.ne.s32.totalorder %s210, %s213
      %p222 = scmp.eq.s32.totalorder %s41, 5
      %p223 = por %p221, %p222
      %p224 = scmp.ne.s32.totalorder %s213, %s214
      %p225 = scmp.eq.s32.totalorder %s41, 0
      %p226 = por %p224, %p225
      %p227 = scmp.ne.s32.totalorder %s213, %s214
      %p228 = scmp.eq.s32.totalorder %s42, 5
      %p229 = por %p227, %p228
      %p231 = scmp.ne.s32.totalorder %s214, %s230
      %p232 = scmp.eq.s32.totalorder %s42, 0
      %p233 = por %p231, %p232
      %s234 = ssub.s32 %s44, %s51
      %p235 = scmp.eq.s32.totalorder %s234, 0
      %s237 = sadd.s32 %s236, 1
      %s238 = scalar_select %p235, %s236, %s237
      %p241 = pneg %p235
      %p242 = scmp.eq.s32.totalorder %s36, 5
      %p243 = por %p241, %p242
      %p244 = scmp.ne.s32.totalorder %s236, %s239
      %p245 = scmp.eq.s32.totalorder %s36, 0
      %p246 = por %p244, %p245
      %p247 = scmp.ne.s32.totalorder %s236, %s239
      %p248 = scmp.eq.s32.totalorder %s41, 5
      %p249 = por %p247, %p248
      %p250 = scmp.ne.s32.totalorder %s239, %s240
      %p251 = scmp.eq.s32.totalorder %s41, 0
      %p252 = por %p250, %p251
      %p253 = scmp.ne.s32.totalorder %s239, %s240
      %p254 = scmp.eq.s32.totalorder %s42, 5
      %p255 = por %p253, %p254
      %p257 = scmp.ne.s32.totalorder %s240, %s256
      %p258 = scmp.eq.s32.totalorder %s42, 0
      %p259 = por %p257, %p258
      %s260 = ssub.s32 %s44, %s51
      %p261 = scmp.eq.s32.totalorder %s260, 0
      %s263 = sadd.s32 %s262, 1
      %s264 = scalar_select %p261, %s262, %s263
      %p267 = pneg %p261
      %p268 = scmp.eq.s32.totalorder %s36, 5
      %p269 = por %p267, %p268
      %p270 = scmp.ne.s32.totalorder %s262, %s265
      %p271 = scmp.eq.s32.totalorder %s36, 0
      %p272 = por %p270, %p271
      %p273 = scmp.ne.s32.totalorder %s262, %s265
      %p274 = scmp.eq.s32.totalorder %s41, 5
      %p275 = por %p273, %p274
      %p276 = scmp.ne.s32.totalorder %s265, %s266
      %p277 = scmp.eq.s32.totalorder %s41, 0
      %p278 = por %p276, %p277
      %p279 = scmp.ne.s32.totalorder %s265, %s266
      %p280 = scmp.eq.s32.totalorder %s42, 5
      %p281 = por %p279, %p280
      %p283 = scmp.ne.s32.totalorder %s266, %s282
      %p284 = scmp.eq.s32.totalorder %s42, 0
      %p285 = por %p283, %p284
      %s286 = ssub.s32 %s44, %s51
      %p287 = scmp.eq.s32.totalorder %s286, 0
      %s289 = sadd.s32 %s288, 1
      %s290 = scalar_select %p287, %s288, %s289
      %p293 = pneg %p287
      %p294 = scmp.eq.s32.totalorder %s36, 5
      %p295 = por %p293, %p294
      %p296 = scmp.ne.s32.totalorder %s288, %s291
      %p297 = scmp.eq.s32.totalorder %s36, 0
      %p298 = por %p296, %p297
      %p299 = scmp.ne.s32.totalorder %s288, %s291
      %p300 = scmp.eq.s32.totalorder %s41, 5
      %p301 = por %p299, %p300
      %p302 = scmp.ne.s32.totalorder %s291, %s292
      %p303 = scmp.eq.s32.totalorder %s41, 0
      %p304 = por %p302, %p303
      %p305 = scmp.ne.s32.totalorder %s291, %s292
      %p306 = scmp.eq.s32.totalorder %s42, 5
      %p307 = por %p305, %p306
      %p309 = scmp.ne.s32.totalorder %s292, %s308
      %p310 = scmp.eq.s32.totalorder %s42, 0
      %p311 = por %p309, %p310
      %s312 = ssub.s32 %s44, %s51
      %p313 = scmp.eq.s32.totalorder %s312, 0
      %s315 = sadd.s32 %s314, 1
      %s316 = scalar_select %p313, %s314, %s315
      %p319 = pneg %p313
      %p320 = scmp.eq.s32.totalorder %s36, 5
      %p321 = por %p319, %p320
      %p322 = scmp.ne.s32.totalorder %s314, %s317
      %p323 = scmp.eq.s32.totalorder %s36, 0
      %p324 = por %p322, %p323
      %p325 = scmp.ne.s32.totalorder %s314, %s317
      %p326 = scmp.eq.s32.totalorder %s41, 5
      %p327 = por %p325, %p326
      %p328 = scmp.ne.s32.totalorder %s317, %s318
      %p329 = scmp.eq.s32.totalorder %s41, 0
      %p330 = por %p328, %p329
      %p331 = scmp.ne.s32.totalorder %s317, %s318
      %p332 = scmp.eq.s32.totalorder %s42, 5
      %p333 = por %p331, %p332
      %p335 = scmp.ne.s32.totalorder %s318, %s334
      %p336 = scmp.eq.s32.totalorder %s42, 0
      %p337 = por %p335, %p336
      %s339 = sadd.s32 %s338, 1
      %p342 = scmp.eq.s32.totalorder %s36, 5
      %p343 = scmp.ne.s32.totalorder %s338, %s340
      %p344 = scmp.eq.s32.totalorder %s36, 0
      %p345 = por %p343, %p344
      %p346 = scmp.ne.s32.totalorder %s338, %s340
      %p347 = scmp.eq.s32.totalorder %s41, 5
      %p348 = por %p346, %p347
      %p349 = scmp.ne.s32.totalorder %s340, %s341
      %p350 = scmp.eq.s32.totalorder %s41, 0
      %p351 = por %p349, %p350
      %p352 = scmp.ne.s32.totalorder %s340, %s341
      %p353 = scmp.eq.s32.totalorder %s42, 5
      %p354 = por %p352, %p353
      %p356 = scmp.ne.s32.totalorder %s341, %s355
      %p357 = scmp.eq.s32.totalorder %s42, 0
      %p358 = por %p356, %p357
      %s359 = ssub.s32 %s43, %s55
      %p360 = scmp.eq.s32.totalorder %s359, 0
      %s362 = sadd.s32 %s361, 1
      %s363 = scalar_select %p360, %s361, %s362
      %p366 = pneg %p360
      %p367 = scmp.eq.s32.totalorder %s36, 5
      %p368 = por %p366, %p367
      %p369 = scmp.ne.s32.totalorder %s361, %s364
      %p370 = scmp.eq.s32.totalorder %s36, 0
      %p371 = por %p369, %p370
      %p372 = scmp.ne.s32.totalorder %s361, %s364
      %p373 = scmp.eq.s32.totalorder %s41, 5
      %p374 = por %p372, %p373
      %p375 = scmp.ne.s32.totalorder %s364, %s365
      %p376 = scmp.eq.s32.totalorder %s41, 0
      %p377 = por %p375, %p376
      %p378 = scmp.ne.s32.totalorder %s364, %s365
      %p379 = scmp.eq.s32.totalorder %s42, 5
      %p380 = por %p378, %p379
      %p382 = scmp.ne.s32.totalorder %s365, %s381
      %p383 = scmp.eq.s32.totalorder %s42, 0
      %p384 = por %p382, %p383
      %p385 = scmp.le.s32.totalorder 1, %s36
      %p386 = scmp.lt.s32.totalorder %s36, 7
      %p387 = pnand %p385, %p386
      %p388 = pneg %p387
      // Predicated region
      $region9: #{tpu_custom_call.1} parent=5 // pred_check
        _
      $region10: #{tpu_custom_call.1} parent=5 // pred_check_branch
        %390 = sbr.rel (%p387) target = $region12
      $region11: #{tpu_custom_call.1} parent=5 // pred_region
        %s391 = ssub.s32 %s36, 1
        // Predicated region
        $region13: #{tpu_custom_call.1} parent=11 // pred_check
          %p392 = pneg %p95
        $region14: #{tpu_custom_call.1} parent=11 // pred_check_branch
          %394 = sbr.rel (%p392) target = $region16
        $region15: #{tpu_custom_call.1} parent=11 // pred_region
          %s396 = ssub.s32 1024, 1024
          %397 = vsyncadd [#allocation11], %s396
          %s398 = sshll.u32 [#allocation10], 4
          %s399 = int_to_ptr.vmem [resolvable:$true] %s398
          %404 = dma.hbm_to_vmem [thread:$0]  %s1, 1024, %s399, [#allocation11], 64, 64, 4
        $region16: #{tpu_custom_call.1} parent=11 // pred_fallthru
          _
        // Predicated region
        $region17: #{tpu_custom_call.1} parent=11 // pred_check
          %p405 = pneg %p116
        $region18: #{tpu_custom_call.1} parent=11 // pred_check_branch
          %407 = sbr.rel (%p405) target = $region20
        $region19: #{tpu_custom_call.1} parent=11 // pred_region
          %s409 = ssub.s32 1024, 1024
          %410 = vsyncadd [#allocation11], %s409
          %s411 = sshll.u32 [#allocation12], 4
          %s412 = int_to_ptr.vmem [resolvable:$true] %s411
          %417 = dma.hbm_to_vmem [thread:$0]  %s2, 1024, %s412, [#allocation11], 64, 64, 4
        $region20: #{tpu_custom_call.1} parent=11 // pred_fallthru
          _
        // Predicated region
        $region21: #{tpu_custom_call.1} parent=11 // pred_check
          %p418 = pneg %p137
        $region22: #{tpu_custom_call.1} parent=11 // pred_check_branch
          %420 = sbr.rel (%p418) target = $region24
        $region23: #{tpu_custom_call.1} parent=11 // pred_region
          %s422 = ssub.s32 1024, 1024
          %423 = vsyncadd [#allocation14], %s422
          %s424 = sshll.u32 [#allocation13], 4
          %s425 = int_to_ptr.vmem [resolvable:$true] %s424
          %430 = dma.hbm_to_vmem [thread:$0]  %s3, 1024, %s425, [#allocation14], 64, 64, 4
        $region24: #{tpu_custom_call.1} parent=11 // pred_fallthru
          _
        // Predicated region
        $region25: #{tpu_custom_call.1} parent=11 // pred_check
          %p431 = pneg %p158
        $region26: #{tpu_custom_call.1} parent=11 // pred_check_branch
          %433 = sbr.rel (%p431) target = $region28
        $region27: #{tpu_custom_call.1} parent=11 // pred_region
          %s435 = ssub.s32 1024, 1024
          %436 = vsyncadd [#allocation14], %s435
          %s437 = sshll.u32 [#allocation15], 4
          %s438 = int_to_ptr.vmem [resolvable:$true] %s437
          %443 = dma.hbm_to_vmem [thread:$0]  %s4, 1024, %s438, [#allocation14], 64, 64, 4
        $region28: #{tpu_custom_call.1} parent=11 // pred_fallthru
          _
        // Predicated region
        $region29: #{tpu_custom_call.1} parent=11 // pred_check
          %p444 = pneg %p179
        $region30: #{tpu_custom_call.1} parent=11 // pred_check_branch
          %446 = sbr.rel (%p444) target = $region32
        $region31: #{tpu_custom_call.1} parent=11 // pred_region
          _
        $region32: #{tpu_custom_call.1} parent=11 // pred_fallthru
          _
        // Predicated region
        $region33: #{tpu_custom_call.1} parent=11 // pred_check
          %p447 = pneg %p200
        $region34: #{tpu_custom_call.1} parent=11 // pred_check_branch
          %449 = sbr.rel (%p447) target = $region36
        $region35: #{tpu_custom_call.1} parent=11 // pred_region
          _
        $region36: #{tpu_custom_call.1} parent=11 // pred_fallthru
          _
        // Predicated region
        $region37: #{tpu_custom_call.1} parent=11 // pred_check
          %p450 = pneg %p351
        $region38: #{tpu_custom_call.1} parent=11 // pred_check_branch
          %452 = sbr.rel (%p450) target = $region40
        $region39: #{tpu_custom_call.1} parent=11 // pred_region
          %s454 = ssub.s32 1024, 1024
          %455 = vsyncadd [#allocation23], %s454
          %s456 = sshll.u32 [#allocation24], 4
          %s457 = int_to_ptr.vmem [resolvable:$true] %s456
          %462 = dma.hbm_to_vmem [thread:$0]  %s12, 1024, %s457, [#allocation23], 64, 64, 4
        $region40: #{tpu_custom_call.1} parent=11 // pred_fallthru
          _
      $region12: #{tpu_custom_call.1} parent=5 // pred_fallthru
        _
      %p463 = scmp.lt.s32.totalorder %s36, 6
      // Predicated region
      $region41: #{tpu_custom_call.1} parent=5 // pred_check
        %p464 = pneg %p463
      $region42: #{tpu_custom_call.1} parent=5 // pred_check_branch
        %466 = sbr.rel (%p464) target = $region44
      $region43: #{tpu_custom_call.1} parent=5 // pred_region
        // Predicated region
        $region45: #{tpu_custom_call.1} parent=43 // pred_check
          %p467 = pneg %p68
        $region46: #{tpu_custom_call.1} parent=43 // pred_check_branch
          %469 = sbr.rel (%p467) target = $region48
        $region47: #{tpu_custom_call.1} parent=43 // pred_region
          %s470 = sand.u32 %s58, 1
          %s471 = scalar_lea.sflag [#allocation8], %s470
          %s472 = sand.u32 %s58, 1
          %s473 = smul.addr %s472, 32
          %s474 = scalar_lea.vmem [#allocation7], %s473
          %s475 = smul.u32 4, %s43
          %s477 = ssub.s32 512, 512
          %478 = vsyncadd %s471, %s477
          %s479 = smul.addr %s475, 128
          %s480 = scalar_lea.hbm %s0, %s479
          %s481 = sshll.u32 %s474, 4
          %s482 = int_to_ptr.vmem [resolvable:$true] %s481
          %487 = dma.hbm_to_vmem [thread:$0]  %s480, 512, %s482, %s471, 128, 128, 8
        $region48: #{tpu_custom_call.1} parent=43 // pred_fallthru
          _
        // Predicated region
        $region49: #{tpu_custom_call.1} parent=43 // pred_check
          %p488 = pneg %p220
        $region50: #{tpu_custom_call.1} parent=43 // pred_check_branch
          %490 = sbr.rel (%p488) target = $region52
        $region51: #{tpu_custom_call.1} parent=43 // pred_region
          %s491 = sand.u32 %s36, 1
          %s492 = scalar_lea.sflag [#allocation17], %s491
          %s493 = sand.u32 %s210, 1
          %s494 = smul.addr %s493, 64
          %s495 = scalar_lea.vmem [#allocation16], %s494
          %s497 = ssub.s32 1024, 1024
          %498 = vsyncadd %s492, %s497
          %s499 = smul.addr %s44, 64
          %s500 = scalar_lea.hbm %s7, %s499
          %s501 = sshll.u32 %s495, 4
          %s502 = int_to_ptr.vmem [resolvable:$true] %s501
          %507 = dma.hbm_to_vmem [thread:$0]  %s500, 1024, %s502, %s492, 192, 64, 4
        $region52: #{tpu_custom_call.1} parent=43 // pred_fallthru
          _
        // Predicated region
        $region53: #{tpu_custom_call.1} parent=43 // pred_check
          %p508 = pneg %p246
        $region54: #{tpu_custom_call.1} parent=43 // pred_check_branch
          %510 = sbr.rel (%p508) target = $region56
        $region55: #{tpu_custom_call.1} parent=43 // pred_region
          %s511 = sand.u32 %s36, 1
          %s512 = scalar_lea.sflag [#allocation17], %s511
          %s513 = sand.u32 %s236, 1
          %s514 = smul.addr %s513, 64
          %s515 = scalar_lea.vmem [#allocation18], %s514
          %s517 = ssub.s32 1024, 1024
          %518 = vsyncadd %s512, %s517
          %s519 = smul.addr %s44, 64
          %s520 = scalar_lea.hbm %s8, %s519
          %s521 = sshll.u32 %s515, 4
          %s522 = int_to_ptr.vmem [resolvable:$true] %s521
          %527 = dma.hbm_to_vmem [thread:$0]  %s520, 1024, %s522, %s512, 192, 64, 4
        $region56: #{tpu_custom_call.1} parent=43 // pred_fallthru
          _
        // Predicated region
        $region57: #{tpu_custom_call.1} parent=43 // pred_check
          %p528 = pneg %p272
        $region58: #{tpu_custom_call.1} parent=43 // pred_check_branch
          %530 = sbr.rel (%p528) target = $region60
        $region59: #{tpu_custom_call.1} parent=43 // pred_region
          %s531 = sand.u32 %s36, 1
          %s532 = scalar_lea.sflag [#allocation20], %s531
          %s533 = sand.u32 %s262, 1
          %s534 = smul.addr %s533, 64
          %s535 = scalar_lea.vmem [#allocation19], %s534
          %s536 = smul.u32 16, %s44
          %s538 = ssub.s32 1024, 1024
          %539 = vsyncadd %s532, %s538
          %s540 = smul.addr %s536, 64
          %s541 = scalar_lea.hbm %s9, %s540
          %s542 = sshll.u32 %s535, 4
          %s543 = int_to_ptr.vmem [resolvable:$true] %s542
          %548 = dma.hbm_to_vmem [thread:$0]  %s541, 1024, %s543, %s532, 64, 64, 4
        $region60: #{tpu_custom_call.1} parent=43 // pred_fallthru
          _
        // Predicated region
        $region61: #{tpu_custom_call.1} parent=43 // pred_check
          %p549 = pneg %p298
        $region62: #{tpu_custom_call.1} parent=43 // pred_check_branch
          %551 = sbr.rel (%p549) target = $region64
        $region63: #{tpu_custom_call.1} parent=43 // pred_region
          %s552 = sand.u32 %s36, 1
          %s553 = scalar_lea.sflag [#allocation20], %s552
          %s554 = sand.u32 %s288, 1
          %s555 = smul.addr %s554, 64
          %s556 = scalar_lea.vmem [#allocation21], %s555
          %s558 = ssub.s32 1024, 1024
          %559 = vsyncadd %s553, %s558
          %s560 = smul.addr %s44, 64
          %s561 = scalar_lea.hbm %s10, %s560
          %s562 = sshll.u32 %s556, 4
          %s563 = int_to_ptr.vmem [resolvable:$true] %s562
          %568 = dma.hbm_to_vmem [thread:$0]  %s561, 1024, %s563, %s553, 192, 64, 4
        $region64: #{tpu_custom_call.1} parent=43 // pred_fallthru
          _
        // Predicated region
        $region65: #{tpu_custom_call.1} parent=43 // pred_check
          %p569 = pneg %p324
        $region66: #{tpu_custom_call.1} parent=43 // pred_check_branch
          %571 = sbr.rel (%p569) target = $region68
        $region67: #{tpu_custom_call.1} parent=43 // pred_region
          %s572 = sand.u32 %s36, 1
          %s573 = scalar_lea.sflag [#allocation23], %s572
          %s574 = sand.u32 %s314, 1
          %s575 = smul.addr %s574, 64
          %s576 = scalar_lea.vmem [#allocation22], %s575
          %s577 = smul.u32 16, %s44
          %s579 = ssub.s32 1024, 1024
          %580 = vsyncadd %s573, %s579
          %s581 = smul.addr %s577, 64
          %s582 = scalar_lea.hbm %s11, %s581
          %s583 = sshll.u32 %s576, 4
          %s584 = int_to_ptr.vmem [resolvable:$true] %s583
          %589 = dma.hbm_to_vmem [thread:$0]  %s582, 1024, %s584, %s573, 64, 64, 4
        $region68: #{tpu_custom_call.1} parent=43 // pred_fallthru
          _
      $region44: #{tpu_custom_call.1} parent=5 // pred_fallthru
        _
      %p590 = scmp.le.s32.totalorder 1, %s36
      %p591 = scmp.lt.s32.totalorder %s36, 7
      %p592 = pnand %p590, %p591
      %p593 = pneg %p592
      // Predicated region
      $region69: #{tpu_custom_call.1} parent=5 // pred_check
        _
      $region70: #{tpu_custom_call.1} parent=5 // pred_check_branch
        %595 = sbr.rel (%p592) target = $region72
      $region71: #{tpu_custom_call.1} parent=5 // pred_region
        %s596 = ssub.s32 %s36, 1
        %s597 = sand.u32 %s61, 1
        %s598 = scalar_lea.sflag [#allocation8], %s597
        %s599 = sand.u32 %s61, 1
        %s600 = smul.addr %s599, 32
        %s601 = scalar_lea.vmem [#allocation7], %s600
        // Predicated region
        $region73: #{tpu_custom_call.1} parent=71 // pred_check
          %p602 = pneg %p74
        $region74: #{tpu_custom_call.1} parent=71 // pred_check_branch
          %604 = sbr.rel (%p602) target = $region76
        $region75: #{tpu_custom_call.1} parent=71 // pred_region
          %605 = dma.done %s598, 512
        $region76: #{tpu_custom_call.1} parent=71 // pred_fallthru
          _
        // Predicated region
        $region77: #{tpu_custom_call.1} parent=71 // pred_check
          %p606 = pneg %p95
        $region78: #{tpu_custom_call.1} parent=71 // pred_check_branch
          %608 = sbr.rel (%p606) target = $region80
        $region79: #{tpu_custom_call.1} parent=71 // pred_region
          %609 = dma.done [#allocation11], 1024
        $region80: #{tpu_custom_call.1} parent=71 // pred_fallthru
          _
        // Predicated region
        $region81: #{tpu_custom_call.1} parent=71 // pred_check
          %p610 = pneg %p116
        $region82: #{tpu_custom_call.1} parent=71 // pred_check_branch
          %612 = sbr.rel (%p610) target = $region84
        $region83: #{tpu_custom_call.1} parent=71 // pred_region
          %613 = dma.done [#allocation11], 1024
        $region84: #{tpu_custom_call.1} parent=71 // pred_fallthru
          _
        // Predicated region
        $region85: #{tpu_custom_call.1} parent=71 // pred_check
          %p614 = pneg %p137
        $region86: #{tpu_custom_call.1} parent=71 // pred_check_branch
          %616 = sbr.rel (%p614) target = $region88
        $region87: #{tpu_custom_call.1} parent=71 // pred_region
          %617 = dma.done [#allocation14], 1024
        $region88: #{tpu_custom_call.1} parent=71 // pred_fallthru
          _
        // Predicated region
        $region89: #{tpu_custom_call.1} parent=71 // pred_check
          %p618 = pneg %p158
        $region90: #{tpu_custom_call.1} parent=71 // pred_check_branch
          %620 = sbr.rel (%p618) target = $region92
        $region91: #{tpu_custom_call.1} parent=71 // pred_region
          %621 = dma.done [#allocation14], 1024
        $region92: #{tpu_custom_call.1} parent=71 // pred_fallthru
          _
        %s622 = sand.u32 %s41, 1
        %s623 = scalar_lea.sflag [#allocation17], %s622
        %s624 = sand.u32 %s213, 1
        %s625 = smul.addr %s624, 64
        %s626 = scalar_lea.vmem [#allocation16], %s625
        // Predicated region
        $region93: #{tpu_custom_call.1} parent=71 // pred_check
          %p627 = pneg %p226
        $region94: #{tpu_custom_call.1} parent=71 // pred_check_branch
          %629 = sbr.rel (%p627) target = $region96
        $region95: #{tpu_custom_call.1} parent=71 // pred_region
          %630 = dma.done %s623, 1024
        $region96: #{tpu_custom_call.1} parent=71 // pred_fallthru
          _
        %s631 = sand.u32 %s41, 1
        %s632 = scalar_lea.sflag [#allocation17], %s631
        %s633 = sand.u32 %s239, 1
        %s634 = smul.addr %s633, 64
        %s635 = scalar_lea.vmem [#allocation18], %s634
        // Predicated region
        $region97: #{tpu_custom_call.1} parent=71 // pred_check
          %p636 = pneg %p252
        $region98: #{tpu_custom_call.1} parent=71 // pred_check_branch
          %638 = sbr.rel (%p636) target = $region100
        $region99: #{tpu_custom_call.1} parent=71 // pred_region
          %639 = dma.done %s632, 1024
        $region100: #{tpu_custom_call.1} parent=71 // pred_fallthru
          _
        %s640 = sand.u32 %s41, 1
        %s641 = scalar_lea.sflag [#allocation20], %s640
        %s642 = sand.u32 %s265, 1
        %s643 = smul.addr %s642, 64
        %s644 = scalar_lea.vmem [#allocation19], %s643
        // Predicated region
        $region101: #{tpu_custom_call.1} parent=71 // pred_check
          %p645 = pneg %p278
        $region102: #{tpu_custom_call.1} parent=71 // pred_check_branch
          %647 = sbr.rel (%p645) target = $region104
        $region103: #{tpu_custom_call.1} parent=71 // pred_region
          %648 = dma.done %s641, 1024
        $region104: #{tpu_custom_call.1} parent=71 // pred_fallthru
          _
        %s649 = sand.u32 %s41, 1
        %s650 = scalar_lea.sflag [#allocation20], %s649
        %s651 = sand.u32 %s291, 1
        %s652 = smul.addr %s651, 64
        %s653 = scalar_lea.vmem [#allocation21], %s652
        // Predicated region
        $region105: #{tpu_custom_call.1} parent=71 // pred_check
          %p654 = pneg %p304
        $region106: #{tpu_custom_call.1} parent=71 // pred_check_branch
          %656 = sbr.rel (%p654) target = $region108
        $region107: #{tpu_custom_call.1} parent=71 // pred_region
          %657 = dma.done %s650, 1024
        $region108: #{tpu_custom_call.1} parent=71 // pred_fallthru
          _
        %s658 = sand.u32 %s41, 1
        %s659 = scalar_lea.sflag [#allocation23], %s658
        %s660 = sand.u32 %s317, 1
        %s661 = smul.addr %s660, 64
        %s662 = scalar_lea.vmem [#allocation22], %s661
        // Predicated region
        $region109: #{tpu_custom_call.1} parent=71 // pred_check
          %p663 = pneg %p330
        $region110: #{tpu_custom_call.1} parent=71 // pred_check_branch
          %665 = sbr.rel (%p663) target = $region112
        $region111: #{tpu_custom_call.1} parent=71 // pred_region
          %666 = dma.done %s659, 1024
        $region112: #{tpu_custom_call.1} parent=71 // pred_fallthru
          _
        // Predicated region
        $region113: #{tpu_custom_call.1} parent=71 // pred_check
          %p667 = pneg %p351
        $region114: #{tpu_custom_call.1} parent=71 // pred_check_branch
          %669 = sbr.rel (%p667) target = $region116
        $region115: #{tpu_custom_call.1} parent=71 // pred_region
          %670 = dma.done [#allocation23], 1024
        $region116: #{tpu_custom_call.1} parent=71 // pred_fallthru
          _
        %s671 = sand.u32 %s61, 1
        %s672 = scalar_lea.sflag [#allocation8], %s671
        %s673 = sand.u32 %s61, 1
        %s674 = smul.addr %s673, 32
        %s675 = scalar_lea.vmem [#allocation7], %s674
        %p676 = pneg %p74
        %p677 = pneg %p71
        %p678 = pneg %p95
        %p679 = pneg %p92
        %p680 = pneg %p116
        %p681 = pneg %p113
        %p682 = pneg %p137
        %p683 = pneg %p134
        %p684 = pneg %p158
        %p685 = pneg %p155
        %p686 = pneg %p179
        %p687 = pneg %p176
        %p688 = pneg %p200
        %p689 = pneg %p197
        %s690 = sand.u32 %s41, 1
        %s691 = scalar_lea.sflag [#allocation17], %s690
        %s692 = sand.u32 %s213, 1
        %s693 = smul.addr %s692, 64
        %s694 = scalar_lea.vmem [#allocation16], %s693
        %p695 = pneg %p226
        %p696 = pneg %p223
        %s697 = sand.u32 %s41, 1
        %s698 = scalar_lea.sflag [#allocation17], %s697
        %s699 = sand.u32 %s239, 1
        %s700 = smul.addr %s699, 64
        %s701 = scalar_lea.vmem [#allocation18], %s700
        %p702 = pneg %p252
        %p703 = pneg %p249
        %s704 = sand.u32 %s41, 1
        %s705 = scalar_lea.sflag [#allocation20], %s704
        %s706 = sand.u32 %s265, 1
        %s707 = smul.addr %s706, 64
        %s708 = scalar_lea.vmem [#allocation19], %s707
        %p709 = pneg %p278
        %p710 = pneg %p275
        %s711 = sand.u32 %s41, 1
        %s712 = scalar_lea.sflag [#allocation20], %s711
        %s713 = sand.u32 %s291, 1
        %s714 = smul.addr %s713, 64
        %s715 = scalar_lea.vmem [#allocation21], %s714
        %p716 = pneg %p304
        %p717 = pneg %p301
        %s718 = sand.u32 %s41, 1
        %s719 = scalar_lea.sflag [#allocation23], %s718
        %s720 = sand.u32 %s317, 1
        %s721 = smul.addr %s720, 64
        %s722 = scalar_lea.vmem [#allocation22], %s721
        %p723 = pneg %p330
        %p724 = pneg %p327
        %p725 = pneg %p351
        %p726 = pneg %p348
        %p727 = pneg %p377
        %p728 = pneg %p374
        %s729 = sand.u32 %s364, 1
        %s730 = scalar_lea.sflag [#allocation9], %s729
        %s731 = sand.u32 %s364, 1
        %s732 = smul.addr %s731, 32
        %s733 = scalar_lea.vmem [#allocation25], %s732
        %s734 = smul.u32 4, %s45
        %s735 = smul.u32 16, %s46
        %s736 = smul.u32 16, %s46
        %s737 = smul.u32 4, %s45
        %p739 = scmp.eq.s32.totalorder %s46, 0
        // Predicated region
        $region117: #{tpu_custom_call.1} parent=71 // pred_check
          %p740 = pneg %p739
        $region118: #{tpu_custom_call.1} parent=71 // pred_check_branch
          %742 = sbr.rel (%p740) target = $region120
        $region119: #{tpu_custom_call.1} parent=71 // pred_region
          %v743 = vld [vmem:[%s601] sm:$0xff]
          %v744 = vld [vmem:[%s601 + $0x8] sm:$0xff]
          %v745 = vld [vmem:[%s601 + $0x10] sm:$0xff]
          %v746 = vld [vmem:[%s601 + $0x18] sm:$0xff]
          %v747 = vpack.c.bf16 %v744, %v743
          %v748 = vpack.c.bf16 %v746, %v745
          %v749 = vld [vmem:[#allocation10] sm:$0xf]
          %v750 = vld [vmem:[#allocation10 + $0x4] sm:$0xf]
          %v751 = vld [vmem:[#allocation10 + $0x8] sm:$0xf]
          %v752 = vld [vmem:[#allocation10 + $0xc] sm:$0xf]
          %v753 = vld [vmem:[#allocation10 + $0x10] sm:$0xf]
          %v754 = vld [vmem:[#allocation10 + $0x14] sm:$0xf]
          %v755 = vld [vmem:[#allocation10 + $0x18] sm:$0xf]
          %v756 = vld [vmem:[#allocation10 + $0x1c] sm:$0xf]
          %v757 = vld [vmem:[#allocation10 + $0x20] sm:$0xf]
          %v758 = vld [vmem:[#allocation10 + $0x24] sm:$0xf]
          %v759 = vld [vmem:[#allocation10 + $0x28] sm:$0xf]
          %v760 = vld [vmem:[#allocation10 + $0x2c] sm:$0xf]
          %v761 = vld [vmem:[#allocation10 + $0x30] sm:$0xf]
          %v762 = vld [vmem:[#allocation10 + $0x34] sm:$0xf]
          %v763 = vld [vmem:[#allocation10 + $0x38] sm:$0xf]
          %v764 = vld [vmem:[#allocation10 + $0x3c] sm:$0xf]
          %v781 = vunpack.c.l.b16 %v749
          %v782 = vunpack.c.l.b16 %v750
          %v783 = vunpack.c.l.b16 %v751
          %v784 = vunpack.c.l.b16 %v752
          %v785 = vunpack.c.l.b16 %v753
          %v786 = vunpack.c.l.b16 %v754
          %v787 = vunpack.c.l.b16 %v755
          %v788 = vunpack.c.l.b16 %v756
          %v789 = vunpack.c.l.b16 %v757
          %v790 = vunpack.c.l.b16 %v758
          %v791 = vunpack.c.l.b16 %v759
          %v792 = vunpack.c.l.b16 %v760
          %v793 = vunpack.c.l.b16 %v761
          %v794 = vunpack.c.l.b16 %v762
          %v795 = vunpack.c.l.b16 %v763
          %v796 = vunpack.c.l.b16 %v764
          %v797 = vpack.c.b16 %v782, %v781
          %v798 = vpack.c.b16 %v784, %v783
          %v799 = vpack.c.b16 %v786, %v785
          %v800 = vpack.c.b16 %v788, %v787
          %v801 = vpack.c.b16 %v790, %v789
          %v802 = vpack.c.b16 %v792, %v791
          %v803 = vpack.c.b16 %v794, %v793
          %v804 = vpack.c.b16 %v796, %v795
          %813 = vmatprep.subr.bf16.mxu0 0
          %814 = vmatpush1.bf16.msra.mxu0 %v797
          %815 = vmatprep.subr.bf16.mxu0 0
          %816 = vmatpush1.bf16.msra.mxu0 %v798
          %817 = vmatprep.subr.bf16.mxu0 0
          %818 = vmatpush1.bf16.msra.mxu0 %v799
          %819 = vmatprep.subr.bf16.mxu0 0
          %820 = vmatpush1.bf16.msra.mxu0 %v800
          %821 = vmatprep.subr.bf16.mxu0 0
          %822 = vmatpush1.bf16.msra.mxu0 %v801
          %823 = vmatprep.subr.bf16.mxu0 0
          %824 = vmatpush1.bf16.msra.mxu0 %v802
          %825 = vmatprep.subr.bf16.mxu0 0
          %826 = vmatpush1.bf16.msra.mxu0 %v803
          %827 = vmatprep.subr.bf16.mxu0 0
          %828 = vmatpush1.bf16.msra.mxu0 %v804
          %829 = vmatprep.subr.bf16.mxu0 0
          %830 = vmatpush1.bf16.msra.mxu0 0
          %831 = vmatprep.subr.bf16.mxu0 0
          %832 = vmatpush1.bf16.msra.mxu0 0
          %833 = vmatprep.subr.bf16.mxu0 0
          %834 = vmatpush1.bf16.msra.mxu0 0
          %835 = vmatprep.subr.bf16.mxu0 0
          %836 = vmatpush1.bf16.msra.mxu0 0
          %837 = vmatprep.subr.bf16.mxu0 0
          %838 = vmatpush1.bf16.msra.mxu0 0
          %839 = vmatprep.subr.bf16.mxu0 0
          %840 = vmatpush1.bf16.msra.mxu0 0
          %841 = vmatprep.subr.bf16.mxu0 0
          %842 = vmatpush1.bf16.msra.mxu0 0
          %843 = vmatprep.subr.bf16.mxu0 0
          %844 = vmatpush1.bf16.msra.mxu0 0
          %845 = vmatprep.mubr.bf16.mxu0 0
          %846 = vmatmul.mubr.bf16.gmra.mrb[0].mxu0 %v747
          %v847 = vpop.f32.mrb[0].mxu0
          %v848 = vadd.f32 0.0, %v847
          %v849 = vpop.f32.mrb[0].mxu0
          %v850 = vpop.f32.mrb[0].mxu0
          %v851 = vadd.f32 0.0, %v850
          %v852 = vpop.f32.mrb[0].mxu0
          %853 = vmatprep.mubr.bf16.mxu0 0
          %854 = vmatmul.mubr.bf16.gmra.mrb[0].mxu0 %v748
          %v855 = vpop.f32.mrb[0].mxu0
          %v856 = vadd.f32 0.0, %v855
          %v857 = vpop.f32.mrb[0].mxu0
          %v858 = vpop.f32.mrb[0].mxu0
          %v859 = vadd.f32 0.0, %v858
          %v860 = vpop.f32.mrb[0].mxu0
          %861 = vdwg.mxu0
          %v862 = vld [vmem:[#allocation12] sm:$0xf]
          %v863 = vld [vmem:[#allocation12 + $0x4] sm:$0xf]
          %v864 = vld [vmem:[#allocation12 + $0x8] sm:$0xf]
          %v865 = vld [vmem:[#allocation12 + $0xc] sm:$0xf]
          %v866 = vld [vmem:[#allocation12 + $0x10] sm:$0xf]
          %v867 = vld [vmem:[#allocation12 + $0x14] sm:$0xf]
          %v868 = vld [vmem:[#allocation12 + $0x18] sm:$0xf]
          %v869 = vld [vmem:[#allocation12 + $0x1c] sm:$0xf]
          %v870 = vld [vmem:[#allocation12 + $0x20] sm:$0xf]
          %v871 = vld [vmem:[#allocation12 + $0x24] sm:$0xf]
          %v872 = vld [vmem:[#allocation12 + $0x28] sm:$0xf]
          %v873 = vld [vmem:[#allocation12 + $0x2c] sm:$0xf]
          %v874 = vld [vmem:[#allocation12 + $0x30] sm:$0xf]
          %v875 = vld [vmem:[#allocation12 + $0x34] sm:$0xf]
          %v876 = vld [vmem:[#allocation12 + $0x38] sm:$0xf]
          %v877 = vld [vmem:[#allocation12 + $0x3c] sm:$0xf]
          %v894 = vunpack.c.l.b16 %v862
          %v895 = vunpack.c.l.b16 %v863
          %v896 = vunpack.c.l.b16 %v864
          %v897 = vunpack.c.l.b16 %v865
          %v898 = vunpack.c.l.b16 %v866
          %v899 = vunpack.c.l.b16 %v867
          %v900 = vunpack.c.l.b16 %v868
          %v901 = vunpack.c.l.b16 %v869
          %v902 = vunpack.c.l.b16 %v870
          %v903 = vunpack.c.l.b16 %v871
          %v904 = vunpack.c.l.b16 %v872
          %v905 = vunpack.c.l.b16 %v873
          %v906 = vunpack.c.l.b16 %v874
          %v907 = vunpack.c.l.b16 %v875
          %v908 = vunpack.c.l.b16 %v876
          %v909 = vunpack.c.l.b16 %v877
          %v910 = vpack.c.b16 %v895, %v894
          %v911 = vpack.c.b16 %v897, %v896
          %v912 = vpack.c.b16 %v899, %v898
          %v913 = vpack.c.b16 %v901, %v900
          %v914 = vpack.c.b16 %v903, %v902
          %v915 = vpack.c.b16 %v905, %v904
          %v916 = vpack.c.b16 %v907, %v906
          %v917 = vpack.c.b16 %v909, %v908
          %926 = vmatprep.subr.bf16.mxu0 0
          %927 = vmatpush1.bf16.msra.mxu0 %v910
          %928 = vmatprep.subr.bf16.mxu0 0
          %929 = vmatpush1.bf16.msra.mxu0 %v911
          %930 = vmatprep.subr.bf16.mxu0 0
          %931 = vmatpush1.bf16.msra.mxu0 %v912
          %932 = vmatprep.subr.bf16.mxu0 0
          %933 = vmatpush1.bf16.msra.mxu0 %v913
          %934 = vmatprep.subr.bf16.mxu0 0
          %935 = vmatpush1.bf16.msra.mxu0 %v914
          %936 = vmatprep.subr.bf16.mxu0 0
          %937 = vmatpush1.bf16.msra.mxu0 %v915
          %938 = vmatprep.subr.bf16.mxu0 0
          %939 = vmatpush1.bf16.msra.mxu0 %v916
          %940 = vmatprep.subr.bf16.mxu0 0
          %941 = vmatpush1.bf16.msra.mxu0 %v917
          %942 = vmatprep.subr.bf16.mxu0 0
          %943 = vmatpush1.bf16.msra.mxu0 0
          %944 = vmatprep.subr.bf16.mxu0 0
          %945 = vmatpush1.bf16.msra.mxu0 0
          %946 = vmatprep.subr.bf16.mxu0 0
          %947 = vmatpush1.bf16.msra.mxu0 0
          %948 = vmatprep.subr.bf16.mxu0 0
          %949 = vmatpush1.bf16.msra.mxu0 0
          %950 = vmatprep.subr.bf16.mxu0 0
          %951 = vmatpush1.bf16.msra.mxu0 0
          %952 = vmatprep.subr.bf16.mxu0 0
          %953 = vmatpush1.bf16.msra.mxu0 0
          %954 = vmatprep.subr.bf16.mxu0 0
          %955 = vmatpush1.bf16.msra.mxu0 0
          %956 = vmatprep.subr.bf16.mxu0 0
          %957 = vmatpush1.bf16.msra.mxu0 0
          %958 = vmatprep.mubr.bf16.mxu0 0
          %959 = vmatmul.mubr.bf16.gmra.mrb[0].mxu0 %v747
          %v960 = vpop.f32.mrb[0].mxu0
          %v961 = vadd.f32 0.0, %v960
          %v962 = vpop.f32.mrb[0].mxu0
          %v963 = vpop.f32.mrb[0].mxu0
          %v964 = vadd.f32 0.0, %v963
          %v965 = vpop.f32.mrb[0].mxu0
          %966 = vmatprep.mubr.bf16.mxu0 0
          %967 = vmatmul.mubr.bf16.gmra.mrb[0].mxu0 %v748
          %v968 = vpop.f32.mrb[0].mxu0
          %v969 = vadd.f32 0.0, %v968
          %v970 = vpop.f32.mrb[0].mxu0
          %v971 = vpop.f32.mrb[0].mxu0
          %v972 = vadd.f32 0.0, %v971
          %v973 = vpop.f32.mrb[0].mxu0
          %974 = vdwg.mxu0
          %v975 = vld [vmem:[#allocation13] sm:$0xf]
          %v976 = vld [vmem:[#allocation13 + $0x4] sm:$0xf]
          %v977 = vld [vmem:[#allocation13 + $0x8] sm:$0xf]
          %v978 = vld [vmem:[#allocation13 + $0xc] sm:$0xf]
          %v979 = vld [vmem:[#allocation13 + $0x10] sm:$0xf]
          %v980 = vld [vmem:[#allocation13 + $0x14] sm:$0xf]
          %v981 = vld [vmem:[#allocation13 + $0x18] sm:$0xf]
          %v982 = vld [vmem:[#allocation13 + $0x1c] sm:$0xf]
          %v983 = vld [vmem:[#allocation13 + $0x20] sm:$0xf]
          %v984 = vld [vmem:[#allocation13 + $0x24] sm:$0xf]
          %v985 = vld [vmem:[#allocation13 + $0x28] sm:$0xf]
          %v986 = vld [vmem:[#allocation13 + $0x2c] sm:$0xf]
          %v987 = vld [vmem:[#allocation13 + $0x30] sm:$0xf]
          %v988 = vld [vmem:[#allocation13 + $0x34] sm:$0xf]
          %v989 = vld [vmem:[#allocation13 + $0x38] sm:$0xf]
          %v990 = vld [vmem:[#allocation13 + $0x3c] sm:$0xf]
          %v1007 = vunpack.c.l.b16 %v975
          %v1008 = vunpack.c.l.b16 %v976
          %v1009 = vunpack.c.l.b16 %v977
          %v1010 = vunpack.c.l.b16 %v978
          %v1011 = vunpack.c.l.b16 %v979
          %v1012 = vunpack.c.l.b16 %v980
          %v1013 = vunpack.c.l.b16 %v981
          %v1014 = vunpack.c.l.b16 %v982
          %v1015 = vunpack.c.l.b16 %v983
          %v1016 = vunpack.c.l.b16 %v984
          %v1017 = vunpack.c.l.b16 %v985
          %v1018 = vunpack.c.l.b16 %v986
          %v1019 = vunpack.c.l.b16 %v987
          %v1020 = vunpack.c.l.b16 %v988
          %v1021 = vunpack.c.l.b16 %v989
          %v1022 = vunpack.c.l.b16 %v990
          %v1023 = vpack.c.b16 %v1008, %v1007
          %v1024 = vpack.c.b16 %v1010, %v1009
          %v1025 = vpack.c.b16 %v1012, %v1011
          %v1026 = vpack.c.b16 %v1014, %v1013
          %v1027 = vpack.c.b16 %v1016, %v1015
          %v1028 = vpack.c.b16 %v1018, %v1017
          %v1029 = vpack.c.b16 %v1020, %v1019
          %v1030 = vpack.c.b16 %v1022, %v1021
          %1039 = vmatprep.subr.bf16.mxu0 0
          %1040 = vmatpush1.bf16.msra.mxu0 %v1023
          %1041 = vmatprep.subr.bf16.mxu0 0
          %1042 = vmatpush1.bf16.msra.mxu0 %v1024
          %1043 = vmatprep.subr.bf16.mxu0 0
          %1044 = vmatpush1.bf16.msra.mxu0 %v1025
          %1045 = vmatprep.subr.bf16.mxu0 0
          %1046 = vmatpush1.bf16.msra.mxu0 %v1026
          %1047 = vmatprep.subr.bf16.mxu0 0
          %1048 = vmatpush1.bf16.msra.mxu0 %v1027
          %1049 = vmatprep.subr.bf16.mxu0 0
          %1050 = vmatpush1.bf16.msra.mxu0 %v1028
          %1051 = vmatprep.subr.bf16.mxu0 0
          %1052 = vmatpush1.bf16.msra.mxu0 %v1029
          %1053 = vmatprep.subr.bf16.mxu0 0
          %1054 = vmatpush1.bf16.msra.mxu0 %v1030
          %1055 = vmatprep.subr.bf16.mxu0 0
          %1056 = vmatpush1.bf16.msra.mxu0 0
          %1057 = vmatprep.subr.bf16.mxu0 0
          %1058 = vmatpush1.bf16.msra.mxu0 0
          %1059 = vmatprep.subr.bf16.mxu0 0
          %1060 = vmatpush1.bf16.msra.mxu0 0
          %1061 = vmatprep.subr.bf16.mxu0 0
          %1062 = vmatpush1.bf16.msra.mxu0 0
          %1063 = vmatprep.subr.bf16.mxu0 0
          %1064 = vmatpush1.bf16.msra.mxu0 0
          %1065 = vmatprep.subr.bf16.mxu0 0
          %1066 = vmatpush1.bf16.msra.mxu0 0
          %1067 = vmatprep.subr.bf16.mxu0 0
          %1068 = vmatpush1.bf16.msra.mxu0 0
          %1069 = vmatprep.subr.bf16.mxu0 0
          %1070 = vmatpush1.bf16.msra.mxu0 0
          %1071 = vmatprep.mubr.bf16.mxu0 0
          %1072 = vmatmul.mubr.bf16.gmra.mrb[0].mxu0 %v747
          %v1073 = vpop.f32.mrb[0].mxu0
          %v1074 = vadd.f32 0.0, %v1073
          %v1075 = vpop.f32.mrb[0].mxu0
          %v1076 = vpop.f32.mrb[0].mxu0
          %v1077 = vadd.f32 0.0, %v1076
          %v1078 = vpop.f32.mrb[0].mxu0
          %1079 = vmatprep.mubr.bf16.mxu0 0
          %1080 = vmatmul.mubr.bf16.gmra.mrb[0].mxu0 %v748
          %v1081 = vpop.f32.mrb[0].mxu0
          %v1082 = vadd.f32 0.0, %v1081
          %v1083 = vpop.f32.mrb[0].mxu0
          %v1084 = vpop.f32.mrb[0].mxu0
          %v1085 = vadd.f32 0.0, %v1084
          %v1086 = vpop.f32.mrb[0].mxu0
          %1087 = vdwg.mxu0
          %v1088 = vmax.f32 %v848, 0.0
          %v1089 = vmax.f32 %v851, 0.0
          %v1090 = vmax.f32 %v856, 0.0
          %v1091 = vmax.f32 %v859, 0.0
          %v1092 = vpack.c.bf16 %v1089, %v1088
          %v1093 = vpack.c.bf16 %v1091, %v1090
          %1094 = vst [vmem:[#allocation2] sm:$0xff] %v1092
          %1095 = vst [vmem:[#allocation2 + $0x8] sm:$0xff] %v1093
          %v1096 = vmax.f32 %v961, 0.0
          %v1097 = vmax.f32 %v964, 0.0
          %v1098 = vmax.f32 %v969, 0.0
          %v1099 = vmax.f32 %v972, 0.0
          %v1100 = vpack.c.bf16 %v1097, %v1096
          %v1101 = vpack.c.bf16 %v1099, %v1098
          %1102 = vst [vmem:[#allocation3] sm:$0xff] %v1100
          %1103 = vst [vmem:[#allocation3 + $0x8] sm:$0xff] %v1101
          %v1104 = vpack.c.bf16 %v1077, %v1074
          %v1105 = vpack.c.bf16 %v1085, %v1082
          %1106 = vst [vmem:[#allocation4] sm:$0xff] %v1104
          %1107 = vst [vmem:[#allocation4 + $0x8] sm:$0xff] %v1105
          %1108 = vst [vmem:[#allocation5] sm:$0xff] 0.0
          %1109 = vst [vmem:[#allocation5 + $0x8] sm:$0xff] 0.0
          %1110 = vst [vmem:[#allocation5 + $0x10] sm:$0xff] 0.0
          %1111 = vst [vmem:[#allocation5 + $0x18] sm:$0xff] 0.0
          %1112 = vst [vmem:[#allocation6] sm:$0xff] 0.0
          %1113 = vst [vmem:[#allocation6 + $0x8] sm:$0xff] 0.0
          %1114 = vst [vmem:[#allocation6 + $0x10] sm:$0xff] 0.0
          %1115 = vst [vmem:[#allocation6 + $0x18] sm:$0xff] 0.0
        $region120: #{tpu_custom_call.1} parent=71 // pred_fallthru
          _
        %v1116 = vld [vmem:[#allocation2] sm:$0xff]
        %v1117 = vld [vmem:[#allocation2 + $0x8] sm:$0xff]
        %v1118 = vld [vmem:[%s626] sm:$0xf]
        %v1119 = vld [vmem:[%s626 + $0x4] sm:$0xf]
        %v1120 = vld [vmem:[%s626 + $0x8] sm:$0xf]
        %v1121 = vld [vmem:[%s626 + $0xc] sm:$0xf]
        %v1122 = vld [vmem:[%s626 + $0x10] sm:$0xf]
        %v1123 = vld [vmem:[%s626 + $0x14] sm:$0xf]
        %v1124 = vld [vmem:[%s626 + $0x18] sm:$0xf]
        %v1125 = vld [vmem:[%s626 + $0x1c] sm:$0xf]
        %v1126 = vld [vmem:[%s626 + $0x20] sm:$0xf]
        %v1127 = vld [vmem:[%s626 + $0x24] sm:$0xf]
        %v1128 = vld [vmem:[%s626 + $0x28] sm:$0xf]
        %v1129 = vld [vmem:[%s626 + $0x2c] sm:$0xf]
        %v1130 = vld [vmem:[%s626 + $0x30] sm:$0xf]
        %v1131 = vld [vmem:[%s626 + $0x34] sm:$0xf]
        %v1132 = vld [vmem:[%s626 + $0x38] sm:$0xf]
        %v1133 = vld [vmem:[%s626 + $0x3c] sm:$0xf]
        %v1150 = vunpack.c.l.b16 %v1118
        %v1151 = vunpack.c.l.b16 %v1119
        %v1152 = vunpack.c.l.b16 %v1120
        %v1153 = vunpack.c.l.b16 %v1121
        %v1154 = vunpack.c.l.b16 %v1122
        %v1155 = vunpack.c.l.b16 %v1123
        %v1156 = vunpack.c.l.b16 %v1124
        %v1157 = vunpack.c.l.b16 %v1125
        %v1158 = vunpack.c.l.b16 %v1126
        %v1159 = vunpack.c.l.b16 %v1127
        %v1160 = vunpack.c.l.b16 %v1128
        %v1161 = vunpack.c.l.b16 %v1129
        %v1162 = vunpack.c.l.b16 %v1130
        %v1163 = vunpack.c.l.b16 %v1131
        %v1164 = vunpack.c.l.b16 %v1132
        %v1165 = vunpack.c.l.b16 %v1133
        %v1166 = vpack.c.b16 %v1151, %v1150
        %v1167 = vpack.c.b16 %v1153, %v1152
        %v1168 = vpack.c.b16 %v1155, %v1154
        %v1169 = vpack.c.b16 %v1157, %v1156
        %v1170 = vpack.c.b16 %v1159, %v1158
        %v1171 = vpack.c.b16 %v1161, %v1160
        %v1172 = vpack.c.b16 %v1163, %v1162
        %v1173 = vpack.c.b16 %v1165, %v1164
        %1182 = vmatprep.subr.bf16.mxu0 0
        %1183 = vmatpush1.bf16.msra.mxu0 %v1166
        %1184 = vmatprep.subr.bf16.mxu0 0
        %1185 = vmatpush1.bf16.msra.mxu0 %v1167
        %1186 = vmatprep.subr.bf16.mxu0 0
        %1187 = vmatpush1.bf16.msra.mxu0 %v1168
        %1188 = vmatprep.subr.bf16.mxu0 0
        %1189 = vmatpush1.bf16.msra.mxu0 %v1169
        %1190 = vmatprep.subr.bf16.mxu0 0
        %1191 = vmatpush1.bf16.msra.mxu0 %v1170
        %1192 = vmatprep.subr.bf16.mxu0 0
        %1193 = vmatpush1.bf16.msra.mxu0 %v1171
        %1194 = vmatprep.subr.bf16.mxu0 0
        %1195 = vmatpush1.bf16.msra.mxu0 %v1172
        %1196 = vmatprep.subr.bf16.mxu0 0
        %1197 = vmatpush1.bf16.msra.mxu0 %v1173
        %1198 = vmatprep.subr.bf16.mxu0 0
        %1199 = vmatpush1.bf16.msra.mxu0 0
        %1200 = vmatprep.subr.bf16.mxu0 0
        %1201 = vmatpush1.bf16.msra.mxu0 0
        %1202 = vmatprep.subr.bf16.mxu0 0
        %1203 = vmatpush1.bf16.msra.mxu0 0
        %1204 = vmatprep.subr.bf16.mxu0 0
        %1205 = vmatpush1.bf16.msra.mxu0 0
        %1206 = vmatprep.subr.bf16.mxu0 0
        %1207 = vmatpush1.bf16.msra.mxu0 0
        %1208 = vmatprep.subr.bf16.mxu0 0
        %1209 = vmatpush1.bf16.msra.mxu0 0
        %1210 = vmatprep.subr.bf16.mxu0 0
        %1211 = vmatpush1.bf16.msra.mxu0 0
        %1212 = vmatprep.subr.bf16.mxu0 0
        %1213 = vmatpush1.bf16.msra.mxu0 0
        %1214 = vmatprep.mubr.bf16.mxu0 0
        %1215 = vmatmul.mubr.bf16.gmra.mrb[0].mxu0 %v1116
        %v1216 = vpop.f32.mrb[0].mxu0
        %v1217 = vadd.f32 0.0, %v1216
        %v1218 = vpop.f32.mrb[0].mxu0
        %v1219 = vpop.f32.mrb[0].mxu0
        %v1220 = vadd.f32 0.0, %v1219
        %v1221 = vpop.f32.mrb[0].mxu0
        %1222 = vmatprep.mubr.bf16.mxu0 0
        %1223 = vmatmul.mubr.bf16.gmra.mrb[0].mxu0 %v1117
        %v1224 = vpop.f32.mrb[0].mxu0
        %v1225 = vadd.f32 0.0, %v1224
        %v1226 = vpop.f32.mrb[0].mxu0
        %v1227 = vpop.f32.mrb[0].mxu0
        %v1228 = vadd.f32 0.0, %v1227
        %v1229 = vpop.f32.mrb[0].mxu0
        %1230 = vdwg.mxu0
        %v1231 = vld [vmem:[#allocation3] sm:$0xff]
        %v1232 = vld [vmem:[#allocation3 + $0x8] sm:$0xff]
        %v1233 = vld [vmem:[%s635] sm:$0xf]
        %v1234 = vld [vmem:[%s635 + $0x4] sm:$0xf]
        %v1235 = vld [vmem:[%s635 + $0x8] sm:$0xf]
        %v1236 = vld [vmem:[%s635 + $0xc] sm:$0xf]
        %v1237 = vld [vmem:[%s635 + $0x10] sm:$0xf]
        %v1238 = vld [vmem:[%s635 + $0x14] sm:$0xf]
        %v1239 = vld [vmem:[%s635 + $0x18] sm:$0xf]
        %v1240 = vld [vmem:[%s635 + $0x1c] sm:$0xf]
        %v1241 = vld [vmem:[%s635 + $0x20] sm:$0xf]
        %v1242 = vld [vmem:[%s635 + $0x24] sm:$0xf]
        %v1243 = vld [vmem:[%s635 + $0x28] sm:$0xf]
        %v1244 = vld [vmem:[%s635 + $0x2c] sm:$0xf]
        %v1245 = vld [vmem:[%s635 + $0x30] sm:$0xf]
        %v1246 = vld [vmem:[%s635 + $0x34] sm:$0xf]
        %v1247 = vld [vmem:[%s635 + $0x38] sm:$0xf]
        %v1248 = vld [vmem:[%s635 + $0x3c] sm:$0xf]
        %v1265 = vunpack.c.l.b16 %v1233
        %v1266 = vunpack.c.l.b16 %v1234
        %v1267 = vunpack.c.l.b16 %v1235
        %v1268 = vunpack.c.l.b16 %v1236
        %v1269 = vunpack.c.l.b16 %v1237
        %v1270 = vunpack.c.l.b16 %v1238
        %v1271 = vunpack.c.l.b16 %v1239
        %v1272 = vunpack.c.l.b16 %v1240
        %v1273 = vunpack.c.l.b16 %v1241
        %v1274 = vunpack.c.l.b16 %v1242
        %v1275 = vunpack.c.l.b16 %v1243
        %v1276 = vunpack.c.l.b16 %v1244
        %v1277 = vunpack.c.l.b16 %v1245
        %v1278 = vunpack.c.l.b16 %v1246
        %v1279 = vunpack.c.l.b16 %v1247
        %v1280 = vunpack.c.l.b16 %v1248
        %v1281 = vpack.c.b16 %v1266, %v1265
        %v1282 = vpack.c.b16 %v1268, %v1267
        %v1283 = vpack.c.b16 %v1270, %v1269
        %v1284 = vpack.c.b16 %v1272, %v1271
        %v1285 = vpack.c.b16 %v1274, %v1273
        %v1286 = vpack.c.b16 %v1276, %v1275
        %v1287 = vpack.c.b16 %v1278, %v1277
        %v1288 = vpack.c.b16 %v1280, %v1279
        %1297 = vmatprep.subr.bf16.mxu0 0
        %1298 = vmatpush1.bf16.msra.mxu0 %v1281
        %1299 = vmatprep.subr.bf16.mxu0 0
        %1300 = vmatpush1.bf16.msra.mxu0 %v1282
        %1301 = vmatprep.subr.bf16.mxu0 0
        %1302 = vmatpush1.bf16.msra.mxu0 %v1283
        %1303 = vmatprep.subr.bf16.mxu0 0
        %1304 = vmatpush1.bf16.msra.mxu0 %v1284
        %1305 = vmatprep.subr.bf16.mxu0 0
        %1306 = vmatpush1.bf16.msra.mxu0 %v1285
        %1307 = vmatprep.subr.bf16.mxu0 0
        %1308 = vmatpush1.bf16.msra.mxu0 %v1286
        %1309 = vmatprep.subr.bf16.mxu0 0
        %1310 = vmatpush1.bf16.msra.mxu0 %v1287
        %1311 = vmatprep.subr.bf16.mxu0 0
        %1312 = vmatpush1.bf16.msra.mxu0 %v1288
        %1313 = vmatprep.subr.bf16.mxu0 0
        %1314 = vmatpush1.bf16.msra.mxu0 0
        %1315 = vmatprep.subr.bf16.mxu0 0
        %1316 = vmatpush1.bf16.msra.mxu0 0
        %1317 = vmatprep.subr.bf16.mxu0 0
        %1318 = vmatpush1.bf16.msra.mxu0 0
        %1319 = vmatprep.subr.bf16.mxu0 0
        %1320 = vmatpush1.bf16.msra.mxu0 0
        %1321 = vmatprep.subr.bf16.mxu0 0
        %1322 = vmatpush1.bf16.msra.mxu0 0
        %1323 = vmatprep.subr.bf16.mxu0 0
        %1324 = vmatpush1.bf16.msra.mxu0 0
        %1325 = vmatprep.subr.bf16.mxu0 0
        %1326 = vmatpush1.bf16.msra.mxu0 0
        %1327 = vmatprep.subr.bf16.mxu0 0
        %1328 = vmatpush1.bf16.msra.mxu0 0
        %1329 = vmatprep.mubr.bf16.mxu0 0
        %1330 = vmatmul.mubr.bf16.gmra.mrb[0].mxu0 %v1231
        %v1331 = vpop.f32.mrb[0].mxu0
        %v1332 = vadd.f32 0.0, %v1331
        %v1333 = vpop.f32.mrb[0].mxu0
        %v1334 = vpop.f32.mrb[0].mxu0
        %v1335 = vadd.f32 0.0, %v1334
        %v1336 = vpop.f32.mrb[0].mxu0
        %1337 = vmatprep.mubr.bf16.mxu0 0
        %1338 = vmatmul.mubr.bf16.gmra.mrb[0].mxu0 %v1232
        %v1339 = vpop.f32.mrb[0].mxu0
        %v1340 = vadd.f32 0.0, %v1339
        %v1341 = vpop.f32.mrb[0].mxu0
        %v1342 = vpop.f32.mrb[0].mxu0
        %v1343 = vadd.f32 0.0, %v1342
        %v1344 = vpop.f32.mrb[0].mxu0
        %1345 = vdwg.mxu0
        %v1346 = vld [vmem:[#allocation4] sm:$0xff]
        %v1347 = vld [vmem:[#allocation4 + $0x8] sm:$0xff]
        %1348 = vmatprep.subr.bf16.mxu0 0
        %1349 = vmatpush1.bf16.msra.mxu0 %v1281
        %1350 = vmatprep.subr.bf16.mxu0 0
        %1351 = vmatpush1.bf16.msra.mxu0 %v1282
        %1352 = vmatprep.subr.bf16.mxu0 0
        %1353 = vmatpush1.bf16.msra.mxu0 %v1283
        %1354 = vmatprep.subr.bf16.mxu0 0
        %1355 = vmatpush1.bf16.msra.mxu0 %v1284
        %1356 = vmatprep.subr.bf16.mxu0 0
        %1357 = vmatpush1.bf16.msra.mxu0 %v1285
        %1358 = vmatprep.subr.bf16.mxu0 0
        %1359 = vmatpush1.bf16.msra.mxu0 %v1286
        %1360 = vmatprep.subr.bf16.mxu0 0
        %1361 = vmatpush1.bf16.msra.mxu0 %v1287
        %1362 = vmatprep.subr.bf16.mxu0 0
        %1363 = vmatpush1.bf16.msra.mxu0 %v1288
        %1364 = vmatprep.subr.bf16.mxu0 0
        %1365 = vmatpush1.bf16.msra.mxu0 0
        %1366 = vmatprep.subr.bf16.mxu0 0
        %1367 = vmatpush1.bf16.msra.mxu0 0
        %1368 = vmatprep.subr.bf16.mxu0 0
        %1369 = vmatpush1.bf16.msra.mxu0 0
        %1370 = vmatprep.subr.bf16.mxu0 0
        %1371 = vmatpush1.bf16.msra.mxu0 0
        %1372 = vmatprep.subr.bf16.mxu0 0
        %1373 = vmatpush1.bf16.msra.mxu0 0
        %1374 = vmatprep.subr.bf16.mxu0 0
        %1375 = vmatpush1.bf16.msra.mxu0 0
        %1376 = vmatprep.subr.bf16.mxu0 0
        %1377 = vmatpush1.bf16.msra.mxu0 0
        %1378 = vmatprep.subr.bf16.mxu0 0
        %1379 = vmatpush1.bf16.msra.mxu0 0
        %1380 = vmatprep.mubr.bf16.mxu0 0
        %1381 = vmatmul.mubr.bf16.gmra.mrb[0].mxu0 %v1346
        %v1382 = vpop.f32.mrb[0].mxu0
        %v1383 = vadd.f32 0.0, %v1382
        %v1384 = vpop.f32.mrb[0].mxu0
        %v1385 = vpop.f32.mrb[0].mxu0
        %v1386 = vadd.f32 0.0, %v1385
        %v1387 = vpop.f32.mrb[0].mxu0
        %1388 = vmatprep.mubr.bf16.mxu0 0
        %1389 = vmatmul.mubr.bf16.gmra.mrb[0].mxu0 %v1347
        %v1390 = vpop.f32.mrb[0].mxu0
        %v1391 = vadd.f32 0.0, %v1390
        %v1392 = vpop.f32.mrb[0].mxu0
        %v1393 = vpop.f32.mrb[0].mxu0
        %v1394 = vadd.f32 0.0, %v1393
        %v1395 = vpop.f32.mrb[0].mxu0
        %1396 = vdwg.mxu0
        %v1397 = vmul.f32 %v1217, %v1332
        %v1398 = vmul.f32 %v1220, %v1335
        %v1399 = vmul.f32 %v1225, %v1340
        %v1400 = vmul.f32 %v1228, %v1343
        %v1401 = vpack.c.bf16 %v1398, %v1397
        %v1402 = vpack.c.bf16 %v1400, %v1399
        %v1403 = vld [vmem:[%s644] sm:$0xf]
        %v1404 = vld [vmem:[%s644 + $0x4] sm:$0xf]
        %v1405 = vld [vmem:[%s644 + $0x8] sm:$0xf]
        %v1406 = vld [vmem:[%s644 + $0xc] sm:$0xf]
        %v1407 = vld [vmem:[%s644 + $0x10] sm:$0xf]
        %v1408 = vld [vmem:[%s644 + $0x14] sm:$0xf]
        %v1409 = vld [vmem:[%s644 + $0x18] sm:$0xf]
        %v1410 = vld [vmem:[%s644 + $0x1c] sm:$0xf]
        %v1411 = vld [vmem:[%s644 + $0x20] sm:$0xf]
        %v1412 = vld [vmem:[%s644 + $0x24] sm:$0xf]
        %v1413 = vld [vmem:[%s644 + $0x28] sm:$0xf]
        %v1414 = vld [vmem:[%s644 + $0x2c] sm:$0xf]
        %v1415 = vld [vmem:[%s644 + $0x30] sm:$0xf]
        %v1416 = vld [vmem:[%s644 + $0x34] sm:$0xf]
        %v1417 = vld [vmem:[%s644 + $0x38] sm:$0xf]
        %v1418 = vld [vmem:[%s644 + $0x3c] sm:$0xf]
        %v1435 = vunpack.c.l.b16 %v1403
        %v1436 = vunpack.c.l.b16 %v1404
        %v1437 = vunpack.c.l.b16 %v1405
        %v1438 = vunpack.c.l.b16 %v1406
        %v1439 = vunpack.c.l.b16 %v1407
        %v1440 = vunpack.c.l.b16 %v1408
        %v1441 = vunpack.c.l.b16 %v1409
        %v1442 = vunpack.c.l.b16 %v1410
        %v1443 = vunpack.c.l.b16 %v1411
        %v1444 = vunpack.c.l.b16 %v1412
        %v1445 = vunpack.c.l.b16 %v1413
        %v1446 = vunpack.c.l.b16 %v1414
        %v1447 = vunpack.c.l.b16 %v1415
        %v1448 = vunpack.c.l.b16 %v1416
        %v1449 = vunpack.c.l.b16 %v1417
        %v1450 = vunpack.c.l.b16 %v1418
        %v1451 = vpack.c.b16 %v1436, %v1435
        %v1452 = vpack.c.b16 %v1438, %v1437
        %v1453 = vpack.c.b16 %v1440, %v1439
        %v1454 = vpack.c.b16 %v1442, %v1441
        %v1455 = vpack.c.b16 %v1444, %v1443
        %v1456 = vpack.c.b16 %v1446, %v1445
        %v1457 = vpack.c.b16 %v1448, %v1447
        %v1458 = vpack.c.b16 %v1450, %v1449
        %1467 = vmatprep.subr.bf16.mxu0 0
        %1468 = vmatpush1.bf16.msra.mxu0 %v1451
        %1469 = vmatprep.subr.bf16.mxu0 0
        %1470 = vmatpush1.bf16.msra.mxu0 %v1452
        %1471 = vmatprep.subr.bf16.mxu0 0
        %1472 = vmatpush1.bf16.msra.mxu0 %v1453
        %1473 = vmatprep.subr.bf16.mxu0 0
        %1474 = vmatpush1.bf16.msra.mxu0 %v1454
        %1475 = vmatprep.subr.bf16.mxu0 0
        %1476 = vmatpush1.bf16.msra.mxu0 %v1455
        %1477 = vmatprep.subr.bf16.mxu0 0
        %1478 = vmatpush1.bf16.msra.mxu0 %v1456
        %1479 = vmatprep.subr.bf16.mxu0 0
        %1480 = vmatpush1.bf16.msra.mxu0 %v1457
        %1481 = vmatprep.subr.bf16.mxu0 0
        %1482 = vmatpush1.bf16.msra.mxu0 %v1458
        %1483 = vmatprep.subr.bf16.mxu0 0
        %1484 = vmatpush1.bf16.msra.mxu0 0
        %1485 = vmatprep.subr.bf16.mxu0 0
        %1486 = vmatpush1.bf16.msra.mxu0 0
        %1487 = vmatprep.subr.bf16.mxu0 0
        %1488 = vmatpush1.bf16.msra.mxu0 0
        %1489 = vmatprep.subr.bf16.mxu0 0
        %1490 = vmatpush1.bf16.msra.mxu0 0
        %1491 = vmatprep.subr.bf16.mxu0 0
        %1492 = vmatpush1.bf16.msra.mxu0 0
        %1493 = vmatprep.subr.bf16.mxu0 0
        %1494 = vmatpush1.bf16.msra.mxu0 0
        %1495 = vmatprep.subr.bf16.mxu0 0
        %1496 = vmatpush1.bf16.msra.mxu0 0
        %1497 = vmatprep.subr.bf16.mxu0 0
        %1498 = vmatpush1.bf16.msra.mxu0 0
        %1499 = vmatprep.mubr.bf16.mxu0 0
        %1500 = vmatmul.mubr.bf16.gmra.mrb[0].mxu0 %v1401
        %v1501 = vpop.f32.mrb[0].mxu0
        %v1502 = vadd.f32 0.0, %v1501
        %v1503 = vpop.f32.mrb[0].mxu0
        %v1504 = vpop.f32.mrb[0].mxu0
        %v1505 = vadd.f32 0.0, %v1504
        %v1506 = vpop.f32.mrb[0].mxu0
        %1507 = vmatprep.mubr.bf16.mxu0 0
        %1508 = vmatmul.mubr.bf16.gmra.mrb[0].mxu0 %v1402
        %v1509 = vpop.f32.mrb[0].mxu0
        %v1510 = vadd.f32 0.0, %v1509
        %v1511 = vpop.f32.mrb[0].mxu0
        %v1512 = vpop.f32.mrb[0].mxu0
        %v1513 = vadd.f32 0.0, %v1512
        %v1514 = vpop.f32.mrb[0].mxu0
        %1515 = vdwg.mxu0
        %v1516 = vpack.c.bf16 %v1505, %v1502
        %v1517 = vpack.c.bf16 %v1513, %v1510
        %v1518 = vld [vmem:[%s653] sm:$0xf]
        %v1519 = vld [vmem:[%s653 + $0x4] sm:$0xf]
        %v1520 = vld [vmem:[%s653 + $0x8] sm:$0xf]
        %v1521 = vld [vmem:[%s653 + $0xc] sm:$0xf]
        %v1522 = vld [vmem:[%s653 + $0x10] sm:$0xf]
        %v1523 = vld [vmem:[%s653 + $0x14] sm:$0xf]
        %v1524 = vld [vmem:[%s653 + $0x18] sm:$0xf]
        %v1525 = vld [vmem:[%s653 + $0x1c] sm:$0xf]
        %v1526 = vld [vmem:[%s653 + $0x20] sm:$0xf]
        %v1527 = vld [vmem:[%s653 + $0x24] sm:$0xf]
        %v1528 = vld [vmem:[%s653 + $0x28] sm:$0xf]
        %v1529 = vld [vmem:[%s653 + $0x2c] sm:$0xf]
        %v1530 = vld [vmem:[%s653 + $0x30] sm:$0xf]
        %v1531 = vld [vmem:[%s653 + $0x34] sm:$0xf]
        %v1532 = vld [vmem:[%s653 + $0x38] sm:$0xf]
        %v1533 = vld [vmem:[%s653 + $0x3c] sm:$0xf]
        %v1550 = vunpack.c.l.b16 %v1518
        %v1551 = vunpack.c.l.b16 %v1519
        %v1552 = vunpack.c.l.b16 %v1520
        %v1553 = vunpack.c.l.b16 %v1521
        %v1554 = vunpack.c.l.b16 %v1522
        %v1555 = vunpack.c.l.b16 %v1523
        %v1556 = vunpack.c.l.b16 %v1524
        %v1557 = vunpack.c.l.b16 %v1525
        %v1558 = vunpack.c.l.b16 %v1526
        %v1559 = vunpack.c.l.b16 %v1527
        %v1560 = vunpack.c.l.b16 %v1528
        %v1561 = vunpack.c.l.b16 %v1529
        %v1562 = vunpack.c.l.b16 %v1530
        %v1563 = vunpack.c.l.b16 %v1531
        %v1564 = vunpack.c.l.b16 %v1532
        %v1565 = vunpack.c.l.b16 %v1533
        %v1566 = vpack.c.b16 %v1551, %v1550
        %v1567 = vpack.c.b16 %v1553, %v1552
        %v1568 = vpack.c.b16 %v1555, %v1554
        %v1569 = vpack.c.b16 %v1557, %v1556
        %v1570 = vpack.c.b16 %v1559, %v1558
        %v1571 = vpack.c.b16 %v1561, %v1560
        %v1572 = vpack.c.b16 %v1563, %v1562
        %v1573 = vpack.c.b16 %v1565, %v1564
        %1582 = vmatprep.subr.bf16.mxu0 0
        %1583 = vmatpush1.bf16.msra.mxu0 %v1566
        %1584 = vmatprep.subr.bf16.mxu0 0
        %1585 = vmatpush1.bf16.msra.mxu0 %v1567
        %1586 = vmatprep.subr.bf16.mxu0 0
        %1587 = vmatpush1.bf16.msra.mxu0 %v1568
        %1588 = vmatprep.subr.bf16.mxu0 0
        %1589 = vmatpush1.bf16.msra.mxu0 %v1569
        %1590 = vmatprep.subr.bf16.mxu0 0
        %1591 = vmatpush1.bf16.msra.mxu0 %v1570
        %1592 = vmatprep.subr.bf16.mxu0 0
        %1593 = vmatpush1.bf16.msra.mxu0 %v1571
        %1594 = vmatprep.subr.bf16.mxu0 0
        %1595 = vmatpush1.bf16.msra.mxu0 %v1572
        %1596 = vmatprep.subr.bf16.mxu0 0
        %1597 = vmatpush1.bf16.msra.mxu0 %v1573
        %1598 = vmatprep.subr.bf16.mxu0 0
        %1599 = vmatpush1.bf16.msra.mxu0 0
        %1600 = vmatprep.subr.bf16.mxu0 0
        %1601 = vmatpush1.bf16.msra.mxu0 0
        %1602 = vmatprep.subr.bf16.mxu0 0
        %1603 = vmatpush1.bf16.msra.mxu0 0
        %1604 = vmatprep.subr.bf16.mxu0 0
        %1605 = vmatpush1.bf16.msra.mxu0 0
        %1606 = vmatprep.subr.bf16.mxu0 0
        %1607 = vmatpush1.bf16.msra.mxu0 0
        %1608 = vmatprep.subr.bf16.mxu0 0
        %1609 = vmatpush1.bf16.msra.mxu0 0
        %1610 = vmatprep.subr.bf16.mxu0 0
        %1611 = vmatpush1.bf16.msra.mxu0 0
        %1612 = vmatprep.subr.bf16.mxu0 0
        %1613 = vmatpush1.bf16.msra.mxu0 0
        %1614 = vmatprep.mubr.bf16.mxu0 0
        %1615 = vmatmul.mubr.bf16.gmra.mrb[0].mxu0 %v1516
        %v1616 = vpop.f32.mrb[0].mxu0
        %v1617 = vadd.f32 0.0, %v1616
        %v1618 = vpop.f32.mrb[0].mxu0
        %v1619 = vpop.f32.mrb[0].mxu0
        %v1620 = vadd.f32 0.0, %v1619
        %v1621 = vpop.f32.mrb[0].mxu0
        %1622 = vmatprep.mubr.bf16.mxu0 0
        %1623 = vmatmul.mubr.bf16.gmra.mrb[0].mxu0 %v1517
        %v1624 = vpop.f32.mrb[0].mxu0
        %v1625 = vadd.f32 0.0, %v1624
        %v1626 = vpop.f32.mrb[0].mxu0
        %v1627 = vpop.f32.mrb[0].mxu0
        %v1628 = vadd.f32 0.0, %v1627
        %v1629 = vpop.f32.mrb[0].mxu0
        %1630 = vdwg.mxu0
        %v1631 = vld [vmem:[#allocation5] sm:$0xff]
        %v1632 = vld [vmem:[#allocation5 + $0x8] sm:$0xff]
        %v1633 = vld [vmem:[#allocation5 + $0x10] sm:$0xff]
        %v1634 = vld [vmem:[#allocation5 + $0x18] sm:$0xff]
        %v1635 = vmul.f32 %v1617, %v1383
        %v1636 = vmul.f32 %v1620, %v1386
        %v1637 = vmul.f32 %v1625, %v1391
        %v1638 = vmul.f32 %v1628, %v1394
        %v1639 = vpack.c.bf16 %v1636, %v1635
        %v1640 = vpack.c.bf16 %v1638, %v1637
        %v1641 = vld [vmem:[%s662] sm:$0xf]
        %v1642 = vld [vmem:[%s662 + $0x4] sm:$0xf]
        %v1643 = vld [vmem:[%s662 + $0x8] sm:$0xf]
        %v1644 = vld [vmem:[%s662 + $0xc] sm:$0xf]
        %v1645 = vld [vmem:[%s662 + $0x10] sm:$0xf]
        %v1646 = vld [vmem:[%s662 + $0x14] sm:$0xf]
        %v1647 = vld [vmem:[%s662 + $0x18] sm:$0xf]
        %v1648 = vld [vmem:[%s662 + $0x1c] sm:$0xf]
        %v1649 = vld [vmem:[%s662 + $0x20] sm:$0xf]
        %v1650 = vld [vmem:[%s662 + $0x24] sm:$0xf]
        %v1651 = vld [vmem:[%s662 + $0x28] sm:$0xf]
        %v1652 = vld [vmem:[%s662 + $0x2c] sm:$0xf]
        %v1653 = vld [vmem:[%s662 + $0x30] sm:$0xf]
        %v1654 = vld [vmem:[%s662 + $0x34] sm:$0xf]
        %v1655 = vld [vmem:[%s662 + $0x38] sm:$0xf]
        %v1656 = vld [vmem:[%s662 + $0x3c] sm:$0xf]
        %v1673 = vunpack.c.l.b16 %v1641
        %v1674 = vunpack.c.l.b16 %v1642
        %v1675 = vunpack.c.l.b16 %v1643
        %v1676 = vunpack.c.l.b16 %v1644
        %v1677 = vunpack.c.l.b16 %v1645
        %v1678 = vunpack.c.l.b16 %v1646
        %v1679 = vunpack.c.l.b16 %v1647
        %v1680 = vunpack.c.l.b16 %v1648
        %v1681 = vunpack.c.l.b16 %v1649
        %v1682 = vunpack.c.l.b16 %v1650
        %v1683 = vunpack.c.l.b16 %v1651
        %v1684 = vunpack.c.l.b16 %v1652
        %v1685 = vunpack.c.l.b16 %v1653
        %v1686 = vunpack.c.l.b16 %v1654
        %v1687 = vunpack.c.l.b16 %v1655
        %v1688 = vunpack.c.l.b16 %v1656
        %v1689 = vpack.c.b16 %v1674, %v1673
        %v1690 = vpack.c.b16 %v1676, %v1675
        %v1691 = vpack.c.b16 %v1678, %v1677
        %v1692 = vpack.c.b16 %v1680, %v1679
        %v1693 = vpack.c.b16 %v1682, %v1681
        %v1694 = vpack.c.b16 %v1684, %v1683
        %v1695 = vpack.c.b16 %v1686, %v1685
        %v1696 = vpack.c.b16 %v1688, %v1687
        %1705 = vmatprep.subr.bf16.mxu0 0
        %1706 = vmatpush1.bf16.msra.mxu0 %v1689
        %1707 = vmatprep.subr.bf16.mxu0 0
        %1708 = vmatpush1.bf16.msra.mxu0 %v1690
        %1709 = vmatprep.subr.bf16.mxu0 0
        %1710 = vmatpush1.bf16.msra.mxu0 %v1691
        %1711 = vmatprep.subr.bf16.mxu0 0
        %1712 = vmatpush1.bf16.msra.mxu0 %v1692
        %1713 = vmatprep.subr.bf16.mxu0 0
        %1714 = vmatpush1.bf16.msra.mxu0 %v1693
        %1715 = vmatprep.subr.bf16.mxu0 0
        %1716 = vmatpush1.bf16.msra.mxu0 %v1694
        %1717 = vmatprep.subr.bf16.mxu0 0
        %1718 = vmatpush1.bf16.msra.mxu0 %v1695
        %1719 = vmatprep.subr.bf16.mxu0 0
        %1720 = vmatpush1.bf16.msra.mxu0 %v1696
        %1721 = vmatprep.subr.bf16.mxu0 0
        %1722 = vmatpush1.bf16.msra.mxu0 0
        %1723 = vmatprep.subr.bf16.mxu0 0
        %1724 = vmatpush1.bf16.msra.mxu0 0
        %1725 = vmatprep.subr.bf16.mxu0 0
        %1726 = vmatpush1.bf16.msra.mxu0 0
        %1727 = vmatprep.subr.bf16.mxu0 0
        %1728 = vmatpush1.bf16.msra.mxu0 0
        %1729 = vmatprep.subr.bf16.mxu0 0
        %1730 = vmatpush1.bf16.msra.mxu0 0
        %1731 = vmatprep.subr.bf16.mxu0 0
        %1732 = vmatpush1.bf16.msra.mxu0 0
        %1733 = vmatprep.subr.bf16.mxu0 0
        %1734 = vmatpush1.bf16.msra.mxu0 0
        %1735 = vmatprep.subr.bf16.mxu0 0
        %1736 = vmatpush1.bf16.msra.mxu0 0
        %1737 = vmatprep.mubr.bf16.mxu0 0
        %1738 = vmatmul.mubr.bf16.gmra.mrb[0].mxu0 %v1639
        %v1739 = vpop.f32.mrb[0].mxu0
        %v1740 = vadd.f32 0.0, %v1739
        %v1741 = vpop.f32.mrb[0].mxu0
        %v1742 = vpop.f32.mrb[0].mxu0
        %v1743 = vadd.f32 0.0, %v1742
        %v1744 = vpop.f32.mrb[0].mxu0
        %1745 = vmatprep.mubr.bf16.mxu0 0
        %1746 = vmatmul.mubr.bf16.gmra.mrb[0].mxu0 %v1640
        %v1747 = vpop.f32.mrb[0].mxu0
        %v1748 = vadd.f32 0.0, %v1747
        %v1749 = vpop.f32.mrb[0].mxu0
        %v1750 = vpop.f32.mrb[0].mxu0
        %v1751 = vadd.f32 0.0, %v1750
        %v1752 = vpop.f32.mrb[0].mxu0
        %1753 = vdwg.mxu0
        %v1754 = vadd.f32 %v1631, %v1740
        %v1755 = vadd.f32 %v1632, %v1743
        %v1756 = vadd.f32 %v1633, %v1748
        %v1757 = vadd.f32 %v1634, %v1751
        %1758 = vst [vmem:[#allocation5] sm:$0xff] %v1754
        %1759 = vst [vmem:[#allocation5 + $0x8] sm:$0xff] %v1755
        %1760 = vst [vmem:[#allocation5 + $0x10] sm:$0xff] %v1756
        %1761 = vst [vmem:[#allocation5 + $0x18] sm:$0xff] %v1757
        %v1762 = vld [vmem:[#allocation6] sm:$0xff]
        %v1763 = vld [vmem:[#allocation6 + $0x8] sm:$0xff]
        %v1764 = vld [vmem:[#allocation6 + $0x10] sm:$0xff]
        %v1765 = vld [vmem:[#allocation6 + $0x18] sm:$0xff]
        %v1766 = vld [vmem:[#allocation24] sm:$0xf]
        %v1767 = vld [vmem:[#allocation24 + $0x4] sm:$0xf]
        %v1768 = vld [vmem:[#allocation24 + $0x8] sm:$0xf]
        %v1769 = vld [vmem:[#allocation24 + $0xc] sm:$0xf]
        %v1770 = vld [vmem:[#allocation24 + $0x10] sm:$0xf]
        %v1771 = vld [vmem:[#allocation24 + $0x14] sm:$0xf]
        %v1772 = vld [vmem:[#allocation24 + $0x18] sm:$0xf]
        %v1773 = vld [vmem:[#allocation24 + $0x1c] sm:$0xf]
        %v1774 = vld [vmem:[#allocation24 + $0x20] sm:$0xf]
        %v1775 = vld [vmem:[#allocation24 + $0x24] sm:$0xf]
        %v1776 = vld [vmem:[#allocation24 + $0x28] sm:$0xf]
        %v1777 = vld [vmem:[#allocation24 + $0x2c] sm:$0xf]
        %v1778 = vld [vmem:[#allocation24 + $0x30] sm:$0xf]
        %v1779 = vld [vmem:[#allocation24 + $0x34] sm:$0xf]
        %v1780 = vld [vmem:[#allocation24 + $0x38] sm:$0xf]
        %v1781 = vld [vmem:[#allocation24 + $0x3c] sm:$0xf]
        %v1798 = vunpack.c.l.b16 %v1766
        %v1799 = vunpack.c.l.b16 %v1767
        %v1800 = vunpack.c.l.b16 %v1768
        %v1801 = vunpack.c.l.b16 %v1769
        %v1802 = vunpack.c.l.b16 %v1770
        %v1803 = vunpack.c.l.b16 %v1771
        %v1804 = vunpack.c.l.b16 %v1772
        %v1805 = vunpack.c.l.b16 %v1773
        %v1806 = vunpack.c.l.b16 %v1774
        %v1807 = vunpack.c.l.b16 %v1775
        %v1808 = vunpack.c.l.b16 %v1776
        %v1809 = vunpack.c.l.b16 %v1777
        %v1810 = vunpack.c.l.b16 %v1778
        %v1811 = vunpack.c.l.b16 %v1779
        %v1812 = vunpack.c.l.b16 %v1780
        %v1813 = vunpack.c.l.b16 %v1781
        %v1814 = vpack.c.b16 %v1799, %v1798
        %v1815 = vpack.c.b16 %v1801, %v1800
        %v1816 = vpack.c.b16 %v1803, %v1802
        %v1817 = vpack.c.b16 %v1805, %v1804
        %v1818 = vpack.c.b16 %v1807, %v1806
        %v1819 = vpack.c.b16 %v1809, %v1808
        %v1820 = vpack.c.b16 %v1811, %v1810
        %v1821 = vpack.c.b16 %v1813, %v1812
        %1830 = vmatprep.subr.bf16.mxu0 0
        %1831 = vmatpush1.bf16.msra.mxu0 %v1814
        %1832 = vmatprep.subr.bf16.mxu0 0
        %1833 = vmatpush1.bf16.msra.mxu0 %v1815
        %1834 = vmatprep.subr.bf16.mxu0 0
        %1835 = vmatpush1.bf16.msra.mxu0 %v1816
        %1836 = vmatprep.subr.bf16.mxu0 0
        %1837 = vmatpush1.bf16.msra.mxu0 %v1817
        %1838 = vmatprep.subr.bf16.mxu0 0
        %1839 = vmatpush1.bf16.msra.mxu0 %v1818
        %1840 = vmatprep.subr.bf16.mxu0 0
        %1841 = vmatpush1.bf16.msra.mxu0 %v1819
        %1842 = vmatprep.subr.bf16.mxu0 0
        %1843 = vmatpush1.bf16.msra.mxu0 %v1820
        %1844 = vmatprep.subr.bf16.mxu0 0
        %1845 = vmatpush1.bf16.msra.mxu0 %v1821
        %1846 = vmatprep.subr.bf16.mxu0 0
        %1847 = vmatpush1.bf16.msra.mxu0 0
        %1848 = vmatprep.subr.bf16.mxu0 0
        %1849 = vmatpush1.bf16.msra.mxu0 0
        %1850 = vmatprep.subr.bf16.mxu0 0
        %1851 = vmatpush1.bf16.msra.mxu0 0
        %1852 = vmatprep.subr.bf16.mxu0 0
        %1853 = vmatpush1.bf16.msra.mxu0 0
        %1854 = vmatprep.subr.bf16.mxu0 0
        %1855 = vmatpush1.bf16.msra.mxu0 0
        %1856 = vmatprep.subr.bf16.mxu0 0
        %1857 = vmatpush1.bf16.msra.mxu0 0
        %1858 = vmatprep.subr.bf16.mxu0 0
        %1859 = vmatpush1.bf16.msra.mxu0 0
        %1860 = vmatprep.subr.bf16.mxu0 0
        %1861 = vmatpush1.bf16.msra.mxu0 0
        %1862 = vmatprep.mubr.bf16.mxu0 0
        %1863 = vmatmul.mubr.bf16.gmra.mrb[0].mxu0 %v1516
        %v1864 = vpop.f32.mrb[0].mxu0
        %v1865 = vadd.f32 0.0, %v1864
        %v1866 = vpop.f32.mrb[0].mxu0
        %v1867 = vpop.f32.mrb[0].mxu0
        %v1868 = vadd.f32 0.0, %v1867
        %v1869 = vpop.f32.mrb[0].mxu0
        %1870 = vmatprep.mubr.bf16.mxu0 0
        %1871 = vmatmul.mubr.bf16.gmra.mrb[0].mxu0 %v1517
        %v1872 = vpop.f32.mrb[0].mxu0
        %v1873 = vadd.f32 0.0, %v1872
        %v1874 = vpop.f32.mrb[0].mxu0
        %v1875 = vpop.f32.mrb[0].mxu0
        %v1876 = vadd.f32 0.0, %v1875
        %v1877 = vpop.f32.mrb[0].mxu0
        %1878 = vdwg.mxu0
        %v1879 = vadd.f32 %v1762, %v1865
        %v1880 = vadd.f32 %v1763, %v1868
        %v1881 = vadd.f32 %v1764, %v1873
        %v1882 = vadd.f32 %v1765, %v1876
        %1883 = vst [vmem:[#allocation6] sm:$0xff] %v1879
        %1884 = vst [vmem:[#allocation6 + $0x8] sm:$0xff] %v1880
        %1885 = vst [vmem:[#allocation6 + $0x10] sm:$0xff] %v1881
        %1886 = vst [vmem:[#allocation6 + $0x18] sm:$0xff] %v1882
        %p1887 = scmp.eq.s32.totalorder %s46, 2
        // Predicated region
        $region121: #{tpu_custom_call.1} parent=71 // pred_check
          %p1888 = pneg %p1887
        $region122: #{tpu_custom_call.1} parent=71 // pred_check_branch
          %1890 = sbr.rel (%p1888) target = $region124
        $region123: #{tpu_custom_call.1} parent=71 // pred_region
          %v1891 = vld [vmem:[%s601] sm:$0xff]
          %v1892 = vld [vmem:[%s601 + $0x8] sm:$0xff]
          %v1893 = vld [vmem:[%s601 + $0x10] sm:$0xff]
          %v1894 = vld [vmem:[%s601 + $0x18] sm:$0xff]
          %v1895 = vld [vmem:[#allocation6] sm:$0xff]
          %v1896 = vld [vmem:[#allocation6 + $0x8] sm:$0xff]
          %v1897 = vld [vmem:[#allocation6 + $0x10] sm:$0xff]
          %v1898 = vld [vmem:[#allocation6 + $0x18] sm:$0xff]
          %vm1899 = vcmp.gt.f32.partialorder %v1895, 0.0
          %vm1900 = vcmp.gt.f32.partialorder %v1896, 0.0
          %vm1901 = vcmp.gt.f32.partialorder %v1897, 0.0
          %vm1902 = vcmp.gt.f32.partialorder %v1898, 0.0
          %v1903 = vsel %vm1899, %v1895, 1.0
          %v1904 = vsel %vm1900, %v1896, 1.0
          %v1905 = vsel %vm1901, %v1897, 1.0
          %v1906 = vsel %vm1902, %v1898, 1.0
          %v1907 = vld [vmem:[#allocation5] sm:$0xff]
          %v1908 = vld [vmem:[#allocation5 + $0x8] sm:$0xff]
          %v1909 = vld [vmem:[#allocation5 + $0x10] sm:$0xff]
          %v1910 = vld [vmem:[#allocation5 + $0x18] sm:$0xff]
          %v1911 = vrcp.pop %v1903
          %v1912 = vrcp.pop %v1904
          %v1913 = vrcp.pop %v1905
          %v1914 = vrcp.pop %v1906
          %v1915 = vmul.f32 %v1907, %v1911
          %v1916 = vmul.f32 %v1908, %v1912
          %v1917 = vmul.f32 %v1909, %v1913
          %v1918 = vmul.f32 %v1910, %v1914
          %v1919 = vpack.c.bf16 %v1916, %v1915
          %v1920 = vpack.c.bf16 %v1918, %v1917
          %v1921 = vld [vmem:[#allocation15] sm:$0xf]
          %v1922 = vld [vmem:[#allocation15 + $0x4] sm:$0xf]
          %v1923 = vld [vmem:[#allocation15 + $0x8] sm:$0xf]
          %v1924 = vld [vmem:[#allocation15 + $0xc] sm:$0xf]
          %v1925 = vld [vmem:[#allocation15 + $0x10] sm:$0xf]
          %v1926 = vld [vmem:[#allocation15 + $0x14] sm:$0xf]
          %v1927 = vld [vmem:[#allocation15 + $0x18] sm:$0xf]
          %v1928 = vld [vmem:[#allocation15 + $0x1c] sm:$0xf]
          %v1929 = vld [vmem:[#allocation15 + $0x20] sm:$0xf]
          %v1930 = vld [vmem:[#allocation15 + $0x24] sm:$0xf]
          %v1931 = vld [vmem:[#allocation15 + $0x28] sm:$0xf]
          %v1932 = vld [vmem:[#allocation15 + $0x2c] sm:$0xf]
          %v1933 = vld [vmem:[#allocation15 + $0x30] sm:$0xf]
          %v1934 = vld [vmem:[#allocation15 + $0x34] sm:$0xf]
          %v1935 = vld [vmem:[#allocation15 + $0x38] sm:$0xf]
          %v1936 = vld [vmem:[#allocation15 + $0x3c] sm:$0xf]
          %v1953 = vunpack.c.l.b16 %v1921
          %v1954 = vunpack.c.l.b16 %v1922
          %v1955 = vunpack.c.l.b16 %v1923
          %v1956 = vunpack.c.l.b16 %v1924
          %v1957 = vunpack.c.l.b16 %v1925
          %v1958 = vunpack.c.l.b16 %v1926
          %v1959 = vunpack.c.l.b16 %v1927
          %v1960 = vunpack.c.l.b16 %v1928
          %v1961 = vunpack.c.l.b16 %v1929
          %v1962 = vunpack.c.l.b16 %v1930
          %v1963 = vunpack.c.l.b16 %v1931
          %v1964 = vunpack.c.l.b16 %v1932
          %v1965 = vunpack.c.l.b16 %v1933
          %v1966 = vunpack.c.l.b16 %v1934
          %v1967 = vunpack.c.l.b16 %v1935
          %v1968 = vunpack.c.l.b16 %v1936
          %v1969 = vpack.c.b16 %v1954, %v1953
          %v1970 = vpack.c.b16 %v1956, %v1955
          %v1971 = vpack.c.b16 %v1958, %v1957
          %v1972 = vpack.c.b16 %v1960, %v1959
          %v1973 = vpack.c.b16 %v1962, %v1961
          %v1974 = vpack.c.b16 %v1964, %v1963
          %v1975 = vpack.c.b16 %v1966, %v1965
          %v1976 = vpack.c.b16 %v1968, %v1967
          %1985 = vmatprep.subr.bf16.mxu0 0
          %1986 = vmatpush1.bf16.msra.mxu0 %v1969
          %1987 = vmatprep.subr.bf16.mxu0 0
          %1988 = vmatpush1.bf16.msra.mxu0 %v1970
          %1989 = vmatprep.subr.bf16.mxu0 0
          %1990 = vmatpush1.bf16.msra.mxu0 %v1971
          %1991 = vmatprep.subr.bf16.mxu0 0
          %1992 = vmatpush1.bf16.msra.mxu0 %v1972
          %1993 = vmatprep.subr.bf16.mxu0 0
          %1994 = vmatpush1.bf16.msra.mxu0 %v1973
          %1995 = vmatprep.subr.bf16.mxu0 0
          %1996 = vmatpush1.bf16.msra.mxu0 %v1974
          %1997 = vmatprep.subr.bf16.mxu0 0
          %1998 = vmatpush1.bf16.msra.mxu0 %v1975
          %1999 = vmatprep.subr.bf16.mxu0 0
          %2000 = vmatpush1.bf16.msra.mxu0 %v1976
          %2001 = vmatprep.subr.bf16.mxu0 0
          %2002 = vmatpush1.bf16.msra.mxu0 0
          %2003 = vmatprep.subr.bf16.mxu0 0
          %2004 = vmatpush1.bf16.msra.mxu0 0
          %2005 = vmatprep.subr.bf16.mxu0 0
          %2006 = vmatpush1.bf16.msra.mxu0 0
          %2007 = vmatprep.subr.bf16.mxu0 0
          %2008 = vmatpush1.bf16.msra.mxu0 0
          %2009 = vmatprep.subr.bf16.mxu0 0
          %2010 = vmatpush1.bf16.msra.mxu0 0
          %2011 = vmatprep.subr.bf16.mxu0 0
          %2012 = vmatpush1.bf16.msra.mxu0 0
          %2013 = vmatprep.subr.bf16.mxu0 0
          %2014 = vmatpush1.bf16.msra.mxu0 0
          %2015 = vmatprep.subr.bf16.mxu0 0
          %2016 = vmatpush1.bf16.msra.mxu0 0
          %2017 = vmatprep.mubr.bf16.mxu0 0
          %2018 = vmatmul.mubr.bf16.gmra.mrb[0].mxu0 %v1919
          %v2019 = vpop.f32.mrb[0].mxu0
          %v2020 = vadd.f32 0.0, %v2019
          %v2021 = vpop.f32.mrb[0].mxu0
          %v2022 = vpop.f32.mrb[0].mxu0
          %v2023 = vadd.f32 0.0, %v2022
          %v2024 = vpop.f32.mrb[0].mxu0
          %2025 = vmatprep.mubr.bf16.mxu0 0
          %2026 = vmatmul.mubr.bf16.gmra.mrb[0].mxu0 %v1920
          %v2027 = vpop.f32.mrb[0].mxu0
          %v2028 = vadd.f32 0.0, %v2027
          %v2029 = vpop.f32.mrb[0].mxu0
          %v2030 = vpop.f32.mrb[0].mxu0
          %v2031 = vadd.f32 0.0, %v2030
          %v2032 = vpop.f32.mrb[0].mxu0
          %2033 = vdwg.mxu0
          %v2034 = vlaneseq
          %v2035 = vand.u32 %v2034, 127
          %vm2036 = vcmp.lt.s32.totalorder %v2035, 48
          %v2037 = vadd.f32 %v1891, %v2020
          %v2038 = vadd.f32 %v1892, %v2023
          %v2039 = vadd.f32 %v1893, %v2028
          %v2040 = vadd.f32 %v1894, %v2031
          %v2041 = vsel %vm2036, %v2037, 0.0
          %v2042 = vsel %vm2036, %v2038, 0.0
          %v2043 = vsel %vm2036, %v2039, 0.0
          %v2044 = vsel %vm2036, %v2040, 0.0
          %2045 = vadd.xlane.f32.xlu0 %v2041
          %v2046 = vpop.xlane.xlu0 %2045
          %2047 = vadd.xlane.f32.xlu0 %v2042
          %v2048 = vpop.xlane.xlu0 %2047
          %2049 = vadd.xlane.f32.xlu0 %v2043
          %v2050 = vpop.xlane.xlu0 %2049
          %2051 = vadd.xlane.f32.xlu0 %v2044
          %v2052 = vpop.xlane.xlu0 %2051
          %v2053 = vmul.f32 %v2046, 0.020833334
          %v2054 = vmul.f32 %v2048, 0.020833334
          %v2055 = vmul.f32 %v2050, 0.020833334
          %v2056 = vmul.f32 %v2052, 0.020833334
          %v2057 = vsub.f32 %v2041, %v2053
          %v2058 = vsub.f32 %v2042, %v2054
          %v2059 = vsub.f32 %v2043, %v2055
          %v2060 = vsub.f32 %v2044, %v2056
          %v2061 = vsel %vm2036, %v2057, 0.0
          %v2062 = vsel %vm2036, %v2058, 0.0
          %v2063 = vsel %vm2036, %v2059, 0.0
          %v2064 = vsel %vm2036, %v2060, 0.0
          %v2065 = vmul.f32 %v2061, %v2061
          %v2066 = vmul.f32 %v2062, %v2062
          %v2067 = vmul.f32 %v2063, %v2063
          %v2068 = vmul.f32 %v2064, %v2064
          %2069 = vadd.xlane.f32.xlu0 %v2065
          %v2070 = vpop.xlane.xlu0 %2069
          %2071 = vadd.xlane.f32.xlu0 %v2066
          %v2072 = vpop.xlane.xlu0 %2071
          %2073 = vadd.xlane.f32.xlu0 %v2067
          %v2074 = vpop.xlane.xlu0 %2073
          %2075 = vadd.xlane.f32.xlu0 %v2068
          %v2076 = vpop.xlane.xlu0 %2075
          %v2077 = vmul.f32 %v2070, 0.020833334
          %v2078 = vmul.f32 %v2072, 0.020833334
          %v2079 = vmul.f32 %v2074, 0.020833334
          %v2080 = vmul.f32 %v2076, 0.020833334
          %v2081 = vadd.f32 %v2077, 1e-05
          %v2082 = vadd.f32 %v2078, 1e-05
          %v2083 = vadd.f32 %v2079, 1e-05
          %v2084 = vadd.f32 %v2080, 1e-05
          %v2085 = vrsqrt.pop %v2081
          %v2086 = vrsqrt.pop %v2082
          %v2087 = vrsqrt.pop %v2083
          %v2088 = vrsqrt.pop %v2084
          %v2089 = vmul.f32 %v2061, %v2085
          %v2090 = vmul.f32 %v2062, %v2086
          %v2091 = vmul.f32 %v2063, %v2087
          %v2092 = vmul.f32 %v2064, %v2088
          %v2093 = vld [vmem:[%s5] sm:$0x1]
          %v2095 = vlaneseq
          %v2096 = vshrl.u32 %v2095, 7
          %v2097 = vsub.s32 0, %v2096
          %v2098 = vrot.slane %v2093, %v2097
          %v2100 = vmul.f32 %v2089, %v2098
          %v2101 = vmul.f32 %v2090, %v2098
          %v2102 = vmul.f32 %v2091, %v2098
          %v2103 = vmul.f32 %v2092, %v2098
          %v2104 = vld [vmem:[%s6] sm:$0x1]
          %v2106 = vlaneseq
          %v2107 = vshrl.u32 %v2106, 7
          %v2108 = vsub.s32 0, %v2107
          %v2109 = vrot.slane %v2104, %v2108
          %v2111 = vadd.f32 %v2100, %v2109
          %v2112 = vadd.f32 %v2101, %v2109
          %v2113 = vadd.f32 %v2102, %v2109
          %v2114 = vadd.f32 %v2103, %v2109
          %2115 = vst [vmem:[%s733] sm:$0xff] %v2111
          %2116 = vst [vmem:[%s733 + $0x8] sm:$0xff] %v2112
          %2117 = vst [vmem:[%s733 + $0x10] sm:$0xff] %v2113
          %2118 = vst [vmem:[%s733 + $0x18] sm:$0xff] %v2114
        $region124: #{tpu_custom_call.1} parent=71 // pred_fallthru
          _
        %s2119 = sand.u32 %s364, 1
        %s2120 = scalar_lea.sflag [#allocation9], %s2119
        %s2121 = sand.u32 %s364, 1
        %s2122 = smul.addr %s2121, 32
        %s2123 = scalar_lea.vmem [#allocation25], %s2122
        // Predicated region
        $region125: #{tpu_custom_call.1} parent=71 // pred_check
          %p2124 = pneg %p374
        $region126: #{tpu_custom_call.1} parent=71 // pred_check_branch
          %2126 = sbr.rel (%p2124) target = $region128
        $region127: #{tpu_custom_call.1} parent=71 // pred_region
          %s2127 = smul.u32 4, %s45
          %s2129 = ssub.s32 512, 512
          %2130 = vsyncadd %s2120, %s2129
          %s2131 = smul.addr %s2127, 128
          %s2132 = scalar_lea.hbm %s13, %s2131
          %s2133 = sshll.u32 %s2123, 4
          %s2134 = int_to_ptr.vmem [resolvable:$true] %s2133
          %2139 = dma.vmem_to_hbm [thread:$0]  %s2134, 512, %s2132, %s2120, 128, 128, 8
        $region128: #{tpu_custom_call.1} parent=71 // pred_fallthru
          _
      $region72: #{tpu_custom_call.1} parent=5 // pred_fallthru
        _
      %p2140 = scmp.le.s32.totalorder 2, %s36
      // Predicated region
      $region129: #{tpu_custom_call.1} parent=5 // pred_check
        %p2141 = pneg %p2140
      $region130: #{tpu_custom_call.1} parent=5 // pred_check_branch
        %2143 = sbr.rel (%p2141) target = $region132
      $region131: #{tpu_custom_call.1} parent=5 // pred_region
        %s2144 = ssub.s32 %s36, 2
        // Predicated region
        $region133: #{tpu_custom_call.1} parent=131 // pred_check
          %p2145 = pneg %p380
        $region134: #{tpu_custom_call.1} parent=131 // pred_check_branch
          %2147 = sbr.rel (%p2145) target = $region136
        $region135: #{tpu_custom_call.1} parent=131 // pred_region
          %s2148 = sand.u32 %s365, 1
          %s2149 = scalar_lea.sflag [#allocation9], %s2148
          %s2150 = sand.u32 %s365, 1
          %s2151 = smul.addr %s2150, 32
          %s2152 = scalar_lea.vmem [#allocation25], %s2151
          %2153 = dma.done %s2149, 512
        $region136: #{tpu_custom_call.1} parent=131 // pred_fallthru
          _
      $region132: #{tpu_custom_call.1} parent=5 // pred_fallthru
        _
    $region6: #{tpu_custom_call.1} parent=1 // loop_footer
      %s40 = sadd.s32 1, %s36
    $region7: #{tpu_custom_call.1} parent=1 // loop_footer_branch
      %35 = sbr.rel target = $region3
    $region8: #{tpu_custom_call.1} parent=1 // loop_exit
      _
    %2154 = vsyncpa [#allocation8], 1
    %s2155 = scalar_lea.sflag [#allocation8], 1
    %2156 = vsyncpa %s2155, 1
    %2157 = vsyncpa [#allocation11], 1
    %2158 = vsyncpa [#allocation14], 1
    %2159 = vsyncpa [#allocation17], 1
    %s2160 = scalar_lea.sflag [#allocation17], 1
    %2161 = vsyncpa %s2160, 1
    %2162 = vsyncpa [#allocation20], 1
    %s2163 = scalar_lea.sflag [#allocation20], 1
    %2164 = vsyncpa %s2163, 1
    %2165 = vsyncpa [#allocation23], 1
    %s2166 = scalar_lea.sflag [#allocation23], 1
    %2167 = vsyncpa %s2166, 1
    %2168 = vsyncpa [#allocation9], 1
    %s2169 = scalar_lea.sflag [#allocation9], 1
    %2170 = vsyncpa %s2169, 1

</llo_original>
